<compile_context>
chip_gen: v5e
topology: v5e:2x2
jax: 0.10.0
libtpu: 0.0.40
codegen_flags: <defaults>
</compile_context>

<pallas_src>
import jax
import jax.numpy as jnp
from jax.experimental import pallas as pl
from jax.experimental.pallas import tpu as pltpu


def _residual_block_kernel(x_ref, w1_ref, b1_ref, w2_ref, b2_ref, o_ref, xcat_ref, acc_ref):
    # x_ref:    (1, H, W, Cp)   f32   un-relu'd activation block (also the residual source)
    # w1_ref:   (3, 3*Cp, Cp)   bf16  conv1 weights [kh, kw*Cin, Cout] (kw-major on the K axis)
    # b1_ref:   (1, Cp)         f32
    # w2_ref:   (Cp, Cp)        bf16  conv2 (1x1) weights [Cin, Cout]
    # b2_ref:   (1, Cp)         f32
    # o_ref:    (1, H, W, Cp)   f32
    # xcat_ref: (H*W, 3*Cp)     bf16  scratch: [left | center | right] dx-shifted relu(x)
    # acc_ref:  (H*W, Cp)       f32   scratch: conv1 accumulator
    H, W, Cp = x_ref.shape[1], x_ref.shape[2], x_ref.shape[3]
    HW = H * W

    # relu(x) and its two column-shifted copies (zero "same" border), built once.
    xr = jnp.maximum(x_ref[0], 0.0)                                     # (H, W, Cp) f32
    zcol = jnp.zeros((H, 1, Cp), jnp.float32)

    # Fill the conv operand scratch with three lane-aligned (multiple-of-128 column offset)
    # stores; the single f32->bf16 cast happens here.  No per-tap strided window copies.
    xcat_ref[:, Cp:2 * Cp] = xr.reshape(HW, Cp).astype(xcat_ref.dtype)          # kw = 1 (center)
    xcat_ref[:, :Cp] = (jnp.concatenate([zcol, xr[:, :W - 1, :]], axis=1)        # kw = 0: x[h, w-1]
                        .reshape(HW, Cp).astype(xcat_ref.dtype))
    xcat_ref[:, 2 * Cp:] = (jnp.concatenate([xr[:, 1:, :], zcol], axis=1)        # kw = 2: x[h, w+1]
                            .reshape(HW, Cp).astype(xcat_ref.dtype))

    # conv1 (3x3, "same") = 3 row-grouped MXU matmuls with K = 3*Cp.  The dy shifts are plain
    # flat-row offsets because the dx shift is already baked into xcat; bias folded into init.
    acc_ref[...] = jnp.broadcast_to(b1_ref[...], (HW, Cp))
    acc_ref[...] += jnp.dot(xcat_ref[...], w1_ref[1],
                            preferred_element_type=jnp.float32)                  # kh = 1 (center)
    if H > 1:
        acc_ref[W:, :] += jnp.dot(xcat_ref[:HW - W, :], w1_ref[0],
                                  preferred_element_type=jnp.float32)            # kh = 0 (row above)
        acc_ref[:HW - W, :] += jnp.dot(xcat_ref[W:, :], w1_ref[2],
                                       preferred_element_type=jnp.float32)       # kh = 2 (row below)

    # relu -> 1x1 conv (channel matmul) -> bias -> residual add (all f32 accumulation).
    t = jnp.maximum(acc_ref[...], 0.0).astype(w2_ref.dtype)
    y = jnp.dot(t, w2_ref[...], preferred_element_type=jnp.float32) + b2_ref[...]
    o_ref[0] = (x_ref[0] + y.reshape(H, W, Cp)).astype(o_ref.dtype)


def residual_block_nhwc(x_nhwc, w1, b1, w2, b2, *, compute_dtype=jnp.bfloat16):
    """NHWC entry point (no layout copies).  x_nhwc: (B, H, W, C) f32.
    w1: (C, C, 3, 3) OIHW, b1: (C,), w2: (C, C, 1, 1) OIHW, b2: (C,).
    compute_dtype: MXU operand dtype (use jnp.float32 on v5e if bit-closeness matters)."""
    B, H, W, C = x_nhwc.shape
    Cp = ((C + 127) // 128) * 128        # lane-dense channel count (no-op when C % 128 == 0)
    pc = Cp - C
    itemsize = jnp.dtype(compute_dtype).itemsize

    x = x_nhwc.astype(jnp.float32)
    if pc:
        x = jnp.pad(x, ((0, 0), (0, 0), (0, 0), (0, pc)))

    # OIHW -> (kh, kw, Cin, Cout), zero-pad channels to Cp, stack the 3 kw taps along the
    # contraction axis -> (3, 3*Cp, Cp) so each dy step is one K=3*Cp matmul.
    w1_k = jnp.transpose(w1, (2, 3, 1, 0))
    w2_k = jnp.transpose(w2[:, :, 0, 0], (1, 0))
    if pc:
        w1_k = jnp.pad(w1_k, ((0, 0), (0, 0), (0, pc), (0, pc)))
        w2_k = jnp.pad(w2_k, ((0, pc), (0, pc)))
    w1_k = w1_k.reshape(3, 3 * Cp, Cp).astype(compute_dtype)
    w2_k = w2_k.astype(compute_dtype)
    b1_k = jnp.pad(b1, (0, pc)).reshape(1, Cp).astype(jnp.float32)
    b2_k = jnp.pad(b2, (0, pc)).reshape(1, Cp).astype(jnp.float32)

    # Scoped-VMEM budget: double-buffered x/out blocks + scratch + weights + temp headroom.
    act = H * W * Cp * 4
    vmem_bytes = 4 * act                                   # x / out blocks (double buffered)
    vmem_bytes += H * W * 3 * Cp * itemsize + act          # xcat + acc scratch
    vmem_bytes += 2 * (w1_k.size * itemsize + w2_k.size * itemsize + 2 * Cp * 4)
    vmem_bytes += 6 * act                                  # in-kernel f32 temporaries (xr, shifts)
    vmem_bytes = min(max(int(vmem_bytes), 16 << 20), 100 << 20)

    out = pl.pallas_call(
        _residual_block_kernel,
        out_shape=jax.ShapeDtypeStruct((B, H, W, Cp), jnp.float32),
        grid_spec=pltpu.PrefetchScalarGridSpec(
            num_scalar_prefetch=0,
            grid=(B,),
            in_specs=[
                pl.BlockSpec((1, H, W, Cp), lambda b: (b, 0, 0, 0)),
                pl.BlockSpec((3, 3 * Cp, Cp), lambda b: (0, 0, 0)),
                pl.BlockSpec((1, Cp), lambda b: (0, 0)),
                pl.BlockSpec((Cp, Cp), lambda b: (0, 0)),
                pl.BlockSpec((1, Cp), lambda b: (0, 0)),
            ],
            out_specs=pl.BlockSpec((1, H, W, Cp), lambda b: (b, 0, 0, 0)),
            scratch_shapes=[
                pltpu.VMEM((H * W, 3 * Cp), compute_dtype),   # dx-shifted relu(x), channel-concat
                pltpu.VMEM((H * W, Cp), jnp.float32),         # conv1 accumulator
            ],
        ),
        compiler_params=pltpu.CompilerParams(
            dimension_semantics=("parallel",),
            vmem_limit_bytes=vmem_bytes),
    )(x, w1_k, b1_k, w2_k, b2_k)

    return out[..., :C] if pc else out


def residual_block(x_nchw, w1, b1, w2, b2, *, compute_dtype=jnp.bfloat16):
    """PyTorch-layout wrapper: (B, C, H, W) in / out (layout copies only happen here)."""
    out = residual_block_nhwc(jnp.transpose(x_nchw, (0, 2, 3, 1)), w1, b1, w2, b2,
                              compute_dtype=compute_dtype)
    return jnp.transpose(out, (0, 3, 1, 2))


def _reference(x, w1, b1, w2, b2):
    """Pure-JAX f32 reference matching the PyTorch forward (NCHW)."""
    t = jnp.maximum(x, 0.0)
    t = jax.lax.conv_general_dilated(
        t, w1, window_strides=(1, 1), padding="SAME",
        dimension_numbers=("NCHW", "OIHW", "NCHW"),
        precision=jax.lax.Precision.HIGHEST) + b1[None, :, None, None]
    t = jnp.maximum(t, 0.0)
    t = jax.lax.conv_general_dilated(
        t, w2, window_strides=(1, 1), padding="VALID",
        dimension_numbers=("NCHW", "OIHW", "NCHW"),
        precision=jax.lax.Precision.HIGHEST) + b2[None, :, None, None]
    return x + t


if __name__ == "__main__":
    def run_case(key, B, C, H, W, atol, rtol):
        kx, k1, k2, k3, k4 = jax.random.split(key, 5)
        x = jax.random.normal(kx, (B, C, H, W), dtype=jnp.float32)
        w1 = jax.random.normal(k1, (C, C, 3, 3), dtype=jnp.float32) * 0.1
        b1 = jax.random.normal(k2, (C,), dtype=jnp.float32) * 0.1
        w2 = jax.random.normal(k3, (C, C, 1, 1), dtype=jnp.float32) * 0.1
        b2 = jax.random.normal(k4, (C,), dtype=jnp.float32) * 0.1

        out = residual_block(x, w1, b1, w2, b2)
        jax.block_until_ready(out)
        ref = _reference(x, w1, b1, w2, b2)
        assert out.shape == (B, C, H, W)
        # bf16 MXU operands (f32 accumulation) -> loosened tolerance vs the pure-f32 reference.
        assert jnp.allclose(out, ref, atol=atol, rtol=rtol), \
            "mismatch vs reference (C=%d, H=%d, W=%d)" % (C, H, W)

    key = jax.random.PRNGKey(0)
    k_small, k_big = jax.random.split(key)
    # PyTorch-layout smoke test at tiny dims (channels padded 4 -> 128 inside the kernel).
    run_case(k_small, B=2, C=4, H=16, W=16, atol=2e-2, rtol=2e-2)
    # Lane-dense "production-ish" dims so regressions aren't hidden by padding-dominated output.
    run_case(k_big, B=1, C=128, H=32, W=32, atol=5e-2, rtol=5e-2)
    print("KERNEL_OK")
</pallas_src>

<mosaic_0001>
module attributes {stable_mosaic.version = 11 : i64} {
  func.func @_residual_block_kernel(%arg0: i32, %arg1: memref<1x16x16x128xf32, #tpu.memory_space<vmem>>, %arg2: memref<3x384x128xbf16, #tpu.memory_space<vmem>>, %arg3: memref<1x128xf32, #tpu.memory_space<vmem>>, %arg4: memref<128x128xbf16, #tpu.memory_space<vmem>>, %arg5: memref<1x128xf32, #tpu.memory_space<vmem>>, %arg6: memref<1x16x16x128xf32, #tpu.memory_space<vmem>>, %arg7: memref<256x384xbf16, #tpu.memory_space<vmem>>, %arg8: memref<256x128xf32, #tpu.memory_space<vmem>>) attributes {dimension_semantics = [#tpu.dimension_semantics<parallel>], iteration_bounds = array<i64: 2>, scalar_prefetch = 0 : i64, scratch_operands = 2 : i64, tpu.core_type = #tpu.core_type<tc>, window_params = [{transform_indices = @transform_0, window_bounds = array<i64: 1, 16, 16, 128>}, {pipeline_mode = #tpu.pipeline_mode<synchronous>, transform_indices = @transform_1, window_bounds = array<i64: 3, 384, 128>}, {pipeline_mode = #tpu.pipeline_mode<synchronous>, transform_indices = @transform_2, window_bounds = array<i64: 1, 128>}, {pipeline_mode = #tpu.pipeline_mode<synchronous>, transform_indices = @transform_3, window_bounds = array<i64: 128, 128>}, {pipeline_mode = #tpu.pipeline_mode<synchronous>, transform_indices = @transform_4, window_bounds = array<i64: 1, 128>}, {transform_indices = @transform_5, window_bounds = array<i64: 1, 16, 16, 128>}]} {
    %c0 = arith.constant 0 : index
    %c0_0 = arith.constant 0 : index
    %c0_1 = arith.constant 0 : index
    %c0_2 = arith.constant 0 : index
    %0 = vector.load %arg1[%c0, %c0_0, %c0_1, %c0_2] : memref<1x16x16x128xf32, #tpu.memory_space<vmem>>, vector<1x16x16x128xf32>
    %1 = vector.shape_cast %0 : vector<1x16x16x128xf32> to vector<16x16x128xf32>
    %cst = arith.constant 0.000000e+00 : f32
    %2 = vector.broadcast %cst : f32 to vector<16x16x128xf32>
    %3 = arith.maximumf %1, %2 : vector<16x16x128xf32>
    %cst_3 = arith.constant 0.000000e+00 : f32
    %4 = vector.broadcast %cst_3 : f32 to vector<16x1x128xf32>
    %5 = vector.shape_cast %3 : vector<16x16x128xf32> to vector<256x128xf32>
    %6 = arith.truncf %5 : vector<256x128xf32> to vector<256x128xbf16>
    %c0_4 = arith.constant 0 : index
    %c128 = arith.constant 128 : index
    %7 = vector.load %arg7[%c0_4, %c128] : memref<256x384xbf16, #tpu.memory_space<vmem>>, vector<256x128xbf16>
    tpu.vector_store %arg7[%c0_4, %c128], %6 {strides = array<i32>} : memref<256x384xbf16, #tpu.memory_space<vmem>>, vector<256x128xbf16>,
    %8 = vector.extract_strided_slice %3 {offsets = [0, 0, 0], sizes = [16, 15, 128], strides = [1, 1, 1]} : vector<16x16x128xf32> to vector<16x15x128xf32>
    %9 = tpu.concatenate %4, %8 in 1 : vector<16x1x128xf32>, vector<16x15x128xf32> -> vector<16x16x128xf32>
    %10 = vector.shape_cast %9 : vector<16x16x128xf32> to vector<256x128xf32>
    %11 = arith.truncf %10 : vector<256x128xf32> to vector<256x128xbf16>
    %c0_5 = arith.constant 0 : index
    %c0_6 = arith.constant 0 : index
    %12 = vector.load %arg7[%c0_5, %c0_6] : memref<256x384xbf16, #tpu.memory_space<vmem>>, vector<256x128xbf16>
    tpu.vector_store %arg7[%c0_5, %c0_6], %11 {strides = array<i32>} : memref<256x384xbf16, #tpu.memory_space<vmem>>, vector<256x128xbf16>,
    %13 = vector.extract_strided_slice %3 {offsets = [0, 1, 0], sizes = [16, 15, 128], strides = [1, 1, 1]} : vector<16x16x128xf32> to vector<16x15x128xf32>
    %14 = tpu.concatenate %13, %4 in 1 : vector<16x15x128xf32>, vector<16x1x128xf32> -> vector<16x16x128xf32>
    %15 = vector.shape_cast %14 : vector<16x16x128xf32> to vector<256x128xf32>
    %16 = arith.truncf %15 : vector<256x128xf32> to vector<256x128xbf16>
    %c0_7 = arith.constant 0 : index
    %c256 = arith.constant 256 : index
    %17 = vector.load %arg7[%c0_7, %c256] : memref<256x384xbf16, #tpu.memory_space<vmem>>, vector<256x128xbf16>
    tpu.vector_store %arg7[%c0_7, %c256], %16 {strides = array<i32>} : memref<256x384xbf16, #tpu.memory_space<vmem>>, vector<256x128xbf16>,
    %c0_8 = arith.constant 0 : index
    %c0_9 = arith.constant 0 : index
    %18 = vector.load %arg3[%c0_8, %c0_9] : memref<1x128xf32, #tpu.memory_space<vmem>>, vector<1x128xf32>
    %19 = vector.shape_cast %18 : vector<1x128xf32> to vector<1x128xf32>
    %20 = vector.broadcast %19 : vector<1x128xf32> to vector<256x128xf32>
    %c0_10 = arith.constant 0 : index
    %c0_11 = arith.constant 0 : index
    %21 = vector.load %arg8[%c0_10, %c0_11] : memref<256x128xf32, #tpu.memory_space<vmem>>, vector<256x128xf32>
    tpu.vector_store %arg8[%c0_10, %c0_11], %20 {strides = array<i32>} : memref<256x128xf32, #tpu.memory_space<vmem>>, vector<256x128xf32>,
    %c0_12 = arith.constant 0 : index
    %c0_13 = arith.constant 0 : index
    %22 = vector.load %arg8[%c0_12, %c0_13] : memref<256x128xf32, #tpu.memory_space<vmem>>, vector<256x128xf32>
    %c0_14 = arith.constant 0 : index
    %c0_15 = arith.constant 0 : index
    %23 = vector.load %arg7[%c0_14, %c0_15] : memref<256x384xbf16, #tpu.memory_space<vmem>>, vector<256x384xbf16>
    %c1 = arith.constant 1 : index
    %c0_16 = arith.constant 0 : index
    %c0_17 = arith.constant 0 : index
    %24 = vector.load %arg2[%c1, %c0_16, %c0_17] : memref<3x384x128xbf16, #tpu.memory_space<vmem>>, vector<1x384x128xbf16>
    %25 = vector.shape_cast %24 : vector<1x384x128xbf16> to vector<384x128xbf16>
    %cst_18 = arith.constant dense<0.000000e+00> : vector<256x128xf32>
    %26 = tpu.matmul %23, %25, %cst_18 {dimension_numbers = #tpu.dot_dimension_numbers<[1], [0], [0], [1], [0, 0, 1, 1], [], []>} : vector<256x384xbf16>, vector<384x128xbf16>, vector<256x128xf32> -> vector<256x128xf32>
    %27 = arith.addf %22, %26 : vector<256x128xf32>
    %c0_19 = arith.constant 0 : index
    %c0_20 = arith.constant 0 : index
    %28 = vector.load %arg8[%c0_19, %c0_20] : memref<256x128xf32, #tpu.memory_space<vmem>>, vector<256x128xf32>
    tpu.vector_store %arg8[%c0_19, %c0_20], %27 {strides = array<i32>} : memref<256x128xf32, #tpu.memory_space<vmem>>, vector<256x128xf32>,
    %c16 = arith.constant 16 : index
    %c0_21 = arith.constant 0 : index
    %29 = vector.load %arg8[%c16, %c0_21] : memref<256x128xf32, #tpu.memory_space<vmem>>, vector<240x128xf32>
    %c0_22 = arith.constant 0 : index
    %c0_23 = arith.constant 0 : index
    %30 = vector.load %arg7[%c0_22, %c0_23] : memref<256x384xbf16, #tpu.memory_space<vmem>>, vector<240x384xbf16>
    %c0_24 = arith.constant 0 : index
    %c0_25 = arith.constant 0 : index
    %c0_26 = arith.constant 0 : index
    %31 = vector.load %arg2[%c0_24, %c0_25, %c0_26] : memref<3x384x128xbf16, #tpu.memory_space<vmem>>, vector<1x384x128xbf16>
    %32 = vector.shape_cast %31 : vector<1x384x128xbf16> to vector<384x128xbf16>
    %cst_27 = arith.constant dense<0.000000e+00> : vector<240x128xf32>
    %33 = tpu.matmul %30, %32, %cst_27 {dimension_numbers = #tpu.dot_dimension_numbers<[1], [0], [0], [1], [0, 0, 1, 1], [], []>} : vector<240x384xbf16>, vector<384x128xbf16>, vector<240x128xf32> -> vector<240x128xf32>
    %34 = arith.addf %29, %33 : vector<240x128xf32>
    %c16_28 = arith.constant 16 : index
    %c0_29 = arith.constant 0 : index
    %35 = vector.load %arg8[%c16_28, %c0_29] : memref<256x128xf32, #tpu.memory_space<vmem>>, vector<240x128xf32>
    tpu.vector_store %arg8[%c16_28, %c0_29], %34 {strides = array<i32>} : memref<256x128xf32, #tpu.memory_space<vmem>>, vector<240x128xf32>,
    %c0_30 = arith.constant 0 : index
    %c0_31 = arith.constant 0 : index
    %36 = vector.load %arg8[%c0_30, %c0_31] : memref<256x128xf32, #tpu.memory_space<vmem>>, vector<240x128xf32>
    %c16_32 = arith.constant 16 : index
    %c0_33 = arith.constant 0 : index
    %37 = vector.load %arg7[%c16_32, %c0_33] : memref<256x384xbf16, #tpu.memory_space<vmem>>, vector<240x384xbf16>
    %c2 = arith.constant 2 : index
    %c0_34 = arith.constant 0 : index
    %c0_35 = arith.constant 0 : index
    %38 = vector.load %arg2[%c2, %c0_34, %c0_35] : memref<3x384x128xbf16, #tpu.memory_space<vmem>>, vector<1x384x128xbf16>
    %39 = vector.shape_cast %38 : vector<1x384x128xbf16> to vector<384x128xbf16>
    %cst_36 = arith.constant dense<0.000000e+00> : vector<240x128xf32>
    %40 = tpu.matmul %37, %39, %cst_36 {dimension_numbers = #tpu.dot_dimension_numbers<[1], [0], [0], [1], [0, 0, 1, 1], [], []>} : vector<240x384xbf16>, vector<384x128xbf16>, vector<240x128xf32> -> vector<240x128xf32>
    %41 = arith.addf %36, %40 : vector<240x128xf32>
    %c0_37 = arith.constant 0 : index
    %c0_38 = arith.constant 0 : index
    %42 = vector.load %arg8[%c0_37, %c0_38] : memref<256x128xf32, #tpu.memory_space<vmem>>, vector<240x128xf32>
    tpu.vector_store %arg8[%c0_37, %c0_38], %41 {strides = array<i32>} : memref<256x128xf32, #tpu.memory_space<vmem>>, vector<240x128xf32>,
    %c0_39 = arith.constant 0 : index
    %c0_40 = arith.constant 0 : index
    %43 = vector.load %arg8[%c0_39, %c0_40] : memref<256x128xf32, #tpu.memory_space<vmem>>, vector<256x128xf32>
    %cst_41 = arith.constant 0.000000e+00 : f32
    %44 = vector.broadcast %cst_41 : f32 to vector<256x128xf32>
    %45 = arith.maximumf %43, %44 : vector<256x128xf32>
    %46 = arith.truncf %45 : vector<256x128xf32> to vector<256x128xbf16>
    %c0_42 = arith.constant 0 : index
    %c0_43 = arith.constant 0 : index
    %47 = vector.load %arg4[%c0_42, %c0_43] : memref<128x128xbf16, #tpu.memory_space<vmem>>, vector<128x128xbf16>
    %cst_44 = arith.constant dense<0.000000e+00> : vector<256x128xf32>
    %48 = tpu.matmul %46, %47, %cst_44 {dimension_numbers = #tpu.dot_dimension_numbers<[1], [0], [0], [1], [0, 0, 1, 1], [], []>} : vector<256x128xbf16>, vector<128x128xbf16>, vector<256x128xf32> -> vector<256x128xf32>
    %c0_45 = arith.constant 0 : index
    %c0_46 = arith.constant 0 : index
    %49 = vector.load %arg5[%c0_45, %c0_46] : memref<1x128xf32, #tpu.memory_space<vmem>>, vector<1x128xf32>
    %50 = vector.broadcast %49 : vector<1x128xf32> to vector<256x128xf32>
    %51 = arith.addf %48, %50 : vector<256x128xf32>
    %c0_47 = arith.constant 0 : index
    %c0_48 = arith.constant 0 : index
    %c0_49 = arith.constant 0 : index
    %c0_50 = arith.constant 0 : index
    %52 = vector.load %arg1[%c0_47, %c0_48, %c0_49, %c0_50] : memref<1x16x16x128xf32, #tpu.memory_space<vmem>>, vector<1x16x16x128xf32>
    %53 = vector.shape_cast %52 : vector<1x16x16x128xf32> to vector<16x16x128xf32>
    %54 = vector.shape_cast %51 : vector<256x128xf32> to vector<16x16x128xf32>
    %55 = arith.addf %53, %54 : vector<16x16x128xf32>
    %c0_51 = arith.constant 0 : index
    %c0_52 = arith.constant 0 : index
    %c0_53 = arith.constant 0 : index
    %c0_54 = arith.constant 0 : index
    %56 = vector.load %arg6[%c0_51, %c0_52, %c0_53, %c0_54] : memref<1x16x16x128xf32, #tpu.memory_space<vmem>>, vector<1x16x16x128xf32>
    %57 = vector.shape_cast %56 : vector<1x16x16x128xf32> to vector<16x16x128xf32>
    %58 = vector.shape_cast %55 : vector<16x16x128xf32> to vector<1x16x16x128xf32>
    tpu.vector_store %arg6[%c0_51, %c0_52, %c0_53, %c0_54], %58 {strides = array<i32>} : memref<1x16x16x128xf32, #tpu.memory_space<vmem>>, vector<1x16x16x128xf32>,
    return
  }
  func.func @transform_0(%arg0: i32) -> (i32, i32, i32, i32) {
    %c0_i32 = arith.constant 0 : i32
    %c0_i32_0 = arith.constant 0 : i32
    %c0_i32_1 = arith.constant 0 : i32
    %c0_i32_2 = arith.constant 0 : i32
    return %arg0, %c0_i32, %c0_i32_0, %c0_i32_1 : i32, i32, i32, i32
  }
  func.func @transform_1(%arg0: i32) -> (i32, i32, i32) {
    %c0_i32 = arith.constant 0 : i32
    %c0_i32_0 = arith.constant 0 : i32
    %c0_i32_1 = arith.constant 0 : i32
    %c0_i32_2 = arith.constant 0 : i32
    return %c0_i32, %c0_i32_0, %c0_i32_1 : i32, i32, i32
  }
  func.func @transform_2(%arg0: i32) -> (i32, i32) {
    %c0_i32 = arith.constant 0 : i32
    %c0_i32_0 = arith.constant 0 : i32
    %c0_i32_1 = arith.constant 0 : i32
    return %c0_i32, %c0_i32_0 : i32, i32
  }
  func.func @transform_3(%arg0: i32) -> (i32, i32) {
    %c0_i32 = arith.constant 0 : i32
    %c0_i32_0 = arith.constant 0 : i32
    %c0_i32_1 = arith.constant 0 : i32
    return %c0_i32, %c0_i32_0 : i32, i32
  }
  func.func @transform_4(%arg0: i32) -> (i32, i32) {
    %c0_i32 = arith.constant 0 : i32
    %c0_i32_0 = arith.constant 0 : i32
    %c0_i32_1 = arith.constant 0 : i32
    return %c0_i32, %c0_i32_0 : i32, i32
  }
  func.func @transform_5(%arg0: i32) -> (i32, i32, i32, i32) {
    %c0_i32 = arith.constant 0 : i32
    %c0_i32_0 = arith.constant 0 : i32
    %c0_i32_1 = arith.constant 0 : i32
    %c0_i32_2 = arith.constant 0 : i32
    return %arg0, %c0_i32, %c0_i32_0, %c0_i32_1 : i32, i32, i32, i32
  }
}

</mosaic_0001>

<llo_original>
// kernel: tpu_custom_call.1
$region0: #{tpu_custom_call.1}
  #allocation0 [shape = 'u32[]', space=smem, size = 0x4, offset = 0x4, fixed_abs, tag = 'smem constant byte address 0x4 - core index']
  #allocation1 [shape = 'u32[72,128]{1,0:T(1,128)}', space=vmem, size = 0x9000, scoped, tag = 'internal scratch']
  #allocation2 [shape = 'bf16[256,384]{1,0:T(8,128)(2,1)}', space=vmem, size = 0x30000, scoped, tag = 'scratch operand']
  #allocation3 [shape = 'f32[256,128]{1,0:T(8,128)}', space=vmem, size = 0x20000, scoped, tag = 'scratch operand']
  %s0 = inlined_call_operand.hbm [shape: f32[2,16,16,128], index: 0, kind: input, shape index: {}]
  %s1 = inlined_call_operand.hbm [shape: bf16[3,384,128], index: 1, kind: input, shape index: {}]
  %s2 = inlined_call_operand.vmem [shape: f32[1,128], index: 2, kind: input, shape index: {}]
  %s3 = inlined_call_operand.hbm [shape: bf16[128,128], index: 3, kind: input, shape index: {}]
  %s4 = inlined_call_operand.vmem [shape: f32[1,128], index: 4, kind: input, shape index: {}]
  %s5 = inlined_call_operand.hbm [shape: f32[2,16,16,128], index: 5, kind: output, shape index: {}]
  %s6 = sld [smem:[#allocation0]]
  $region65: #{tpu_custom_call.1} parent=0
    _
  %s8 = ssub.s32 1, %s6
  %s9 = scalar_select 0, %s8, %s6
  $region1: #{tpu_custom_call.1} parent=0
    #allocation4 [shape = 'u8[262144]{0}', space=vmem, size = 0x40000, scoped, tag = 'input window, operand 0']
    #allocation5 [shape = 's32[2]{0}', space=sflag, size = 0x8, scoped, tag = 'scoped memory for tpu_custom_call.1']
    #allocation6 [shape = 's32[2]{0}', space=sflag, size = 0x8, scoped, tag = 'scoped memory for tpu_custom_call.1']
    #allocation7 [shape = 'u8[294912]{0}', space=vmem, size = 0x48000, scoped, tag = 'input window, operand 1, single buffered']
    #allocation8 [shape = 's32[1]{0}', space=sflag, size = 0x4, scoped, tag = 'scoped memory for tpu_custom_call.1']
    #allocation9 [shape = 'u8[32768]{0}', space=vmem, size = 0x8000, scoped, tag = 'input window, operand 3, single buffered']
    #allocation10 [shape = 'u8[262144]{0}', space=vmem, size = 0x40000, scoped, tag = 'output window, operand 0']
    %10 = vsyncpa [#allocation5], 0
    %s11 = scalar_lea.sflag [#allocation5], 1
    %12 = vsyncpa %s11, 0
    %13 = vsyncpa [#allocation8], 0
    %14 = vsyncpa [#allocation6], 0
    %s15 = scalar_lea.sflag [#allocation6], 1
    %16 = vsyncpa %s15, 0
    loop: start=0, step=1, limit=4
    $region2: #{tpu_custom_call.1} parent=1 // loop_pre_header
      _
    $region3: #{tpu_custom_call.1} parent=1 // loop_header
      %s18 = sphi 0, %s22
      %p19 = scmp.ge.s32.totalorder %s18, 4
      %s28 = sphi 0, %s30
      %s31 = sphi 0, %s28
      %s32 = sphi 0, %s31
      %s48 = sphi 0, %s32
      %s52 = sphi 0, %s52
      %s54 = sphi 0, %s52
      %s55 = sphi 0, %s54
      %s69 = sphi 0, %s55
      %s73 = sphi 0, %s73
      %s75 = sphi 0, %s73
      %s76 = sphi 0, %s75
      %s90 = sphi 0, %s76
      %s94 = sphi 0, %s94
      %s96 = sphi 0, %s94
      %s97 = sphi 0, %s96
      %s111 = sphi 0, %s97
      %s115 = sphi 0, %s115
      %s117 = sphi 0, %s115
      %s118 = sphi 0, %s117
      %s132 = sphi 0, %s118
      %s138 = sphi 0, %s140
      %s141 = sphi 0, %s138
      %s142 = sphi 0, %s141
      %s158 = sphi 0, %s142
    $region4: #{tpu_custom_call.1} parent=1 // loop_header_branch
      %21 = sbr.rel (%p19) target = $region8
    $region5: #{tpu_custom_call.1} parent=1 // loop_body
      %s23 = ssub.s32 %s18, 1
      %s24 = ssub.s32 %s18, 2
      %s25 = sadd.s32 %s18, 1
      %s26 = ssub.s32 %s18, %s25
      %p27 = scmp.eq.s32.totalorder %s26, 0
      %s29 = sadd.s32 %s28, 1
      %s30 = scalar_select %p27, %s28, %s29
      %p33 = pneg %p27
      %p34 = scmp.eq.s32.totalorder %s18, 1
      %p35 = por %p33, %p34
      %p36 = scmp.ne.s32.totalorder %s28, %s31
      %p37 = scmp.eq.s32.totalorder %s18, 0
      %p38 = por %p36, %p37
      %p39 = scmp.ne.s32.totalorder %s28, %s31
      %p40 = scmp.eq.s32.totalorder %s23, 1
      %p41 = por %p39, %p40
      %p42 = scmp.ne.s32.totalorder %s31, %s32
      %p43 = scmp.eq.s32.totalorder %s23, 0
      %p44 = por %p42, %p43
      %p45 = scmp.ne.s32.totalorder %s31, %s32
      %p46 = scmp.eq.s32.totalorder %s24, 1
      %p47 = por %p45, %p46
      %p49 = scmp.ne.s32.totalorder %s32, %s48
      %p50 = scmp.eq.s32.totalorder %s24, 0
      %p51 = por %p49, %p50
      %s53 = sadd.s32 %s52, 1
      %p56 = scmp.eq.s32.totalorder %s18, 1
      %p57 = scmp.ne.s32.totalorder %s52, %s54
      %p58 = scmp.eq.s32.totalorder %s18, 0
      %p59 = por %p57, %p58
      %p60 = scmp.ne.s32.totalorder %s52, %s54
      %p61 = scmp.eq.s32.totalorder %s23, 1
      %p62 = por %p60, %p61
      %p63 = scmp.ne.s32.totalorder %s54, %s55
      %p64 = scmp.eq.s32.totalorder %s23, 0
      %p65 = por %p63, %p64
      %p66 = scmp.ne.s32.totalorder %s54, %s55
      %p67 = scmp.eq.s32.totalorder %s24, 1
      %p68 = por %p66, %p67
      %p70 = scmp.ne.s32.totalorder %s55, %s69
      %p71 = scmp.eq.s32.totalorder %s24, 0
      %p72 = por %p70, %p71
      %s74 = sadd.s32 %s73, 1
      %p77 = scmp.eq.s32.totalorder %s18, 1
      %p78 = scmp.ne.s32.totalorder %s73, %s75
      %p79 = scmp.eq.s32.totalorder %s18, 0
      %p80 = por %p78, %p79
      %p81 = scmp.ne.s32.totalorder %s73, %s75
      %p82 = scmp.eq.s32.totalorder %s23, 1
      %p83 = por %p81, %p82
      %p84 = scmp.ne.s32.totalorder %s75, %s76
      %p85 = scmp.eq.s32.totalorder %s23, 0
      %p86 = por %p84, %p85
      %p87 = scmp.ne.s32.totalorder %s75, %s76
      %p88 = scmp.eq.s32.totalorder %s24, 1
      %p89 = por %p87, %p88
      %p91 = scmp.ne.s32.totalorder %s76, %s90
      %p92 = scmp.eq.s32.totalorder %s24, 0
      %p93 = por %p91, %p92
      %s95 = sadd.s32 %s94, 1
      %p98 = scmp.eq.s32.totalorder %s18, 1
      %p99 = scmp.ne.s32.totalorder %s94, %s96
      %p100 = scmp.eq.s32.totalorder %s18, 0
      %p101 = por %p99, %p100
      %p102 = scmp.ne.s32.totalorder %s94, %s96
      %p103 = scmp.eq.s32.totalorder %s23, 1
      %p104 = por %p102, %p103
      %p105 = scmp.ne.s32.totalorder %s96, %s97
      %p106 = scmp.eq.s32.totalorder %s23, 0
      %p107 = por %p105, %p106
      %p108 = scmp.ne.s32.totalorder %s96, %s97
      %p109 = scmp.eq.s32.totalorder %s24, 1
      %p110 = por %p108, %p109
      %p112 = scmp.ne.s32.totalorder %s97, %s111
      %p113 = scmp.eq.s32.totalorder %s24, 0
      %p114 = por %p112, %p113
      %s116 = sadd.s32 %s115, 1
      %p119 = scmp.eq.s32.totalorder %s18, 1
      %p120 = scmp.ne.s32.totalorder %s115, %s117
      %p121 = scmp.eq.s32.totalorder %s18, 0
      %p122 = por %p120, %p121
      %p123 = scmp.ne.s32.totalorder %s115, %s117
      %p124 = scmp.eq.s32.totalorder %s23, 1
      %p125 = por %p123, %p124
      %p126 = scmp.ne.s32.totalorder %s117, %s118
      %p127 = scmp.eq.s32.totalorder %s23, 0
      %p128 = por %p126, %p127
      %p129 = scmp.ne.s32.totalorder %s117, %s118
      %p130 = scmp.eq.s32.totalorder %s24, 1
      %p131 = por %p129, %p130
      %p133 = scmp.ne.s32.totalorder %s118, %s132
      %p134 = scmp.eq.s32.totalorder %s24, 0
      %p135 = por %p133, %p134
      %s136 = ssub.s32 %s18, %s25
      %p137 = scmp.eq.s32.totalorder %s136, 0
      %s139 = sadd.s32 %s138, 1
      %s140 = scalar_select %p137, %s138, %s139
      %p143 = pneg %p137
      %p144 = scmp.eq.s32.totalorder %s18, 1
      %p145 = por %p143, %p144
      %p146 = scmp.ne.s32.totalorder %s138, %s141
      %p147 = scmp.eq.s32.totalorder %s18, 0
      %p148 = por %p146, %p147
      %p149 = scmp.ne.s32.totalorder %s138, %s141
      %p150 = scmp.eq.s32.totalorder %s23, 1
      %p151 = por %p149, %p150
      %p152 = scmp.ne.s32.totalorder %s141, %s142
      %p153 = scmp.eq.s32.totalorder %s23, 0
      %p154 = por %p152, %p153
      %p155 = scmp.ne.s32.totalorder %s141, %s142
      %p156 = scmp.eq.s32.totalorder %s24, 1
      %p157 = por %p155, %p156
      %p159 = scmp.ne.s32.totalorder %s142, %s158
      %p160 = scmp.eq.s32.totalorder %s24, 0
      %p161 = por %p159, %p160
      %p162 = scmp.le.s32.totalorder 1, %s18
      %p163 = scmp.lt.s32.totalorder %s18, 3
      %p164 = pnand %p162, %p163
      %p165 = pneg %p164
      // Predicated region
      $region9: #{tpu_custom_call.1} parent=5 // pred_check
        _
      $region10: #{tpu_custom_call.1} parent=5 // pred_check_branch
        %167 = sbr.rel (%p164) target = $region12
      $region11: #{tpu_custom_call.1} parent=5 // pred_region
        %s168 = ssub.s32 %s18, 1
        // Predicated region
        $region13: #{tpu_custom_call.1} parent=11 // pred_check
          %p169 = pneg %p65
        $region14: #{tpu_custom_call.1} parent=11 // pred_check_branch
          %171 = sbr.rel (%p169) target = $region16
        $region15: #{tpu_custom_call.1} parent=11 // pred_region
          %173 = vsyncadd [#allocation8], 0
          %s174 = sshll.u32 %s1, 4
          %s175 = int_to_ptr.hbm [resolvable:$true] %s174
          %s176 = sshll.u32 [#allocation7], 4
          %s177 = int_to_ptr.vmem [resolvable:$true] %s176
          %182 = dma.hbm_to_vmem [thread:$0]  %s175, 9216, %s177, [#allocation8], 64, 64, 4
        $region16: #{tpu_custom_call.1} parent=11 // pred_fallthru
          _
        // Predicated region
        $region17: #{tpu_custom_call.1} parent=11 // pred_check
          %p183 = pneg %p86
        $region18: #{tpu_custom_call.1} parent=11 // pred_check_branch
          %185 = sbr.rel (%p183) target = $region20
        $region19: #{tpu_custom_call.1} parent=11 // pred_region
          _
        $region20: #{tpu_custom_call.1} parent=11 // pred_fallthru
          _
        // Predicated region
        $region21: #{tpu_custom_call.1} parent=11 // pred_check
          %p186 = pneg %p107
        $region22: #{tpu_custom_call.1} parent=11 // pred_check_branch
          %188 = sbr.rel (%p186) target = $region24
        $region23: #{tpu_custom_call.1} parent=11 // pred_region
          %190 = vsyncadd [#allocation8], 0
          %s191 = sshll.u32 %s3, 4
          %s192 = int_to_ptr.hbm [resolvable:$true] %s191
          %s193 = sshll.u32 [#allocation9], 4
          %s194 = int_to_ptr.vmem [resolvable:$true] %s193
          %199 = dma.hbm_to_vmem [thread:$0]  %s192, 1024, %s194, [#allocation8], 64, 64, 4
        $region24: #{tpu_custom_call.1} parent=11 // pred_fallthru
          _
        // Predicated region
        $region25: #{tpu_custom_call.1} parent=11 // pred_check
          %p200 = pneg %p128
        $region26: #{tpu_custom_call.1} parent=11 // pred_check_branch
          %202 = sbr.rel (%p200) target = $region28
        $region27: #{tpu_custom_call.1} parent=11 // pred_region
          _
        $region28: #{tpu_custom_call.1} parent=11 // pred_fallthru
          _
      $region12: #{tpu_custom_call.1} parent=5 // pred_fallthru
        _
      %p203 = scmp.lt.s32.totalorder %s18, 2
      // Predicated region
      $region29: #{tpu_custom_call.1} parent=5 // pred_check
        %p204 = pneg %p203
      $region30: #{tpu_custom_call.1} parent=5 // pred_check_branch
        %206 = sbr.rel (%p204) target = $region32
      $region31: #{tpu_custom_call.1} parent=5 // pred_region
        // Predicated region
        $region33: #{tpu_custom_call.1} parent=31 // pred_check
          %p207 = pneg %p38
        $region34: #{tpu_custom_call.1} parent=31 // pred_check_branch
          %209 = sbr.rel (%p207) target = $region36
        $region35: #{tpu_custom_call.1} parent=31 // pred_region
          %s210 = sand.u32 %s28, 1
          %s211 = scalar_lea.sflag [#allocation5], %s210
          %s212 = sand.u32 %s28, 1
          %s213 = smul.addr %s212, 256
          %s214 = scalar_lea.vmem [#allocation4], %s213
          %216 = vsyncadd %s211, 0
          %s217 = smul.addr %s18, 32
          %s218 = smul.addr %s217, 8
          %s219 = scalar_lea.hbm %s0, %s218
          %s220 = sshll.u32 %s219, 4
          %s221 = int_to_ptr.hbm [resolvable:$true] %s220
          %s222 = sshll.u32 %s214, 4
          %s223 = int_to_ptr.vmem [resolvable:$true] %s222
          %228 = dma.hbm_to_vmem [thread:$0]  %s221, 4096, %s223, %s211, 128, 128, 8
        $region36: #{tpu_custom_call.1} parent=31 // pred_fallthru
          _
      $region32: #{tpu_custom_call.1} parent=5 // pred_fallthru
        _
      %p229 = scmp.le.s32.totalorder 1, %s18
      %p230 = scmp.lt.s32.totalorder %s18, 3
      %p231 = pnand %p229, %p230
      %p232 = pneg %p231
      // Predicated region
      $region37: #{tpu_custom_call.1} parent=5 // pred_check
        _
      $region38: #{tpu_custom_call.1} parent=5 // pred_check_branch
        %234 = sbr.rel (%p231) target = $region40
      $region39: #{tpu_custom_call.1} parent=5 // pred_region
        %s235 = ssub.s32 %s18, 1
        %s236 = sand.u32 %s31, 1
        %s237 = scalar_lea.sflag [#allocation5], %s236
        %s238 = sand.u32 %s31, 1
        %s239 = smul.addr %s238, 256
        %s240 = scalar_lea.vmem [#allocation4], %s239
        // Predicated region
        $region41: #{tpu_custom_call.1} parent=39 // pred_check
          %p241 = pneg %p44
        $region42: #{tpu_custom_call.1} parent=39 // pred_check_branch
          %243 = sbr.rel (%p241) target = $region44
        $region43: #{tpu_custom_call.1} parent=39 // pred_region
          %245 = dma.done %s237, 4096
        $region44: #{tpu_custom_call.1} parent=39 // pred_fallthru
          _
        // Predicated region
        $region45: #{tpu_custom_call.1} parent=39 // pred_check
          %p246 = pneg %p65
        $region46: #{tpu_custom_call.1} parent=39 // pred_check_branch
          %248 = sbr.rel (%p246) target = $region48
        $region47: #{tpu_custom_call.1} parent=39 // pred_region
          %250 = dma.done [#allocation8], 9216
        $region48: #{tpu_custom_call.1} parent=39 // pred_fallthru
          _
        // Predicated region
        $region49: #{tpu_custom_call.1} parent=39 // pred_check
          %p251 = pneg %p107
        $region50: #{tpu_custom_call.1} parent=39 // pred_check_branch
          %253 = sbr.rel (%p251) target = $region52
        $region51: #{tpu_custom_call.1} parent=39 // pred_region
          %255 = dma.done [#allocation8], 1024
        $region52: #{tpu_custom_call.1} parent=39 // pred_fallthru
          _
        %s256 = sand.u32 %s31, 1
        %s257 = scalar_lea.sflag [#allocation5], %s256
        %s258 = sand.u32 %s31, 1
        %s259 = smul.addr %s258, 256
        %s260 = scalar_lea.vmem [#allocation4], %s259
        %p261 = pneg %p44
        %p262 = pneg %p41
        %p263 = pneg %p65
        %p264 = pneg %p62
        %p265 = pneg %p86
        %p266 = pneg %p83
        %p267 = pneg %p107
        %p268 = pneg %p104
        %p269 = pneg %p128
        %p270 = pneg %p125
        %p271 = pneg %p154
        %p272 = pneg %p151
        %s273 = sand.u32 %s141, 1
        %s274 = scalar_lea.sflag [#allocation6], %s273
        %s275 = sand.u32 %s141, 1
        %s276 = smul.addr %s275, 256
        %s277 = scalar_lea.vmem [#allocation10], %s276
        %v278 = vld [vmem:[%s240] sm:$0xff]
        %v279 = vld [vmem:[%s240 + $0x8] sm:$0xff]
        %v280 = vld [vmem:[%s240 + $0x10] sm:$0xff]
        %v281 = vld [vmem:[%s240 + $0x18] sm:$0xff]
        %v282 = vld [vmem:[%s240 + $0x20] sm:$0xff]
        %v283 = vld [vmem:[%s240 + $0x28] sm:$0xff]
        %v284 = vld [vmem:[%s240 + $0x30] sm:$0xff]
        %v285 = vld [vmem:[%s240 + $0x38] sm:$0xff]
        %v286 = vld [vmem:[%s240 + $0x40] sm:$0xff]
        %v287 = vld [vmem:[%s240 + $0x48] sm:$0xff]
        %v288 = vld [vmem:[%s240 + $0x50] sm:$0xff]
        %v289 = vld [vmem:[%s240 + $0x58] sm:$0xff]
        %v290 = vld [vmem:[%s240 + $0x60] sm:$0xff]
        %v291 = vld [vmem:[%s240 + $0x68] sm:$0xff]
        %v292 = vld [vmem:[%s240 + $0x70] sm:$0xff]
        %v293 = vld [vmem:[%s240 + $0x78] sm:$0xff]
        %v294 = vld [vmem:[%s240 + $0x80] sm:$0xff]
        %v295 = vld [vmem:[%s240 + $0x88] sm:$0xff]
        %v296 = vld [vmem:[%s240 + $0x90] sm:$0xff]
        %v297 = vld [vmem:[%s240 + $0x98] sm:$0xff]
        %v298 = vld [vmem:[%s240 + $0xa0] sm:$0xff]
        %v299 = vld [vmem:[%s240 + $0xa8] sm:$0xff]
        %v300 = vld [vmem:[%s240 + $0xb0] sm:$0xff]
        %v301 = vld [vmem:[%s240 + $0xb8] sm:$0xff]
        %v302 = vld [vmem:[%s240 + $0xc0] sm:$0xff]
        %v303 = vld [vmem:[%s240 + $0xc8] sm:$0xff]
        %v304 = vld [vmem:[%s240 + $0xd0] sm:$0xff]
        %v305 = vld [vmem:[%s240 + $0xd8] sm:$0xff]
        %v306 = vld [vmem:[%s240 + $0xe0] sm:$0xff]
        %v307 = vld [vmem:[%s240 + $0xe8] sm:$0xff]
        %v308 = vld [vmem:[%s240 + $0xf0] sm:$0xff]
        %v309 = vld [vmem:[%s240 + $0xf8] sm:$0xff]
        %v310 = vmax.f32 %v278, 0.0
        %v311 = vmax.f32 %v279, 0.0
        %v312 = vmax.f32 %v280, 0.0
        %v313 = vmax.f32 %v281, 0.0
        %v314 = vmax.f32 %v282, 0.0
        %v315 = vmax.f32 %v283, 0.0
        %v316 = vmax.f32 %v284, 0.0
        %v317 = vmax.f32 %v285, 0.0
        %v318 = vmax.f32 %v286, 0.0
        %v319 = vmax.f32 %v287, 0.0
        %v320 = vmax.f32 %v288, 0.0
        %v321 = vmax.f32 %v289, 0.0
        %v322 = vmax.f32 %v290, 0.0
        %v323 = vmax.f32 %v291, 0.0
        %v324 = vmax.f32 %v292, 0.0
        %v325 = vmax.f32 %v293, 0.0
        %v326 = vmax.f32 %v294, 0.0
        %v327 = vmax.f32 %v295, 0.0
        %v328 = vmax.f32 %v296, 0.0
        %v329 = vmax.f32 %v297, 0.0
        %v330 = vmax.f32 %v298, 0.0
        %v331 = vmax.f32 %v299, 0.0
        %v332 = vmax.f32 %v300, 0.0
        %v333 = vmax.f32 %v301, 0.0
        %v334 = vmax.f32 %v302, 0.0
        %v335 = vmax.f32 %v303, 0.0
        %v336 = vmax.f32 %v304, 0.0
        %v337 = vmax.f32 %v305, 0.0
        %v338 = vmax.f32 %v306, 0.0
        %v339 = vmax.f32 %v307, 0.0
        %v340 = vmax.f32 %v308, 0.0
        %v341 = vmax.f32 %v309, 0.0
        %v342 = vpack.c.bf16 %v310, %v310
        %v343 = vpack.c.bf16 %v311, %v311
        %v344 = vpack.c.bf16 %v312, %v312
        %v345 = vpack.c.bf16 %v313, %v313
        %v346 = vpack.c.bf16 %v314, %v314
        %v347 = vpack.c.bf16 %v315, %v315
        %v348 = vpack.c.bf16 %v316, %v316
        %v349 = vpack.c.bf16 %v317, %v317
        %v350 = vpack.c.bf16 %v318, %v318
        %v351 = vpack.c.bf16 %v319, %v319
        %v352 = vpack.c.bf16 %v320, %v320
        %v353 = vpack.c.bf16 %v321, %v321
        %v354 = vpack.c.bf16 %v322, %v322
        %v355 = vpack.c.bf16 %v323, %v323
        %v356 = vpack.c.bf16 %v324, %v324
        %v357 = vpack.c.bf16 %v325, %v325
        %v358 = vpack.c.bf16 %v326, %v326
        %v359 = vpack.c.bf16 %v327, %v327
        %v360 = vpack.c.bf16 %v328, %v328
        %v361 = vpack.c.bf16 %v329, %v329
        %v362 = vpack.c.bf16 %v330, %v330
        %v363 = vpack.c.bf16 %v331, %v331
        %v364 = vpack.c.bf16 %v332, %v332
        %v365 = vpack.c.bf16 %v333, %v333
        %v366 = vpack.c.bf16 %v334, %v334
        %v367 = vpack.c.bf16 %v335, %v335
        %v368 = vpack.c.bf16 %v336, %v336
        %v369 = vpack.c.bf16 %v337, %v337
        %v370 = vpack.c.bf16 %v338, %v338
        %v371 = vpack.c.bf16 %v339, %v339
        %v372 = vpack.c.bf16 %v340, %v340
        %v373 = vpack.c.bf16 %v341, %v341
        %374 = vst [vmem:[#allocation2 + $0x4] sm:$0xf] %v342
        %375 = vst [vmem:[#allocation2 + $0x10] sm:$0xf] %v343
        %376 = vst [vmem:[#allocation2 + $0x1c] sm:$0xf] %v344
        %377 = vst [vmem:[#allocation2 + $0x28] sm:$0xf] %v345
        %378 = vst [vmem:[#allocation2 + $0x34] sm:$0xf] %v346
        %379 = vst [vmem:[#allocation2 + $0x40] sm:$0xf] %v347
        %380 = vst [vmem:[#allocation2 + $0x4c] sm:$0xf] %v348
        %381 = vst [vmem:[#allocation2 + $0x58] sm:$0xf] %v349
        %382 = vst [vmem:[#allocation2 + $0x64] sm:$0xf] %v350
        %383 = vst [vmem:[#allocation2 + $0x70] sm:$0xf] %v351
        %384 = vst [vmem:[#allocation2 + $0x7c] sm:$0xf] %v352
        %385 = vst [vmem:[#allocation2 + $0x88] sm:$0xf] %v353
        %386 = vst [vmem:[#allocation2 + $0x94] sm:$0xf] %v354
        %387 = vst [vmem:[#allocation2 + $0xa0] sm:$0xf] %v355
        %388 = vst [vmem:[#allocation2 + $0xac] sm:$0xf] %v356
        %389 = vst [vmem:[#allocation2 + $0xb8] sm:$0xf] %v357
        %390 = vst [vmem:[#allocation2 + $0xc4] sm:$0xf] %v358
        %391 = vst [vmem:[#allocation2 + $0xd0] sm:$0xf] %v359
        %392 = vst [vmem:[#allocation2 + $0xdc] sm:$0xf] %v360
        %393 = vst [vmem:[#allocation2 + $0xe8] sm:$0xf] %v361
        %394 = vst [vmem:[#allocation2 + $0xf4] sm:$0xf] %v362
        %395 = vst [vmem:[#allocation2 + $0x100] sm:$0xf] %v363
        %396 = vst [vmem:[#allocation2 + $0x10c] sm:$0xf] %v364
        %397 = vst [vmem:[#allocation2 + $0x118] sm:$0xf] %v365
        %398 = vst [vmem:[#allocation2 + $0x124] sm:$0xf] %v366
        %399 = vst [vmem:[#allocation2 + $0x130] sm:$0xf] %v367
        %400 = vst [vmem:[#allocation2 + $0x13c] sm:$0xf] %v368
        %401 = vst [vmem:[#allocation2 + $0x148] sm:$0xf] %v369
        %402 = vst [vmem:[#allocation2 + $0x154] sm:$0xf] %v370
        %403 = vst [vmem:[#allocation2 + $0x160] sm:$0xf] %v371
        %404 = vst [vmem:[#allocation2 + $0x16c] sm:$0xf] %v372
        %405 = vst [vmem:[#allocation2 + $0x178] sm:$0xf] %v373
        %vm438 = vcmask 1040384
        %v439 = vrot.slane %v310, 7
        %v440 = vrot.slane %v311, 7
        %v441 = vsel %vm438, %v439, %v440
        %v442 = vrot.slane %v312, 7
        %v443 = vrot.slane %v313, 7
        %v444 = vsel %vm438, %v442, %v443
        %v445 = vrot.slane %v314, 7
        %v446 = vrot.slane %v315, 7
        %v447 = vsel %vm438, %v445, %v446
        %v448 = vrot.slane %v316, 7
        %v449 = vrot.slane %v317, 7
        %v450 = vsel %vm438, %v448, %v449
        %v451 = vrot.slane %v318, 7
        %v452 = vrot.slane %v319, 7
        %v453 = vsel %vm438, %v451, %v452
        %v454 = vrot.slane %v320, 7
        %v455 = vrot.slane %v321, 7
        %v456 = vsel %vm438, %v454, %v455
        %v457 = vrot.slane %v322, 7
        %v458 = vrot.slane %v323, 7
        %v459 = vsel %vm438, %v457, %v458
        %v460 = vrot.slane %v324, 7
        %v461 = vrot.slane %v325, 7
        %v462 = vsel %vm438, %v460, %v461
        %v463 = vrot.slane %v326, 7
        %v464 = vrot.slane %v327, 7
        %v465 = vsel %vm438, %v463, %v464
        %v466 = vrot.slane %v328, 7
        %v467 = vrot.slane %v329, 7
        %v468 = vsel %vm438, %v466, %v467
        %v469 = vrot.slane %v330, 7
        %v470 = vrot.slane %v331, 7
        %v471 = vsel %vm438, %v469, %v470
        %v472 = vrot.slane %v332, 7
        %v473 = vrot.slane %v333, 7
        %v474 = vsel %vm438, %v472, %v473
        %v475 = vrot.slane %v334, 7
        %v476 = vrot.slane %v335, 7
        %v477 = vsel %vm438, %v475, %v476
        %v478 = vrot.slane %v336, 7
        %v479 = vrot.slane %v337, 7
        %v480 = vsel %vm438, %v478, %v479
        %v481 = vrot.slane %v338, 7
        %v482 = vrot.slane %v339, 7
        %v483 = vsel %vm438, %v481, %v482
        %v484 = vrot.slane %v340, 7
        %v485 = vrot.slane %v341, 7
        %v486 = vsel %vm438, %v484, %v485
        %v519 = vsel %vm438, 0.0, %v439
        %v520 = vsel %vm438, 0.0, %v442
        %v521 = vsel %vm438, 0.0, %v445
        %v522 = vsel %vm438, 0.0, %v448
        %v523 = vsel %vm438, 0.0, %v451
        %v524 = vsel %vm438, 0.0, %v454
        %v525 = vsel %vm438, 0.0, %v457
        %v526 = vsel %vm438, 0.0, %v460
        %v527 = vsel %vm438, 0.0, %v463
        %v528 = vsel %vm438, 0.0, %v466
        %v529 = vsel %vm438, 0.0, %v469
        %v530 = vsel %vm438, 0.0, %v472
        %v531 = vsel %vm438, 0.0, %v475
        %v532 = vsel %vm438, 0.0, %v478
        %v533 = vsel %vm438, 0.0, %v481
        %v534 = vsel %vm438, 0.0, %v484
        %v535 = vpack.c.bf16 %v519, %v519
        %v536 = vpack.c.bf16 %v441, %v441
        %v537 = vpack.c.bf16 %v520, %v520
        %v538 = vpack.c.bf16 %v444, %v444
        %v539 = vpack.c.bf16 %v521, %v521
        %v540 = vpack.c.bf16 %v447, %v447
        %v541 = vpack.c.bf16 %v522, %v522
        %v542 = vpack.c.bf16 %v450, %v450
        %v543 = vpack.c.bf16 %v523, %v523
        %v544 = vpack.c.bf16 %v453, %v453
        %v545 = vpack.c.bf16 %v524, %v524
        %v546 = vpack.c.bf16 %v456, %v456
        %v547 = vpack.c.bf16 %v525, %v525
        %v548 = vpack.c.bf16 %v459, %v459
        %v549 = vpack.c.bf16 %v526, %v526
        %v550 = vpack.c.bf16 %v462, %v462
        %v551 = vpack.c.bf16 %v527, %v527
        %v552 = vpack.c.bf16 %v465, %v465
        %v553 = vpack.c.bf16 %v528, %v528
        %v554 = vpack.c.bf16 %v468, %v468
        %v555 = vpack.c.bf16 %v529, %v529
        %v556 = vpack.c.bf16 %v471, %v471
        %v557 = vpack.c.bf16 %v530, %v530
        %v558 = vpack.c.bf16 %v474, %v474
        %v559 = vpack.c.bf16 %v531, %v531
        %v560 = vpack.c.bf16 %v477, %v477
        %v561 = vpack.c.bf16 %v532, %v532
        %v562 = vpack.c.bf16 %v480, %v480
        %v563 = vpack.c.bf16 %v533, %v533
        %v564 = vpack.c.bf16 %v483, %v483
        %v565 = vpack.c.bf16 %v534, %v534
        %v566 = vpack.c.bf16 %v486, %v486
        %567 = vst [vmem:[#allocation2] sm:$0xf] %v535
        %568 = vst [vmem:[#allocation2 + $0xc] sm:$0xf] %v536
        %569 = vst [vmem:[#allocation2 + $0x18] sm:$0xf] %v537
        %570 = vst [vmem:[#allocation2 + $0x24] sm:$0xf] %v538
        %571 = vst [vmem:[#allocation2 + $0x30] sm:$0xf] %v539
        %572 = vst [vmem:[#allocation2 + $0x3c] sm:$0xf] %v540
        %573 = vst [vmem:[#allocation2 + $0x48] sm:$0xf] %v541
        %574 = vst [vmem:[#allocation2 + $0x54] sm:$0xf] %v542
        %575 = vst [vmem:[#allocation2 + $0x60] sm:$0xf] %v543
        %576 = vst [vmem:[#allocation2 + $0x6c] sm:$0xf] %v544
        %577 = vst [vmem:[#allocation2 + $0x78] sm:$0xf] %v545
        %578 = vst [vmem:[#allocation2 + $0x84] sm:$0xf] %v546
        %579 = vst [vmem:[#allocation2 + $0x90] sm:$0xf] %v547
        %580 = vst [vmem:[#allocation2 + $0x9c] sm:$0xf] %v548
        %581 = vst [vmem:[#allocation2 + $0xa8] sm:$0xf] %v549
        %582 = vst [vmem:[#allocation2 + $0xb4] sm:$0xf] %v550
        %583 = vst [vmem:[#allocation2 + $0xc0] sm:$0xf] %v551
        %584 = vst [vmem:[#allocation2 + $0xcc] sm:$0xf] %v552
        %585 = vst [vmem:[#allocation2 + $0xd8] sm:$0xf] %v553
        %586 = vst [vmem:[#allocation2 + $0xe4] sm:$0xf] %v554
        %587 = vst [vmem:[#allocation2 + $0xf0] sm:$0xf] %v555
        %588 = vst [vmem:[#allocation2 + $0xfc] sm:$0xf] %v556
        %589 = vst [vmem:[#allocation2 + $0x108] sm:$0xf] %v557
        %590 = vst [vmem:[#allocation2 + $0x114] sm:$0xf] %v558
        %591 = vst [vmem:[#allocation2 + $0x120] sm:$0xf] %v559
        %592 = vst [vmem:[#allocation2 + $0x12c] sm:$0xf] %v560
        %593 = vst [vmem:[#allocation2 + $0x138] sm:$0xf] %v561
        %594 = vst [vmem:[#allocation2 + $0x144] sm:$0xf] %v562
        %595 = vst [vmem:[#allocation2 + $0x150] sm:$0xf] %v563
        %596 = vst [vmem:[#allocation2 + $0x15c] sm:$0xf] %v564
        %597 = vst [vmem:[#allocation2 + $0x168] sm:$0xf] %v565
        %598 = vst [vmem:[#allocation2 + $0x174] sm:$0xf] %v566
        %vm599 = vcmask 1046528
        %v600 = vrot.slane %v310, 1
        %v601 = vrot.slane %v311, 1
        %v602 = vsel %vm599, %v600, %v601
        %v603 = vrot.slane %v312, 1
        %v604 = vrot.slane %v313, 1
        %v605 = vsel %vm599, %v603, %v604
        %v606 = vrot.slane %v314, 1
        %v607 = vrot.slane %v315, 1
        %v608 = vsel %vm599, %v606, %v607
        %v609 = vrot.slane %v316, 1
        %v610 = vrot.slane %v317, 1
        %v611 = vsel %vm599, %v609, %v610
        %v612 = vrot.slane %v318, 1
        %v613 = vrot.slane %v319, 1
        %v614 = vsel %vm599, %v612, %v613
        %v615 = vrot.slane %v320, 1
        %v616 = vrot.slane %v321, 1
        %v617 = vsel %vm599, %v615, %v616
        %v618 = vrot.slane %v322, 1
        %v619 = vrot.slane %v323, 1
        %v620 = vsel %vm599, %v618, %v619
        %v621 = vrot.slane %v324, 1
        %v622 = vrot.slane %v325, 1
        %v623 = vsel %vm599, %v621, %v622
        %v624 = vrot.slane %v326, 1
        %v625 = vrot.slane %v327, 1
        %v626 = vsel %vm599, %v624, %v625
        %v627 = vrot.slane %v328, 1
        %v628 = vrot.slane %v329, 1
        %v629 = vsel %vm599, %v627, %v628
        %v630 = vrot.slane %v330, 1
        %v631 = vrot.slane %v331, 1
        %v632 = vsel %vm599, %v630, %v631
        %v633 = vrot.slane %v332, 1
        %v634 = vrot.slane %v333, 1
        %v635 = vsel %vm599, %v633, %v634
        %v636 = vrot.slane %v334, 1
        %v637 = vrot.slane %v335, 1
        %v638 = vsel %vm599, %v636, %v637
        %v639 = vrot.slane %v336, 1
        %v640 = vrot.slane %v337, 1
        %v641 = vsel %vm599, %v639, %v640
        %v642 = vrot.slane %v338, 1
        %v643 = vrot.slane %v339, 1
        %v644 = vsel %vm599, %v642, %v643
        %v645 = vrot.slane %v340, 1
        %v646 = vrot.slane %v341, 1
        %v647 = vsel %vm599, %v645, %v646
        %v680 = vsel %vm599, %v601, 0.0
        %v681 = vsel %vm599, %v604, 0.0
        %v682 = vsel %vm599, %v607, 0.0
        %v683 = vsel %vm599, %v610, 0.0
        %v684 = vsel %vm599, %v613, 0.0
        %v685 = vsel %vm599, %v616, 0.0
        %v686 = vsel %vm599, %v619, 0.0
        %v687 = vsel %vm599, %v622, 0.0
        %v688 = vsel %vm599, %v625, 0.0
        %v689 = vsel %vm599, %v628, 0.0
        %v690 = vsel %vm599, %v631, 0.0
        %v691 = vsel %vm599, %v634, 0.0
        %v692 = vsel %vm599, %v637, 0.0
        %v693 = vsel %vm599, %v640, 0.0
        %v694 = vsel %vm599, %v643, 0.0
        %v695 = vsel %vm599, %v646, 0.0
        %v696 = vpack.c.bf16 %v602, %v602
        %v697 = vpack.c.bf16 %v680, %v680
        %v698 = vpack.c.bf16 %v605, %v605
        %v699 = vpack.c.bf16 %v681, %v681
        %v700 = vpack.c.bf16 %v608, %v608
        %v701 = vpack.c.bf16 %v682, %v682
        %v702 = vpack.c.bf16 %v611, %v611
        %v703 = vpack.c.bf16 %v683, %v683
        %v704 = vpack.c.bf16 %v614, %v614
        %v705 = vpack.c.bf16 %v684, %v684
        %v706 = vpack.c.bf16 %v617, %v617
        %v707 = vpack.c.bf16 %v685, %v685
        %v708 = vpack.c.bf16 %v620, %v620
        %v709 = vpack.c.bf16 %v686, %v686
        %v710 = vpack.c.bf16 %v623, %v623
        %v711 = vpack.c.bf16 %v687, %v687
        %v712 = vpack.c.bf16 %v626, %v626
        %v713 = vpack.c.bf16 %v688, %v688
        %v714 = vpack.c.bf16 %v629, %v629
        %v715 = vpack.c.bf16 %v689, %v689
        %v716 = vpack.c.bf16 %v632, %v632
        %v717 = vpack.c.bf16 %v690, %v690
        %v718 = vpack.c.bf16 %v635, %v635
        %v719 = vpack.c.bf16 %v691, %v691
        %v720 = vpack.c.bf16 %v638, %v638
        %v721 = vpack.c.bf16 %v692, %v692
        %v722 = vpack.c.bf16 %v641, %v641
        %v723 = vpack.c.bf16 %v693, %v693
        %v724 = vpack.c.bf16 %v644, %v644
        %v725 = vpack.c.bf16 %v694, %v694
        %v726 = vpack.c.bf16 %v647, %v647
        %v727 = vpack.c.bf16 %v695, %v695
        %728 = vst [vmem:[#allocation2 + $0x8] sm:$0xf] %v696
        %729 = vst [vmem:[#allocation2 + $0x14] sm:$0xf] %v697
        %730 = vst [vmem:[#allocation2 + $0x20] sm:$0xf] %v698
        %731 = vst [vmem:[#allocation2 + $0x2c] sm:$0xf] %v699
        %732 = vst [vmem:[#allocation2 + $0x38] sm:$0xf] %v700
        %733 = vst [vmem:[#allocation2 + $0x44] sm:$0xf] %v701
        %734 = vst [vmem:[#allocation2 + $0x50] sm:$0xf] %v702
        %735 = vst [vmem:[#allocation2 + $0x5c] sm:$0xf] %v703
        %736 = vst [vmem:[#allocation2 + $0x68] sm:$0xf] %v704
        %737 = vst [vmem:[#allocation2 + $0x74] sm:$0xf] %v705
        %738 = vst [vmem:[#allocation2 + $0x80] sm:$0xf] %v706
        %739 = vst [vmem:[#allocation2 + $0x8c] sm:$0xf] %v707
        %740 = vst [vmem:[#allocation2 + $0x98] sm:$0xf] %v708
        %741 = vst [vmem:[#allocation2 + $0xa4] sm:$0xf] %v709
        %742 = vst [vmem:[#allocation2 + $0xb0] sm:$0xf] %v710
        %743 = vst [vmem:[#allocation2 + $0xbc] sm:$0xf] %v711
        %744 = vst [vmem:[#allocation2 + $0xc8] sm:$0xf] %v712
        %745 = vst [vmem:[#allocation2 + $0xd4] sm:$0xf] %v713
        %746 = vst [vmem:[#allocation2 + $0xe0] sm:$0xf] %v714
        %747 = vst [vmem:[#allocation2 + $0xec] sm:$0xf] %v715
        %748 = vst [vmem:[#allocation2 + $0xf8] sm:$0xf] %v716
        %749 = vst [vmem:[#allocation2 + $0x104] sm:$0xf] %v717
        %750 = vst [vmem:[#allocation2 + $0x110] sm:$0xf] %v718
        %751 = vst [vmem:[#allocation2 + $0x11c] sm:$0xf] %v719
        %752 = vst [vmem:[#allocation2 + $0x128] sm:$0xf] %v720
        %753 = vst [vmem:[#allocation2 + $0x134] sm:$0xf] %v721
        %754 = vst [vmem:[#allocation2 + $0x140] sm:$0xf] %v722
        %755 = vst [vmem:[#allocation2 + $0x14c] sm:$0xf] %v723
        %756 = vst [vmem:[#allocation2 + $0x158] sm:$0xf] %v724
        %757 = vst [vmem:[#allocation2 + $0x164] sm:$0xf] %v725
        %758 = vst [vmem:[#allocation2 + $0x170] sm:$0xf] %v726
        %759 = vst [vmem:[#allocation2 + $0x17c] sm:$0xf] %v727
        %v760 = vld [vmem:[%s2] sm:$0x1]
        %v762 = vperm.slane %v760, 0
        %764 = vst [vmem:[#allocation3] sm:$0xff] %v762
        %765 = vst [vmem:[#allocation3 + $0x8] sm:$0xff] %v762
        %766 = vst [vmem:[#allocation3 + $0x10] sm:$0xff] %v762
        %767 = vst [vmem:[#allocation3 + $0x18] sm:$0xff] %v762
        %768 = vst [vmem:[#allocation3 + $0x20] sm:$0xff] %v762
        %769 = vst [vmem:[#allocation3 + $0x28] sm:$0xff] %v762
        %770 = vst [vmem:[#allocation3 + $0x30] sm:$0xff] %v762
        %771 = vst [vmem:[#allocation3 + $0x38] sm:$0xff] %v762
        %772 = vst [vmem:[#allocation3 + $0x40] sm:$0xff] %v762
        %773 = vst [vmem:[#allocation3 + $0x48] sm:$0xff] %v762
        %774 = vst [vmem:[#allocation3 + $0x50] sm:$0xff] %v762
        %775 = vst [vmem:[#allocation3 + $0x58] sm:$0xff] %v762
        %776 = vst [vmem:[#allocation3 + $0x60] sm:$0xff] %v762
        %777 = vst [vmem:[#allocation3 + $0x68] sm:$0xff] %v762
        %778 = vst [vmem:[#allocation3 + $0x70] sm:$0xff] %v762
        %779 = vst [vmem:[#allocation3 + $0x78] sm:$0xff] %v762
        %780 = vst [vmem:[#allocation3 + $0x80] sm:$0xff] %v762
        %781 = vst [vmem:[#allocation3 + $0x88] sm:$0xff] %v762
        %782 = vst [vmem:[#allocation3 + $0x90] sm:$0xff] %v762
        %783 = vst [vmem:[#allocation3 + $0x98] sm:$0xff] %v762
        %784 = vst [vmem:[#allocation3 + $0xa0] sm:$0xff] %v762
        %785 = vst [vmem:[#allocation3 + $0xa8] sm:$0xff] %v762
        %786 = vst [vmem:[#allocation3 + $0xb0] sm:$0xff] %v762
        %787 = vst [vmem:[#allocation3 + $0xb8] sm:$0xff] %v762
        %788 = vst [vmem:[#allocation3 + $0xc0] sm:$0xff] %v762
        %789 = vst [vmem:[#allocation3 + $0xc8] sm:$0xff] %v762
        %790 = vst [vmem:[#allocation3 + $0xd0] sm:$0xff] %v762
        %791 = vst [vmem:[#allocation3 + $0xd8] sm:$0xff] %v762
        %792 = vst [vmem:[#allocation3 + $0xe0] sm:$0xff] %v762
        %793 = vst [vmem:[#allocation3 + $0xe8] sm:$0xff] %v762
        %794 = vst [vmem:[#allocation3 + $0xf0] sm:$0xff] %v762
        %795 = vst [vmem:[#allocation3 + $0xf8] sm:$0xff] %v762
        %v796 = vld [vmem:[#allocation3] sm:$0xff]
        %v797 = vld [vmem:[#allocation3 + $0x8] sm:$0xff]
        %v798 = vld [vmem:[#allocation3 + $0x10] sm:$0xff]
        %v799 = vld [vmem:[#allocation3 + $0x18] sm:$0xff]
        %v800 = vld [vmem:[#allocation3 + $0x20] sm:$0xff]
        %v801 = vld [vmem:[#allocation3 + $0x28] sm:$0xff]
        %v802 = vld [vmem:[#allocation3 + $0x30] sm:$0xff]
        %v803 = vld [vmem:[#allocation3 + $0x38] sm:$0xff]
        %v804 = vld [vmem:[#allocation3 + $0x40] sm:$0xff]
        %v805 = vld [vmem:[#allocation3 + $0x48] sm:$0xff]
        %v806 = vld [vmem:[#allocation3 + $0x50] sm:$0xff]
        %v807 = vld [vmem:[#allocation3 + $0x58] sm:$0xff]
        %v808 = vld [vmem:[#allocation3 + $0x60] sm:$0xff]
        %v809 = vld [vmem:[#allocation3 + $0x68] sm:$0xff]
        %v810 = vld [vmem:[#allocation3 + $0x70] sm:$0xff]
        %v811 = vld [vmem:[#allocation3 + $0x78] sm:$0xff]
        %v812 = vld [vmem:[#allocation3 + $0x80] sm:$0xff]
        %v813 = vld [vmem:[#allocation3 + $0x88] sm:$0xff]
        %v814 = vld [vmem:[#allocation3 + $0x90] sm:$0xff]
        %v815 = vld [vmem:[#allocation3 + $0x98] sm:$0xff]
        %v816 = vld [vmem:[#allocation3 + $0xa0] sm:$0xff]
        %v817 = vld [vmem:[#allocation3 + $0xa8] sm:$0xff]
        %v818 = vld [vmem:[#allocation3 + $0xb0] sm:$0xff]
        %v819 = vld [vmem:[#allocation3 + $0xb8] sm:$0xff]
        %v820 = vld [vmem:[#allocation3 + $0xc0] sm:$0xff]
        %v821 = vld [vmem:[#allocation3 + $0xc8] sm:$0xff]
        %v822 = vld [vmem:[#allocation3 + $0xd0] sm:$0xff]
        %v823 = vld [vmem:[#allocation3 + $0xd8] sm:$0xff]
        %v824 = vld [vmem:[#allocation3 + $0xe0] sm:$0xff]
        %v825 = vld [vmem:[#allocation3 + $0xe8] sm:$0xff]
        %v826 = vld [vmem:[#allocation3 + $0xf0] sm:$0xff]
        %v827 = vld [vmem:[#allocation3 + $0xf8] sm:$0xff]
        %v828 = vld [vmem:[#allocation2] sm:$0xff]
        %v829 = vld [vmem:[#allocation2 + $0x8] sm:$0xf]
        %v830 = vld [vmem:[#allocation2 + $0xc] sm:$0xff]
        %v831 = vld [vmem:[#allocation2 + $0x14] sm:$0xf]
        %v832 = vld [vmem:[#allocation2 + $0x18] sm:$0xff]
        %v833 = vld [vmem:[#allocation2 + $0x20] sm:$0xf]
        %v834 = vld [vmem:[#allocation2 + $0x24] sm:$0xff]
        %v835 = vld [vmem:[#allocation2 + $0x2c] sm:$0xf]
        %v836 = vld [vmem:[#allocation2 + $0x30] sm:$0xff]
        %v837 = vld [vmem:[#allocation2 + $0x38] sm:$0xf]
        %v838 = vld [vmem:[#allocation2 + $0x3c] sm:$0xff]
        %v839 = vld [vmem:[#allocation2 + $0x44] sm:$0xf]
        %v840 = vld [vmem:[#allocation2 + $0x48] sm:$0xff]
        %v841 = vld [vmem:[#allocation2 + $0x50] sm:$0xf]
        %v842 = vld [vmem:[#allocation2 + $0x54] sm:$0xff]
        %v843 = vld [vmem:[#allocation2 + $0x5c] sm:$0xf]
        %v844 = vld [vmem:[#allocation2 + $0x60] sm:$0xff]
        %v845 = vld [vmem:[#allocation2 + $0x68] sm:$0xf]
        %v846 = vld [vmem:[#allocation2 + $0x6c] sm:$0xff]
        %v847 = vld [vmem:[#allocation2 + $0x74] sm:$0xf]
        %v848 = vld [vmem:[#allocation2 + $0x78] sm:$0xff]
        %v849 = vld [vmem:[#allocation2 + $0x80] sm:$0xf]
        %v850 = vld [vmem:[#allocation2 + $0x84] sm:$0xff]
        %v851 = vld [vmem:[#allocation2 + $0x8c] sm:$0xf]
        %v852 = vld [vmem:[#allocation2 + $0x90] sm:$0xff]
        %v853 = vld [vmem:[#allocation2 + $0x98] sm:$0xf]
        %v854 = vld [vmem:[#allocation2 + $0x9c] sm:$0xff]
        %v855 = vld [vmem:[#allocation2 + $0xa4] sm:$0xf]
        %v856 = vld [vmem:[#allocation2 + $0xa8] sm:$0xff]
        %v857 = vld [vmem:[#allocation2 + $0xb0] sm:$0xf]
        %v858 = vld [vmem:[#allocation2 + $0xb4] sm:$0xff]
        %v859 = vld [vmem:[#allocation2 + $0xbc] sm:$0xf]
        %v860 = vld [vmem:[#allocation2 + $0xc0] sm:$0xff]
        %v861 = vld [vmem:[#allocation2 + $0xc8] sm:$0xf]
        %v862 = vld [vmem:[#allocation2 + $0xcc] sm:$0xff]
        %v863 = vld [vmem:[#allocation2 + $0xd4] sm:$0xf]
        %v864 = vld [vmem:[#allocation2 + $0xd8] sm:$0xff]
        %v865 = vld [vmem:[#allocation2 + $0xe0] sm:$0xf]
        %v866 = vld [vmem:[#allocation2 + $0xe4] sm:$0xff]
        %v867 = vld [vmem:[#allocation2 + $0xec] sm:$0xf]
        %v868 = vld [vmem:[#allocation2 + $0xf0] sm:$0xff]
        %v869 = vld [vmem:[#allocation2 + $0xf8] sm:$0xf]
        %v870 = vld [vmem:[#allocation2 + $0xfc] sm:$0xff]
        %v871 = vld [vmem:[#allocation2 + $0x104] sm:$0xf]
        %v872 = vld [vmem:[#allocation2 + $0x108] sm:$0xff]
        %v873 = vld [vmem:[#allocation2 + $0x110] sm:$0xf]
        %v874 = vld [vmem:[#allocation2 + $0x114] sm:$0xff]
        %v875 = vld [vmem:[#allocation2 + $0x11c] sm:$0xf]
        %v876 = vld [vmem:[#allocation2 + $0x120] sm:$0xff]
        %v877 = vld [vmem:[#allocation2 + $0x128] sm:$0xf]
        %v878 = vld [vmem:[#allocation2 + $0x12c] sm:$0xff]
        %v879 = vld [vmem:[#allocation2 + $0x134] sm:$0xf]
        %v880 = vld [vmem:[#allocation2 + $0x138] sm:$0xff]
        %v881 = vld [vmem:[#allocation2 + $0x140] sm:$0xf]
        %v882 = vld [vmem:[#allocation2 + $0x144] sm:$0xff]
        %v883 = vld [vmem:[#allocation2 + $0x14c] sm:$0xf]
        %v884 = vld [vmem:[#allocation2 + $0x150] sm:$0xff]
        %v885 = vld [vmem:[#allocation2 + $0x158] sm:$0xf]
        %v886 = vld [vmem:[#allocation2 + $0x15c] sm:$0xff]
        %v887 = vld [vmem:[#allocation2 + $0x164] sm:$0xf]
        %v888 = vld [vmem:[#allocation2 + $0x168] sm:$0xff]
        %v889 = vld [vmem:[#allocation2 + $0x170] sm:$0xf]
        %v890 = vld [vmem:[#allocation2 + $0x174] sm:$0xff]
        %v891 = vld [vmem:[#allocation2 + $0x17c] sm:$0xf]
        %s892 = scalar_lea.vmem [#allocation7], 192
        %v893 = vld [vmem:[%s892] sm:$0xf]
        %v894 = vld [vmem:[%s892 + $0x4] sm:$0xf]
        %v895 = vld [vmem:[%s892 + $0x8] sm:$0xf]
        %v896 = vld [vmem:[%s892 + $0xc] sm:$0xf]
        %v897 = vld [vmem:[%s892 + $0x10] sm:$0xf]
        %v898 = vld [vmem:[%s892 + $0x14] sm:$0xf]
        %v899 = vld [vmem:[%s892 + $0x18] sm:$0xf]
        %v900 = vld [vmem:[%s892 + $0x1c] sm:$0xf]
        %v901 = vld [vmem:[%s892 + $0x20] sm:$0xf]
        %v902 = vld [vmem:[%s892 + $0x24] sm:$0xf]
        %v903 = vld [vmem:[%s892 + $0x28] sm:$0xf]
        %v904 = vld [vmem:[%s892 + $0x2c] sm:$0xf]
        %v905 = vld [vmem:[%s892 + $0x30] sm:$0xf]
        %v906 = vld [vmem:[%s892 + $0x34] sm:$0xf]
        %v907 = vld [vmem:[%s892 + $0x38] sm:$0xf]
        %v908 = vld [vmem:[%s892 + $0x3c] sm:$0xf]
        %v909 = vld [vmem:[%s892 + $0x40] sm:$0xf]
        %v910 = vld [vmem:[%s892 + $0x44] sm:$0xf]
        %v911 = vld [vmem:[%s892 + $0x48] sm:$0xf]
        %v912 = vld [vmem:[%s892 + $0x4c] sm:$0xf]
        %v913 = vld [vmem:[%s892 + $0x50] sm:$0xf]
        %v914 = vld [vmem:[%s892 + $0x54] sm:$0xf]
        %v915 = vld [vmem:[%s892 + $0x58] sm:$0xf]
        %v916 = vld [vmem:[%s892 + $0x5c] sm:$0xf]
        %v917 = vld [vmem:[%s892 + $0x60] sm:$0xf]
        %v918 = vld [vmem:[%s892 + $0x64] sm:$0xf]
        %v919 = vld [vmem:[%s892 + $0x68] sm:$0xf]
        %v920 = vld [vmem:[%s892 + $0x6c] sm:$0xf]
        %v921 = vld [vmem:[%s892 + $0x70] sm:$0xf]
        %v922 = vld [vmem:[%s892 + $0x74] sm:$0xf]
        %v923 = vld [vmem:[%s892 + $0x78] sm:$0xf]
        %v924 = vld [vmem:[%s892 + $0x7c] sm:$0xf]
        %v925 = vld [vmem:[%s892 + $0x80] sm:$0xf]
        %v926 = vld [vmem:[%s892 + $0x84] sm:$0xf]
        %v927 = vld [vmem:[%s892 + $0x88] sm:$0xf]
        %v928 = vld [vmem:[%s892 + $0x8c] sm:$0xf]
        %v929 = vld [vmem:[%s892 + $0x90] sm:$0xf]
        %v930 = vld [vmem:[%s892 + $0x94] sm:$0xf]
        %v931 = vld [vmem:[%s892 + $0x98] sm:$0xf]
        %v932 = vld [vmem:[%s892 + $0x9c] sm:$0xf]
        %v933 = vld [vmem:[%s892 + $0xa0] sm:$0xf]
        %v934 = vld [vmem:[%s892 + $0xa4] sm:$0xf]
        %v935 = vld [vmem:[%s892 + $0xa8] sm:$0xf]
        %v936 = vld [vmem:[%s892 + $0xac] sm:$0xf]
        %v937 = vld [vmem:[%s892 + $0xb0] sm:$0xf]
        %v938 = vld [vmem:[%s892 + $0xb4] sm:$0xf]
        %v939 = vld [vmem:[%s892 + $0xb8] sm:$0xf]
        %v940 = vld [vmem:[%s892 + $0xbc] sm:$0xf]
        %v1005 = vunpack.c.l.b16 %v828
        %v1006 = vunpack.c.h.b16 %v828
        %v1007 = vunpack.c.l.b16 %v829
        %v1008 = vunpack.c.l.b16 %v830
        %v1009 = vunpack.c.h.b16 %v830
        %v1010 = vunpack.c.l.b16 %v831
        %v1011 = vunpack.c.l.b16 %v832
        %v1012 = vunpack.c.h.b16 %v832
        %v1013 = vunpack.c.l.b16 %v833
        %v1014 = vunpack.c.l.b16 %v834
        %v1015 = vunpack.c.h.b16 %v834
        %v1016 = vunpack.c.l.b16 %v835
        %v1017 = vunpack.c.l.b16 %v836
        %v1018 = vunpack.c.h.b16 %v836
        %v1019 = vunpack.c.l.b16 %v837
        %v1020 = vunpack.c.l.b16 %v838
        %v1021 = vunpack.c.h.b16 %v838
        %v1022 = vunpack.c.l.b16 %v839
        %v1023 = vunpack.c.l.b16 %v840
        %v1024 = vunpack.c.h.b16 %v840
        %v1025 = vunpack.c.l.b16 %v841
        %v1026 = vunpack.c.l.b16 %v842
        %v1027 = vunpack.c.h.b16 %v842
        %v1028 = vunpack.c.l.b16 %v843
        %v1029 = vunpack.c.l.b16 %v844
        %v1030 = vunpack.c.h.b16 %v844
        %v1031 = vunpack.c.l.b16 %v845
        %v1032 = vunpack.c.l.b16 %v846
        %v1033 = vunpack.c.h.b16 %v846
        %v1034 = vunpack.c.l.b16 %v847
        %v1035 = vunpack.c.l.b16 %v848
        %v1036 = vunpack.c.h.b16 %v848
        %v1037 = vunpack.c.l.b16 %v849
        %v1038 = vunpack.c.l.b16 %v850
        %v1039 = vunpack.c.h.b16 %v850
        %v1040 = vunpack.c.l.b16 %v851
        %v1041 = vunpack.c.l.b16 %v852
        %v1042 = vunpack.c.h.b16 %v852
        %v1043 = vunpack.c.l.b16 %v853
        %v1044 = vunpack.c.l.b16 %v854
        %v1045 = vunpack.c.h.b16 %v854
        %v1046 = vunpack.c.l.b16 %v855
        %v1047 = vunpack.c.l.b16 %v856
        %v1048 = vunpack.c.h.b16 %v856
        %v1049 = vunpack.c.l.b16 %v857
        %v1050 = vunpack.c.l.b16 %v858
        %v1051 = vunpack.c.h.b16 %v858
        %v1052 = vunpack.c.l.b16 %v859
        %v1053 = vunpack.c.l.b16 %v860
        %v1054 = vunpack.c.h.b16 %v860
        %v1055 = vunpack.c.l.b16 %v861
        %v1056 = vunpack.c.l.b16 %v862
        %v1057 = vunpack.c.h.b16 %v862
        %v1058 = vunpack.c.l.b16 %v863
        %v1059 = vunpack.c.l.b16 %v864
        %v1060 = vunpack.c.h.b16 %v864
        %v1061 = vunpack.c.l.b16 %v865
        %v1062 = vunpack.c.l.b16 %v866
        %v1063 = vunpack.c.h.b16 %v866
        %v1064 = vunpack.c.l.b16 %v867
        %v1065 = vunpack.c.l.b16 %v868
        %v1066 = vunpack.c.h.b16 %v868
        %v1067 = vunpack.c.l.b16 %v869
        %v1068 = vunpack.c.l.b16 %v870
        %v1069 = vunpack.c.h.b16 %v870
        %v1070 = vunpack.c.l.b16 %v871
        %v1071 = vunpack.c.l.b16 %v872
        %v1072 = vunpack.c.h.b16 %v872
        %v1073 = vunpack.c.l.b16 %v873
        %v1074 = vunpack.c.l.b16 %v874
        %v1075 = vunpack.c.h.b16 %v874
        %v1076 = vunpack.c.l.b16 %v875
        %v1077 = vunpack.c.l.b16 %v876
        %v1078 = vunpack.c.h.b16 %v876
        %v1079 = vunpack.c.l.b16 %v877
        %v1080 = vunpack.c.l.b16 %v878
        %v1081 = vunpack.c.h.b16 %v878
        %v1082 = vunpack.c.l.b16 %v879
        %v1083 = vunpack.c.l.b16 %v880
        %v1084 = vunpack.c.h.b16 %v880
        %v1085 = vunpack.c.l.b16 %v881
        %v1086 = vunpack.c.l.b16 %v882
        %v1087 = vunpack.c.h.b16 %v882
        %v1088 = vunpack.c.l.b16 %v883
        %v1089 = vunpack.c.l.b16 %v884
        %v1090 = vunpack.c.h.b16 %v884
        %v1091 = vunpack.c.l.b16 %v885
        %v1092 = vunpack.c.l.b16 %v886
        %v1093 = vunpack.c.h.b16 %v886
        %v1094 = vunpack.c.l.b16 %v887
        %v1095 = vunpack.c.l.b16 %v888
        %v1096 = vunpack.c.h.b16 %v888
        %v1097 = vunpack.c.l.b16 %v889
        %v1098 = vunpack.c.l.b16 %v890
        %v1099 = vunpack.c.h.b16 %v890
        %v1100 = vunpack.c.l.b16 %v891
        %v1101 = vpack.c.b16 %v1008, %v1005
        %v1102 = vpack.c.b16 %v1009, %v1006
        %v1103 = vpack.c.b16 %v1010, %v1007
        %v1104 = vpack.c.b16 %v1014, %v1011
        %v1105 = vpack.c.b16 %v1015, %v1012
        %v1106 = vpack.c.b16 %v1016, %v1013
        %v1107 = vpack.c.b16 %v1020, %v1017
        %v1108 = vpack.c.b16 %v1021, %v1018
        %v1109 = vpack.c.b16 %v1022, %v1019
        %v1110 = vpack.c.b16 %v1026, %v1023
        %v1111 = vpack.c.b16 %v1027, %v1024
        %v1112 = vpack.c.b16 %v1028, %v1025
        %v1113 = vpack.c.b16 %v1032, %v1029
        %v1114 = vpack.c.b16 %v1033, %v1030
        %v1115 = vpack.c.b16 %v1034, %v1031
        %v1116 = vpack.c.b16 %v1038, %v1035
        %v1117 = vpack.c.b16 %v1039, %v1036
        %v1118 = vpack.c.b16 %v1040, %v1037
        %v1119 = vpack.c.b16 %v1044, %v1041
        %v1120 = vpack.c.b16 %v1045, %v1042
        %v1121 = vpack.c.b16 %v1046, %v1043
        %v1122 = vpack.c.b16 %v1050, %v1047
        %v1123 = vpack.c.b16 %v1051, %v1048
        %v1124 = vpack.c.b16 %v1052, %v1049
        %v1125 = vpack.c.b16 %v1056, %v1053
        %v1126 = vpack.c.b16 %v1057, %v1054
        %v1127 = vpack.c.b16 %v1058, %v1055
        %v1128 = vpack.c.b16 %v1062, %v1059
        %v1129 = vpack.c.b16 %v1063, %v1060
        %v1130 = vpack.c.b16 %v1064, %v1061
        %v1131 = vpack.c.b16 %v1068, %v1065
        %v1132 = vpack.c.b16 %v1069, %v1066
        %v1133 = vpack.c.b16 %v1070, %v1067
        %v1134 = vpack.c.b16 %v1074, %v1071
        %v1135 = vpack.c.b16 %v1075, %v1072
        %v1136 = vpack.c.b16 %v1076, %v1073
        %v1137 = vpack.c.b16 %v1080, %v1077
        %v1138 = vpack.c.b16 %v1081, %v1078
        %v1139 = vpack.c.b16 %v1082, %v1079
        %v1140 = vpack.c.b16 %v1086, %v1083
        %v1141 = vpack.c.b16 %v1087, %v1084
        %v1142 = vpack.c.b16 %v1088, %v1085
        %v1143 = vpack.c.b16 %v1092, %v1089
        %v1144 = vpack.c.b16 %v1093, %v1090
        %v1145 = vpack.c.b16 %v1094, %v1091
        %v1146 = vpack.c.b16 %v1098, %v1095
        %v1147 = vpack.c.b16 %v1099, %v1096
        %v1148 = vpack.c.b16 %v1100, %v1097
        %v1245 = vunpack.c.l.b16 %v893
        %v1246 = vunpack.c.l.b16 %v894
        %v1247 = vunpack.c.l.b16 %v895
        %v1248 = vunpack.c.l.b16 %v896
        %v1249 = vunpack.c.l.b16 %v897
        %v1250 = vunpack.c.l.b16 %v898
        %v1251 = vunpack.c.l.b16 %v899
        %v1252 = vunpack.c.l.b16 %v900
        %v1253 = vunpack.c.l.b16 %v901
        %v1254 = vunpack.c.l.b16 %v902
        %v1255 = vunpack.c.l.b16 %v903
        %v1256 = vunpack.c.l.b16 %v904
        %v1257 = vunpack.c.l.b16 %v905
        %v1258 = vunpack.c.l.b16 %v906
        %v1259 = vunpack.c.l.b16 %v907
        %v1260 = vunpack.c.l.b16 %v908
        %v1261 = vunpack.c.l.b16 %v909
        %v1262 = vunpack.c.l.b16 %v910
        %v1263 = vunpack.c.l.b16 %v911
        %v1264 = vunpack.c.l.b16 %v912
        %v1265 = vunpack.c.l.b16 %v913
        %v1266 = vunpack.c.l.b16 %v914
        %v1267 = vunpack.c.l.b16 %v915
        %v1268 = vunpack.c.l.b16 %v916
        %v1269 = vunpack.c.l.b16 %v917
        %v1270 = vunpack.c.l.b16 %v918
        %v1271 = vunpack.c.l.b16 %v919
        %v1272 = vunpack.c.l.b16 %v920
        %v1273 = vunpack.c.l.b16 %v921
        %v1274 = vunpack.c.l.b16 %v922
        %v1275 = vunpack.c.l.b16 %v923
        %v1276 = vunpack.c.l.b16 %v924
        %v1277 = vunpack.c.l.b16 %v925
        %v1278 = vunpack.c.l.b16 %v926
        %v1279 = vunpack.c.l.b16 %v927
        %v1280 = vunpack.c.l.b16 %v928
        %v1281 = vunpack.c.l.b16 %v929
        %v1282 = vunpack.c.l.b16 %v930
        %v1283 = vunpack.c.l.b16 %v931
        %v1284 = vunpack.c.l.b16 %v932
        %v1285 = vunpack.c.l.b16 %v933
        %v1286 = vunpack.c.l.b16 %v934
        %v1287 = vunpack.c.l.b16 %v935
        %v1288 = vunpack.c.l.b16 %v936
        %v1289 = vunpack.c.l.b16 %v937
        %v1290 = vunpack.c.l.b16 %v938
        %v1291 = vunpack.c.l.b16 %v939
        %v1292 = vunpack.c.l.b16 %v940
        %v1293 = vpack.c.b16 %v1246, %v1245
        %v1294 = vpack.c.b16 %v1248, %v1247
        %v1295 = vpack.c.b16 %v1250, %v1249
        %v1296 = vpack.c.b16 %v1252, %v1251
        %v1297 = vpack.c.b16 %v1254, %v1253
        %v1298 = vpack.c.b16 %v1256, %v1255
        %v1299 = vpack.c.b16 %v1258, %v1257
        %v1300 = vpack.c.b16 %v1260, %v1259
        %v1301 = vpack.c.b16 %v1262, %v1261
        %v1302 = vpack.c.b16 %v1264, %v1263
        %v1303 = vpack.c.b16 %v1266, %v1265
        %v1304 = vpack.c.b16 %v1268, %v1267
        %v1305 = vpack.c.b16 %v1270, %v1269
        %v1306 = vpack.c.b16 %v1272, %v1271
        %v1307 = vpack.c.b16 %v1274, %v1273
        %v1308 = vpack.c.b16 %v1276, %v1275
        %v1309 = vpack.c.b16 %v1278, %v1277
        %v1310 = vpack.c.b16 %v1280, %v1279
        %v1311 = vpack.c.b16 %v1282, %v1281
        %v1312 = vpack.c.b16 %v1284, %v1283
        %v1313 = vpack.c.b16 %v1286, %v1285
        %v1314 = vpack.c.b16 %v1288, %v1287
        %v1315 = vpack.c.b16 %v1290, %v1289
        %v1316 = vpack.c.b16 %v1292, %v1291
        %1341 = vmatpush.bf16.msra.mxu0 %v1300
        %1342 = vmatpush.bf16.msra.mxu0 %v1299
        %1343 = vmatpush.bf16.msra.mxu0 %v1298
        %1344 = vmatpush.bf16.msra.mxu0 %v1297
        %1345 = vmatpush.bf16.msra.mxu0 %v1296
        %1346 = vmatpush.bf16.msra.mxu0 %v1295
        %1347 = vmatpush.bf16.msra.mxu0 %v1294
        %1348 = vmatpush.bf16.msra.mxu0 %v1293
        %1349 = vmatmul.bf16.gmra.mxu0 %v1101
        %v1350 = vpop.f32.mrf.mxu0
        %v1351 = vadd.f32 0.0, %v1350
        %v1352 = vpop.f32.mrf.mxu0
        %v1353 = vadd.f32 0.0, %v1352
        %1354 = vmatmul.bf16.gmra.mxu0 %v1104
        %v1355 = vpop.f32.mrf.mxu0
        %v1356 = vadd.f32 0.0, %v1355
        %v1357 = vpop.f32.mrf.mxu0
        %v1358 = vadd.f32 0.0, %v1357
        %1359 = vmatmul.bf16.gmra.mxu0 %v1107
        %v1360 = vpop.f32.mrf.mxu0
        %v1361 = vadd.f32 0.0, %v1360
        %v1362 = vpop.f32.mrf.mxu0
        %v1363 = vadd.f32 0.0, %v1362
        %1364 = vmatmul.bf16.gmra.mxu0 %v1110
        %v1365 = vpop.f32.mrf.mxu0
        %v1366 = vadd.f32 0.0, %v1365
        %v1367 = vpop.f32.mrf.mxu0
        %v1368 = vadd.f32 0.0, %v1367
        %1369 = vmatmul.bf16.gmra.mxu0 %v1113
        %v1370 = vpop.f32.mrf.mxu0
        %v1371 = vadd.f32 0.0, %v1370
        %v1372 = vpop.f32.mrf.mxu0
        %v1373 = vadd.f32 0.0, %v1372
        %1374 = vmatmul.bf16.gmra.mxu0 %v1116
        %v1375 = vpop.f32.mrf.mxu0
        %v1376 = vadd.f32 0.0, %v1375
        %v1377 = vpop.f32.mrf.mxu0
        %v1378 = vadd.f32 0.0, %v1377
        %1379 = vmatmul.bf16.gmra.mxu0 %v1119
        %v1380 = vpop.f32.mrf.mxu0
        %v1381 = vadd.f32 0.0, %v1380
        %v1382 = vpop.f32.mrf.mxu0
        %v1383 = vadd.f32 0.0, %v1382
        %1384 = vmatmul.bf16.gmra.mxu0 %v1122
        %v1385 = vpop.f32.mrf.mxu0
        %v1386 = vadd.f32 0.0, %v1385
        %v1387 = vpop.f32.mrf.mxu0
        %v1388 = vadd.f32 0.0, %v1387
        %1389 = vmatmul.bf16.gmra.mxu0 %v1125
        %v1390 = vpop.f32.mrf.mxu0
        %v1391 = vadd.f32 0.0, %v1390
        %v1392 = vpop.f32.mrf.mxu0
        %v1393 = vadd.f32 0.0, %v1392
        %1394 = vmatmul.bf16.gmra.mxu0 %v1128
        %v1395 = vpop.f32.mrf.mxu0
        %v1396 = vadd.f32 0.0, %v1395
        %v1397 = vpop.f32.mrf.mxu0
        %v1398 = vadd.f32 0.0, %v1397
        %1399 = vmatmul.bf16.gmra.mxu0 %v1131
        %v1400 = vpop.f32.mrf.mxu0
        %v1401 = vadd.f32 0.0, %v1400
        %v1402 = vpop.f32.mrf.mxu0
        %v1403 = vadd.f32 0.0, %v1402
        %1404 = vmatmul.bf16.gmra.mxu0 %v1134
        %v1405 = vpop.f32.mrf.mxu0
        %v1406 = vadd.f32 0.0, %v1405
        %v1407 = vpop.f32.mrf.mxu0
        %v1408 = vadd.f32 0.0, %v1407
        %1409 = vmatmul.bf16.gmra.mxu0 %v1137
        %v1410 = vpop.f32.mrf.mxu0
        %v1411 = vadd.f32 0.0, %v1410
        %v1412 = vpop.f32.mrf.mxu0
        %v1413 = vadd.f32 0.0, %v1412
        %1414 = vmatmul.bf16.gmra.mxu0 %v1140
        %v1415 = vpop.f32.mrf.mxu0
        %v1416 = vadd.f32 0.0, %v1415
        %v1417 = vpop.f32.mrf.mxu0
        %v1418 = vadd.f32 0.0, %v1417
        %1419 = vmatmul.bf16.gmra.mxu0 %v1143
        %v1420 = vpop.f32.mrf.mxu0
        %v1421 = vadd.f32 0.0, %v1420
        %v1422 = vpop.f32.mrf.mxu0
        %v1423 = vadd.f32 0.0, %v1422
        %1424 = vmatmul.bf16.gmra.mxu0 %v1146
        %v1425 = vpop.f32.mrf.mxu0
        %v1426 = vadd.f32 0.0, %v1425
        %v1427 = vpop.f32.mrf.mxu0
        %v1428 = vadd.f32 0.0, %v1427
        %1429 = vdwg.mxu0
        %1430 = vmatpush.bf16.msra.mxu0 %v1308
        %1431 = vmatpush.bf16.msra.mxu0 %v1307
        %1432 = vmatpush.bf16.msra.mxu0 %v1306
        %1433 = vmatpush.bf16.msra.mxu0 %v1305
        %1434 = vmatpush.bf16.msra.mxu0 %v1304
        %1435 = vmatpush.bf16.msra.mxu0 %v1303
        %1436 = vmatpush.bf16.msra.mxu0 %v1302
        %1437 = vmatpush.bf16.msra.mxu0 %v1301
        %1438 = vmatmul.bf16.gmra.mxu0 %v1102
        %v1439 = vpop.f32.mrf.mxu0
        %v1440 = vadd.f32 %v1351, %v1439
        %v1441 = vpop.f32.mrf.mxu0
        %v1442 = vadd.f32 %v1353, %v1441
        %1443 = vmatmul.bf16.gmra.mxu0 %v1105
        %v1444 = vpop.f32.mrf.mxu0
        %v1445 = vadd.f32 %v1356, %v1444
        %v1446 = vpop.f32.mrf.mxu0
        %v1447 = vadd.f32 %v1358, %v1446
        %1448 = vmatmul.bf16.gmra.mxu0 %v1108
        %v1449 = vpop.f32.mrf.mxu0
        %v1450 = vadd.f32 %v1361, %v1449
        %v1451 = vpop.f32.mrf.mxu0
        %v1452 = vadd.f32 %v1363, %v1451
        %1453 = vmatmul.bf16.gmra.mxu0 %v1111
        %v1454 = vpop.f32.mrf.mxu0
        %v1455 = vadd.f32 %v1366, %v1454
        %v1456 = vpop.f32.mrf.mxu0
        %v1457 = vadd.f32 %v1368, %v1456
        %1458 = vmatmul.bf16.gmra.mxu0 %v1114
        %v1459 = vpop.f32.mrf.mxu0
        %v1460 = vadd.f32 %v1371, %v1459
        %v1461 = vpop.f32.mrf.mxu0
        %v1462 = vadd.f32 %v1373, %v1461
        %1463 = vmatmul.bf16.gmra.mxu0 %v1117
        %v1464 = vpop.f32.mrf.mxu0
        %v1465 = vadd.f32 %v1376, %v1464
        %v1466 = vpop.f32.mrf.mxu0
        %v1467 = vadd.f32 %v1378, %v1466
        %1468 = vmatmul.bf16.gmra.mxu0 %v1120
        %v1469 = vpop.f32.mrf.mxu0
        %v1470 = vadd.f32 %v1381, %v1469
        %v1471 = vpop.f32.mrf.mxu0
        %v1472 = vadd.f32 %v1383, %v1471
        %1473 = vmatmul.bf16.gmra.mxu0 %v1123
        %v1474 = vpop.f32.mrf.mxu0
        %v1475 = vadd.f32 %v1386, %v1474
        %v1476 = vpop.f32.mrf.mxu0
        %v1477 = vadd.f32 %v1388, %v1476
        %1478 = vmatmul.bf16.gmra.mxu0 %v1126
        %v1479 = vpop.f32.mrf.mxu0
        %v1480 = vadd.f32 %v1391, %v1479
        %v1481 = vpop.f32.mrf.mxu0
        %v1482 = vadd.f32 %v1393, %v1481
        %1483 = vmatmul.bf16.gmra.mxu0 %v1129
        %v1484 = vpop.f32.mrf.mxu0
        %v1485 = vadd.f32 %v1396, %v1484
        %v1486 = vpop.f32.mrf.mxu0
        %v1487 = vadd.f32 %v1398, %v1486
        %1488 = vmatmul.bf16.gmra.mxu0 %v1132
        %v1489 = vpop.f32.mrf.mxu0
        %v1490 = vadd.f32 %v1401, %v1489
        %v1491 = vpop.f32.mrf.mxu0
        %v1492 = vadd.f32 %v1403, %v1491
        %1493 = vmatmul.bf16.gmra.mxu0 %v1135
        %v1494 = vpop.f32.mrf.mxu0
        %v1495 = vadd.f32 %v1406, %v1494
        %v1496 = vpop.f32.mrf.mxu0
        %v1497 = vadd.f32 %v1408, %v1496
        %1498 = vmatmul.bf16.gmra.mxu0 %v1138
        %v1499 = vpop.f32.mrf.mxu0
        %v1500 = vadd.f32 %v1411, %v1499
        %v1501 = vpop.f32.mrf.mxu0
        %v1502 = vadd.f32 %v1413, %v1501
        %1503 = vmatmul.bf16.gmra.mxu0 %v1141
        %v1504 = vpop.f32.mrf.mxu0
        %v1505 = vadd.f32 %v1416, %v1504
        %v1506 = vpop.f32.mrf.mxu0
        %v1507 = vadd.f32 %v1418, %v1506
        %1508 = vmatmul.bf16.gmra.mxu0 %v1144
        %v1509 = vpop.f32.mrf.mxu0
        %v1510 = vadd.f32 %v1421, %v1509
        %v1511 = vpop.f32.mrf.mxu0
        %v1512 = vadd.f32 %v1423, %v1511
        %1513 = vmatmul.bf16.gmra.mxu0 %v1147
        %v1514 = vpop.f32.mrf.mxu0
        %v1515 = vadd.f32 %v1426, %v1514
        %v1516 = vpop.f32.mrf.mxu0
        %v1517 = vadd.f32 %v1428, %v1516
        %1518 = vdwg.mxu0
        %1519 = vmatpush.bf16.msra.mxu0 %v1316
        %1520 = vmatpush.bf16.msra.mxu0 %v1315
        %1521 = vmatpush.bf16.msra.mxu0 %v1314
        %1522 = vmatpush.bf16.msra.mxu0 %v1313
        %1523 = vmatpush.bf16.msra.mxu0 %v1312
        %1524 = vmatpush.bf16.msra.mxu0 %v1311
        %1525 = vmatpush.bf16.msra.mxu0 %v1310
        %1526 = vmatpush.bf16.msra.mxu0 %v1309
        %1527 = vmatmul.bf16.gmra.mxu0 %v1103
        %v1528 = vpop.f32.mrf.mxu0
        %v1529 = vadd.f32 %v1440, %v1528
        %v1530 = vpop.f32.mrf.mxu0
        %v1531 = vadd.f32 %v1442, %v1530
        %1532 = vmatmul.bf16.gmra.mxu0 %v1106
        %v1533 = vpop.f32.mrf.mxu0
        %v1534 = vadd.f32 %v1445, %v1533
        %v1535 = vpop.f32.mrf.mxu0
        %v1536 = vadd.f32 %v1447, %v1535
        %1537 = vmatmul.bf16.gmra.mxu0 %v1109
        %v1538 = vpop.f32.mrf.mxu0
        %v1539 = vadd.f32 %v1450, %v1538
        %v1540 = vpop.f32.mrf.mxu0
        %v1541 = vadd.f32 %v1452, %v1540
        %1542 = vmatmul.bf16.gmra.mxu0 %v1112
        %v1543 = vpop.f32.mrf.mxu0
        %v1544 = vadd.f32 %v1455, %v1543
        %v1545 = vpop.f32.mrf.mxu0
        %v1546 = vadd.f32 %v1457, %v1545
        %1547 = vmatmul.bf16.gmra.mxu0 %v1115
        %v1548 = vpop.f32.mrf.mxu0
        %v1549 = vadd.f32 %v1460, %v1548
        %v1550 = vpop.f32.mrf.mxu0
        %v1551 = vadd.f32 %v1462, %v1550
        %1552 = vmatmul.bf16.gmra.mxu0 %v1118
        %v1553 = vpop.f32.mrf.mxu0
        %v1554 = vadd.f32 %v1465, %v1553
        %v1555 = vpop.f32.mrf.mxu0
        %v1556 = vadd.f32 %v1467, %v1555
        %1557 = vmatmul.bf16.gmra.mxu0 %v1121
        %v1558 = vpop.f32.mrf.mxu0
        %v1559 = vadd.f32 %v1470, %v1558
        %v1560 = vpop.f32.mrf.mxu0
        %v1561 = vadd.f32 %v1472, %v1560
        %1562 = vmatmul.bf16.gmra.mxu0 %v1124
        %v1563 = vpop.f32.mrf.mxu0
        %v1564 = vadd.f32 %v1475, %v1563
        %v1565 = vpop.f32.mrf.mxu0
        %v1566 = vadd.f32 %v1477, %v1565
        %1567 = vmatmul.bf16.gmra.mxu0 %v1127
        %v1568 = vpop.f32.mrf.mxu0
        %v1569 = vadd.f32 %v1480, %v1568
        %v1570 = vpop.f32.mrf.mxu0
        %v1571 = vadd.f32 %v1482, %v1570
        %1572 = vmatmul.bf16.gmra.mxu0 %v1130
        %v1573 = vpop.f32.mrf.mxu0
        %v1574 = vadd.f32 %v1485, %v1573
        %v1575 = vpop.f32.mrf.mxu0
        %v1576 = vadd.f32 %v1487, %v1575
        %1577 = vmatmul.bf16.gmra.mxu0 %v1133
        %v1578 = vpop.f32.mrf.mxu0
        %v1579 = vadd.f32 %v1490, %v1578
        %v1580 = vpop.f32.mrf.mxu0
        %v1581 = vadd.f32 %v1492, %v1580
        %1582 = vmatmul.bf16.gmra.mxu0 %v1136
        %v1583 = vpop.f32.mrf.mxu0
        %v1584 = vadd.f32 %v1495, %v1583
        %v1585 = vpop.f32.mrf.mxu0
        %v1586 = vadd.f32 %v1497, %v1585
        %1587 = vmatmul.bf16.gmra.mxu0 %v1139
        %v1588 = vpop.f32.mrf.mxu0
        %v1589 = vadd.f32 %v1500, %v1588
        %v1590 = vpop.f32.mrf.mxu0
        %v1591 = vadd.f32 %v1502, %v1590
        %1592 = vmatmul.bf16.gmra.mxu0 %v1142
        %v1593 = vpop.f32.mrf.mxu0
        %v1594 = vadd.f32 %v1505, %v1593
        %v1595 = vpop.f32.mrf.mxu0
        %v1596 = vadd.f32 %v1507, %v1595
        %1597 = vmatmul.bf16.gmra.mxu0 %v1145
        %v1598 = vpop.f32.mrf.mxu0
        %v1599 = vadd.f32 %v1510, %v1598
        %v1600 = vpop.f32.mrf.mxu0
        %v1601 = vadd.f32 %v1512, %v1600
        %1602 = vmatmul.bf16.gmra.mxu0 %v1148
        %v1603 = vpop.f32.mrf.mxu0
        %v1604 = vadd.f32 %v1515, %v1603
        %v1605 = vpop.f32.mrf.mxu0
        %v1606 = vadd.f32 %v1517, %v1605
        %1607 = vdwg.mxu0
        %v1608 = vadd.f32 %v796, %v1529
        %v1609 = vadd.f32 %v797, %v1531
        %v1610 = vadd.f32 %v798, %v1534
        %v1611 = vadd.f32 %v799, %v1536
        %v1612 = vadd.f32 %v800, %v1539
        %v1613 = vadd.f32 %v801, %v1541
        %v1614 = vadd.f32 %v802, %v1544
        %v1615 = vadd.f32 %v803, %v1546
        %v1616 = vadd.f32 %v804, %v1549
        %v1617 = vadd.f32 %v805, %v1551
        %v1618 = vadd.f32 %v806, %v1554
        %v1619 = vadd.f32 %v807, %v1556
        %v1620 = vadd.f32 %v808, %v1559
        %v1621 = vadd.f32 %v809, %v1561
        %v1622 = vadd.f32 %v810, %v1564
        %v1623 = vadd.f32 %v811, %v1566
        %v1624 = vadd.f32 %v812, %v1569
        %v1625 = vadd.f32 %v813, %v1571
        %v1626 = vadd.f32 %v814, %v1574
        %v1627 = vadd.f32 %v815, %v1576
        %v1628 = vadd.f32 %v816, %v1579
        %v1629 = vadd.f32 %v817, %v1581
        %v1630 = vadd.f32 %v818, %v1584
        %v1631 = vadd.f32 %v819, %v1586
        %v1632 = vadd.f32 %v820, %v1589
        %v1633 = vadd.f32 %v821, %v1591
        %v1634 = vadd.f32 %v822, %v1594
        %v1635 = vadd.f32 %v823, %v1596
        %v1636 = vadd.f32 %v824, %v1599
        %v1637 = vadd.f32 %v825, %v1601
        %v1638 = vadd.f32 %v826, %v1604
        %v1639 = vadd.f32 %v827, %v1606
        %1640 = vst [vmem:[#allocation3] sm:$0xff] %v1608
        %1641 = vst [vmem:[#allocation3 + $0x8] sm:$0xff] %v1609
        %1642 = vst [vmem:[#allocation3 + $0x10] sm:$0xff] %v1610
        %1643 = vst [vmem:[#allocation3 + $0x18] sm:$0xff] %v1611
        %1644 = vst [vmem:[#allocation3 + $0x20] sm:$0xff] %v1612
        %1645 = vst [vmem:[#allocation3 + $0x28] sm:$0xff] %v1613
        %1646 = vst [vmem:[#allocation3 + $0x30] sm:$0xff] %v1614
        %1647 = vst [vmem:[#allocation3 + $0x38] sm:$0xff] %v1615
        %1648 = vst [vmem:[#allocation3 + $0x40] sm:$0xff] %v1616
        %1649 = vst [vmem:[#allocation3 + $0x48] sm:$0xff] %v1617
        %1650 = vst [vmem:[#allocation3 + $0x50] sm:$0xff] %v1618
        %1651 = vst [vmem:[#allocation3 + $0x58] sm:$0xff] %v1619
        %1652 = vst [vmem:[#allocation3 + $0x60] sm:$0xff] %v1620
        %1653 = vst [vmem:[#allocation3 + $0x68] sm:$0xff] %v1621
        %1654 = vst [vmem:[#allocation3 + $0x70] sm:$0xff] %v1622
        %1655 = vst [vmem:[#allocation3 + $0x78] sm:$0xff] %v1623
        %1656 = vst [vmem:[#allocation3 + $0x80] sm:$0xff] %v1624
        %1657 = vst [vmem:[#allocation3 + $0x88] sm:$0xff] %v1625
        %1658 = vst [vmem:[#allocation3 + $0x90] sm:$0xff] %v1626
        %1659 = vst [vmem:[#allocation3 + $0x98] sm:$0xff] %v1627
        %1660 = vst [vmem:[#allocation3 + $0xa0] sm:$0xff] %v1628
        %1661 = vst [vmem:[#allocation3 + $0xa8] sm:$0xff] %v1629
        %1662 = vst [vmem:[#allocation3 + $0xb0] sm:$0xff] %v1630
        %1663 = vst [vmem:[#allocation3 + $0xb8] sm:$0xff] %v1631
        %1664 = vst [vmem:[#allocation3 + $0xc0] sm:$0xff] %v1632
        %1665 = vst [vmem:[#allocation3 + $0xc8] sm:$0xff] %v1633
        %1666 = vst [vmem:[#allocation3 + $0xd0] sm:$0xff] %v1634
        %1667 = vst [vmem:[#allocation3 + $0xd8] sm:$0xff] %v1635
        %1668 = vst [vmem:[#allocation3 + $0xe0] sm:$0xff] %v1636
        %1669 = vst [vmem:[#allocation3 + $0xe8] sm:$0xff] %v1637
        %1670 = vst [vmem:[#allocation3 + $0xf0] sm:$0xff] %v1638
        %1671 = vst [vmem:[#allocation3 + $0xf8] sm:$0xff] %v1639
        %v1672 = vld [vmem:[#allocation3 + $0x10] sm:$0xff]
        %v1673 = vld [vmem:[#allocation3 + $0x18] sm:$0xff]
        %v1674 = vld [vmem:[#allocation3 + $0x20] sm:$0xff]
        %v1675 = vld [vmem:[#allocation3 + $0x28] sm:$0xff]
        %v1676 = vld [vmem:[#allocation3 + $0x30] sm:$0xff]
        %v1677 = vld [vmem:[#allocation3 + $0x38] sm:$0xff]
        %v1678 = vld [vmem:[#allocation3 + $0x40] sm:$0xff]
        %v1679 = vld [vmem:[#allocation3 + $0x48] sm:$0xff]
        %v1680 = vld [vmem:[#allocation3 + $0x50] sm:$0xff]
        %v1681 = vld [vmem:[#allocation3 + $0x58] sm:$0xff]
        %v1682 = vld [vmem:[#allocation3 + $0x60] sm:$0xff]
        %v1683 = vld [vmem:[#allocation3 + $0x68] sm:$0xff]
        %v1684 = vld [vmem:[#allocation3 + $0x70] sm:$0xff]
        %v1685 = vld [vmem:[#allocation3 + $0x78] sm:$0xff]
        %v1686 = vld [vmem:[#allocation3 + $0x80] sm:$0xff]
        %v1687 = vld [vmem:[#allocation3 + $0x88] sm:$0xff]
        %v1688 = vld [vmem:[#allocation3 + $0x90] sm:$0xff]
        %v1689 = vld [vmem:[#allocation3 + $0x98] sm:$0xff]
        %v1690 = vld [vmem:[#allocation3 + $0xa0] sm:$0xff]
        %v1691 = vld [vmem:[#allocation3 + $0xa8] sm:$0xff]
        %v1692 = vld [vmem:[#allocation3 + $0xb0] sm:$0xff]
        %v1693 = vld [vmem:[#allocation3 + $0xb8] sm:$0xff]
        %v1694 = vld [vmem:[#allocation3 + $0xc0] sm:$0xff]
        %v1695 = vld [vmem:[#allocation3 + $0xc8] sm:$0xff]
        %v1696 = vld [vmem:[#allocation3 + $0xd0] sm:$0xff]
        %v1697 = vld [vmem:[#allocation3 + $0xd8] sm:$0xff]
        %v1698 = vld [vmem:[#allocation3 + $0xe0] sm:$0xff]
        %v1699 = vld [vmem:[#allocation3 + $0xe8] sm:$0xff]
        %v1700 = vld [vmem:[#allocation3 + $0xf0] sm:$0xff]
        %v1701 = vld [vmem:[#allocation3 + $0xf8] sm:$0xff]
        %v1702 = vld [vmem:[#allocation2] sm:$0xff]
        %v1703 = vld [vmem:[#allocation2 + $0x8] sm:$0xf]
        %v1704 = vld [vmem:[#allocation2 + $0xc] sm:$0xff]
        %v1705 = vld [vmem:[#allocation2 + $0x14] sm:$0xf]
        %v1706 = vld [vmem:[#allocation2 + $0x18] sm:$0xff]
        %v1707 = vld [vmem:[#allocation2 + $0x20] sm:$0xf]
        %v1708 = vld [vmem:[#allocation2 + $0x24] sm:$0xff]
        %v1709 = vld [vmem:[#allocation2 + $0x2c] sm:$0xf]
        %v1710 = vld [vmem:[#allocation2 + $0x30] sm:$0xff]
        %v1711 = vld [vmem:[#allocation2 + $0x38] sm:$0xf]
        %v1712 = vld [vmem:[#allocation2 + $0x3c] sm:$0xff]
        %v1713 = vld [vmem:[#allocation2 + $0x44] sm:$0xf]
        %v1714 = vld [vmem:[#allocation2 + $0x48] sm:$0xff]
        %v1715 = vld [vmem:[#allocation2 + $0x50] sm:$0xf]
        %v1716 = vld [vmem:[#allocation2 + $0x54] sm:$0xff]
        %v1717 = vld [vmem:[#allocation2 + $0x5c] sm:$0xf]
        %v1718 = vld [vmem:[#allocation2 + $0x60] sm:$0xff]
        %v1719 = vld [vmem:[#allocation2 + $0x68] sm:$0xf]
        %v1720 = vld [vmem:[#allocation2 + $0x6c] sm:$0xff]
        %v1721 = vld [vmem:[#allocation2 + $0x74] sm:$0xf]
        %v1722 = vld [vmem:[#allocation2 + $0x78] sm:$0xff]
        %v1723 = vld [vmem:[#allocation2 + $0x80] sm:$0xf]
        %v1724 = vld [vmem:[#allocation2 + $0x84] sm:$0xff]
        %v1725 = vld [vmem:[#allocation2 + $0x8c] sm:$0xf]
        %v1726 = vld [vmem:[#allocation2 + $0x90] sm:$0xff]
        %v1727 = vld [vmem:[#allocation2 + $0x98] sm:$0xf]
        %v1728 = vld [vmem:[#allocation2 + $0x9c] sm:$0xff]
        %v1729 = vld [vmem:[#allocation2 + $0xa4] sm:$0xf]
        %v1730 = vld [vmem:[#allocation2 + $0xa8] sm:$0xff]
        %v1731 = vld [vmem:[#allocation2 + $0xb0] sm:$0xf]
        %v1732 = vld [vmem:[#allocation2 + $0xb4] sm:$0xff]
        %v1733 = vld [vmem:[#allocation2 + $0xbc] sm:$0xf]
        %v1734 = vld [vmem:[#allocation2 + $0xc0] sm:$0xff]
        %v1735 = vld [vmem:[#allocation2 + $0xc8] sm:$0xf]
        %v1736 = vld [vmem:[#allocation2 + $0xcc] sm:$0xff]
        %v1737 = vld [vmem:[#allocation2 + $0xd4] sm:$0xf]
        %v1738 = vld [vmem:[#allocation2 + $0xd8] sm:$0xff]
        %v1739 = vld [vmem:[#allocation2 + $0xe0] sm:$0xf]
        %v1740 = vld [vmem:[#allocation2 + $0xe4] sm:$0xff]
        %v1741 = vld [vmem:[#allocation2 + $0xec] sm:$0xf]
        %v1742 = vld [vmem:[#allocation2 + $0xf0] sm:$0xff]
        %v1743 = vld [vmem:[#allocation2 + $0xf8] sm:$0xf]
        %v1744 = vld [vmem:[#allocation2 + $0xfc] sm:$0xff]
        %v1745 = vld [vmem:[#allocation2 + $0x104] sm:$0xf]
        %v1746 = vld [vmem:[#allocation2 + $0x108] sm:$0xff]
        %v1747 = vld [vmem:[#allocation2 + $0x110] sm:$0xf]
        %v1748 = vld [vmem:[#allocation2 + $0x114] sm:$0xff]
        %v1749 = vld [vmem:[#allocation2 + $0x11c] sm:$0xf]
        %v1750 = vld [vmem:[#allocation2 + $0x120] sm:$0xff]
        %v1751 = vld [vmem:[#allocation2 + $0x128] sm:$0xf]
        %v1752 = vld [vmem:[#allocation2 + $0x12c] sm:$0xff]
        %v1753 = vld [vmem:[#allocation2 + $0x134] sm:$0xf]
        %v1754 = vld [vmem:[#allocation2 + $0x138] sm:$0xff]
        %v1755 = vld [vmem:[#allocation2 + $0x140] sm:$0xf]
        %v1756 = vld [vmem:[#allocation2 + $0x144] sm:$0xff]
        %v1757 = vld [vmem:[#allocation2 + $0x14c] sm:$0xf]
        %v1758 = vld [vmem:[#allocation2 + $0x150] sm:$0xff]
        %v1759 = vld [vmem:[#allocation2 + $0x158] sm:$0xf]
        %v1760 = vld [vmem:[#allocation2 + $0x15c] sm:$0xff]
        %v1761 = vld [vmem:[#allocation2 + $0x164] sm:$0xf]
        %v1762 = vld [vmem:[#allocation7] sm:$0xf]
        %v1763 = vld [vmem:[#allocation7 + $0x4] sm:$0xf]
        %v1764 = vld [vmem:[#allocation7 + $0x8] sm:$0xf]
        %v1765 = vld [vmem:[#allocation7 + $0xc] sm:$0xf]
        %v1766 = vld [vmem:[#allocation7 + $0x10] sm:$0xf]
        %v1767 = vld [vmem:[#allocation7 + $0x14] sm:$0xf]
        %v1768 = vld [vmem:[#allocation7 + $0x18] sm:$0xf]
        %v1769 = vld [vmem:[#allocation7 + $0x1c] sm:$0xf]
        %v1770 = vld [vmem:[#allocation7 + $0x20] sm:$0xf]
        %v1771 = vld [vmem:[#allocation7 + $0x24] sm:$0xf]
        %v1772 = vld [vmem:[#allocation7 + $0x28] sm:$0xf]
        %v1773 = vld [vmem:[#allocation7 + $0x2c] sm:$0xf]
        %v1774 = vld [vmem:[#allocation7 + $0x30] sm:$0xf]
        %v1775 = vld [vmem:[#allocation7 + $0x34] sm:$0xf]
        %v1776 = vld [vmem:[#allocation7 + $0x38] sm:$0xf]
        %v1777 = vld [vmem:[#allocation7 + $0x3c] sm:$0xf]
        %v1778 = vld [vmem:[#allocation7 + $0x40] sm:$0xf]
        %v1779 = vld [vmem:[#allocation7 + $0x44] sm:$0xf]
        %v1780 = vld [vmem:[#allocation7 + $0x48] sm:$0xf]
        %v1781 = vld [vmem:[#allocation7 + $0x4c] sm:$0xf]
        %v1782 = vld [vmem:[#allocation7 + $0x50] sm:$0xf]
        %v1783 = vld [vmem:[#allocation7 + $0x54] sm:$0xf]
        %v1784 = vld [vmem:[#allocation7 + $0x58] sm:$0xf]
        %v1785 = vld [vmem:[#allocation7 + $0x5c] sm:$0xf]
        %v1786 = vld [vmem:[#allocation7 + $0x60] sm:$0xf]
        %v1787 = vld [vmem:[#allocation7 + $0x64] sm:$0xf]
        %v1788 = vld [vmem:[#allocation7 + $0x68] sm:$0xf]
        %v1789 = vld [vmem:[#allocation7 + $0x6c] sm:$0xf]
        %v1790 = vld [vmem:[#allocation7 + $0x70] sm:$0xf]
        %v1791 = vld [vmem:[#allocation7 + $0x74] sm:$0xf]
        %v1792 = vld [vmem:[#allocation7 + $0x78] sm:$0xf]
        %v1793 = vld [vmem:[#allocation7 + $0x7c] sm:$0xf]
        %v1794 = vld [vmem:[#allocation7 + $0x80] sm:$0xf]
        %v1795 = vld [vmem:[#allocation7 + $0x84] sm:$0xf]
        %v1796 = vld [vmem:[#allocation7 + $0x88] sm:$0xf]
        %v1797 = vld [vmem:[#allocation7 + $0x8c] sm:$0xf]
        %v1798 = vld [vmem:[#allocation7 + $0x90] sm:$0xf]
        %v1799 = vld [vmem:[#allocation7 + $0x94] sm:$0xf]
        %v1800 = vld [vmem:[#allocation7 + $0x98] sm:$0xf]
        %v1801 = vld [vmem:[#allocation7 + $0x9c] sm:$0xf]
        %v1802 = vld [vmem:[#allocation7 + $0xa0] sm:$0xf]
        %v1803 = vld [vmem:[#allocation7 + $0xa4] sm:$0xf]
        %v1804 = vld [vmem:[#allocation7 + $0xa8] sm:$0xf]
        %v1805 = vld [vmem:[#allocation7 + $0xac] sm:$0xf]
        %v1806 = vld [vmem:[#allocation7 + $0xb0] sm:$0xf]
        %v1807 = vld [vmem:[#allocation7 + $0xb4] sm:$0xf]
        %v1808 = vld [vmem:[#allocation7 + $0xb8] sm:$0xf]
        %v1809 = vld [vmem:[#allocation7 + $0xbc] sm:$0xf]
        %v1870 = vunpack.c.l.b16 %v1702
        %v1871 = vunpack.c.h.b16 %v1702
        %v1872 = vunpack.c.l.b16 %v1703
        %v1873 = vunpack.c.l.b16 %v1704
        %v1874 = vunpack.c.h.b16 %v1704
        %v1875 = vunpack.c.l.b16 %v1705
        %v1876 = vunpack.c.l.b16 %v1706
        %v1877 = vunpack.c.h.b16 %v1706
        %v1878 = vunpack.c.l.b16 %v1707
        %v1879 = vunpack.c.l.b16 %v1708
        %v1880 = vunpack.c.h.b16 %v1708
        %v1881 = vunpack.c.l.b16 %v1709
        %v1882 = vunpack.c.l.b16 %v1710
        %v1883 = vunpack.c.h.b16 %v1710
        %v1884 = vunpack.c.l.b16 %v1711
        %v1885 = vunpack.c.l.b16 %v1712
        %v1886 = vunpack.c.h.b16 %v1712
        %v1887 = vunpack.c.l.b16 %v1713
        %v1888 = vunpack.c.l.b16 %v1714
        %v1889 = vunpack.c.h.b16 %v1714
        %v1890 = vunpack.c.l.b16 %v1715
        %v1891 = vunpack.c.l.b16 %v1716
        %v1892 = vunpack.c.h.b16 %v1716
        %v1893 = vunpack.c.l.b16 %v1717
        %v1894 = vunpack.c.l.b16 %v1718
        %v1895 = vunpack.c.h.b16 %v1718
        %v1896 = vunpack.c.l.b16 %v1719
        %v1897 = vunpack.c.l.b16 %v1720
        %v1898 = vunpack.c.h.b16 %v1720
        %v1899 = vunpack.c.l.b16 %v1721
        %v1900 = vunpack.c.l.b16 %v1722
        %v1901 = vunpack.c.h.b16 %v1722
        %v1902 = vunpack.c.l.b16 %v1723
        %v1903 = vunpack.c.l.b16 %v1724
        %v1904 = vunpack.c.h.b16 %v1724
        %v1905 = vunpack.c.l.b16 %v1725
        %v1906 = vunpack.c.l.b16 %v1726
        %v1907 = vunpack.c.h.b16 %v1726
        %v1908 = vunpack.c.l.b16 %v1727
        %v1909 = vunpack.c.l.b16 %v1728
        %v1910 = vunpack.c.h.b16 %v1728
        %v1911 = vunpack.c.l.b16 %v1729
        %v1912 = vunpack.c.l.b16 %v1730
        %v1913 = vunpack.c.h.b16 %v1730
        %v1914 = vunpack.c.l.b16 %v1731
        %v1915 = vunpack.c.l.b16 %v1732
        %v1916 = vunpack.c.h.b16 %v1732
        %v1917 = vunpack.c.l.b16 %v1733
        %v1918 = vunpack.c.l.b16 %v1734
        %v1919 = vunpack.c.h.b16 %v1734
        %v1920 = vunpack.c.l.b16 %v1735
        %v1921 = vunpack.c.l.b16 %v1736
        %v1922 = vunpack.c.h.b16 %v1736
        %v1923 = vunpack.c.l.b16 %v1737
        %v1924 = vunpack.c.l.b16 %v1738
        %v1925 = vunpack.c.h.b16 %v1738
        %v1926 = vunpack.c.l.b16 %v1739
        %v1927 = vunpack.c.l.b16 %v1740
        %v1928 = vunpack.c.h.b16 %v1740
        %v1929 = vunpack.c.l.b16 %v1741
        %v1930 = vunpack.c.l.b16 %v1742
        %v1931 = vunpack.c.h.b16 %v1742
        %v1932 = vunpack.c.l.b16 %v1743
        %v1933 = vunpack.c.l.b16 %v1744
        %v1934 = vunpack.c.h.b16 %v1744
        %v1935 = vunpack.c.l.b16 %v1745
        %v1936 = vunpack.c.l.b16 %v1746
        %v1937 = vunpack.c.h.b16 %v1746
        %v1938 = vunpack.c.l.b16 %v1747
        %v1939 = vunpack.c.l.b16 %v1748
        %v1940 = vunpack.c.h.b16 %v1748
        %v1941 = vunpack.c.l.b16 %v1749
        %v1942 = vunpack.c.l.b16 %v1750
        %v1943 = vunpack.c.h.b16 %v1750
        %v1944 = vunpack.c.l.b16 %v1751
        %v1945 = vunpack.c.l.b16 %v1752
        %v1946 = vunpack.c.h.b16 %v1752
        %v1947 = vunpack.c.l.b16 %v1753
        %v1948 = vunpack.c.l.b16 %v1754
        %v1949 = vunpack.c.h.b16 %v1754
        %v1950 = vunpack.c.l.b16 %v1755
        %v1951 = vunpack.c.l.b16 %v1756
        %v1952 = vunpack.c.h.b16 %v1756
        %v1953 = vunpack.c.l.b16 %v1757
        %v1954 = vunpack.c.l.b16 %v1758
        %v1955 = vunpack.c.h.b16 %v1758
        %v1956 = vunpack.c.l.b16 %v1759
        %v1957 = vunpack.c.l.b16 %v1760
        %v1958 = vunpack.c.h.b16 %v1760
        %v1959 = vunpack.c.l.b16 %v1761
        %v1960 = vpack.c.b16 %v1873, %v1870
        %v1961 = vpack.c.b16 %v1874, %v1871
        %v1962 = vpack.c.b16 %v1875, %v1872
        %v1963 = vpack.c.b16 %v1879, %v1876
        %v1964 = vpack.c.b16 %v1880, %v1877
        %v1965 = vpack.c.b16 %v1881, %v1878
        %v1966 = vpack.c.b16 %v1885, %v1882
        %v1967 = vpack.c.b16 %v1886, %v1883
        %v1968 = vpack.c.b16 %v1887, %v1884
        %v1969 = vpack.c.b16 %v1891, %v1888
        %v1970 = vpack.c.b16 %v1892, %v1889
        %v1971 = vpack.c.b16 %v1893, %v1890
        %v1972 = vpack.c.b16 %v1897, %v1894
        %v1973 = vpack.c.b16 %v1898, %v1895
        %v1974 = vpack.c.b16 %v1899, %v1896
        %v1975 = vpack.c.b16 %v1903, %v1900
        %v1976 = vpack.c.b16 %v1904, %v1901
        %v1977 = vpack.c.b16 %v1905, %v1902
        %v1978 = vpack.c.b16 %v1909, %v1906
        %v1979 = vpack.c.b16 %v1910, %v1907
        %v1980 = vpack.c.b16 %v1911, %v1908
        %v1981 = vpack.c.b16 %v1915, %v1912
        %v1982 = vpack.c.b16 %v1916, %v1913
        %v1983 = vpack.c.b16 %v1917, %v1914
        %v1984 = vpack.c.b16 %v1921, %v1918
        %v1985 = vpack.c.b16 %v1922, %v1919
        %v1986 = vpack.c.b16 %v1923, %v1920
        %v1987 = vpack.c.b16 %v1927, %v1924
        %v1988 = vpack.c.b16 %v1928, %v1925
        %v1989 = vpack.c.b16 %v1929, %v1926
        %v1990 = vpack.c.b16 %v1933, %v1930
        %v1991 = vpack.c.b16 %v1934, %v1931
        %v1992 = vpack.c.b16 %v1935, %v1932
        %v1993 = vpack.c.b16 %v1939, %v1936
        %v1994 = vpack.c.b16 %v1940, %v1937
        %v1995 = vpack.c.b16 %v1941, %v1938
        %v1996 = vpack.c.b16 %v1945, %v1942
        %v1997 = vpack.c.b16 %v1946, %v1943
        %v1998 = vpack.c.b16 %v1947, %v1944
        %v1999 = vpack.c.b16 %v1951, %v1948
        %v2000 = vpack.c.b16 %v1952, %v1949
        %v2001 = vpack.c.b16 %v1953, %v1950
        %v2002 = vpack.c.b16 %v1957, %v1954
        %v2003 = vpack.c.b16 %v1958, %v1955
        %v2004 = vpack.c.b16 %v1959, %v1956
        %v2098 = vunpack.c.l.b16 %v1762
        %v2099 = vunpack.c.l.b16 %v1763
        %v2100 = vunpack.c.l.b16 %v1764
        %v2101 = vunpack.c.l.b16 %v1765
        %v2102 = vunpack.c.l.b16 %v1766
        %v2103 = vunpack.c.l.b16 %v1767
        %v2104 = vunpack.c.l.b16 %v1768
        %v2105 = vunpack.c.l.b16 %v1769
        %v2106 = vunpack.c.l.b16 %v1770
        %v2107 = vunpack.c.l.b16 %v1771
        %v2108 = vunpack.c.l.b16 %v1772
        %v2109 = vunpack.c.l.b16 %v1773
        %v2110 = vunpack.c.l.b16 %v1774
        %v2111 = vunpack.c.l.b16 %v1775
        %v2112 = vunpack.c.l.b16 %v1776
        %v2113 = vunpack.c.l.b16 %v1777
        %v2114 = vunpack.c.l.b16 %v1778
        %v2115 = vunpack.c.l.b16 %v1779
        %v2116 = vunpack.c.l.b16 %v1780
        %v2117 = vunpack.c.l.b16 %v1781
        %v2118 = vunpack.c.l.b16 %v1782
        %v2119 = vunpack.c.l.b16 %v1783
        %v2120 = vunpack.c.l.b16 %v1784
        %v2121 = vunpack.c.l.b16 %v1785
        %v2122 = vunpack.c.l.b16 %v1786
        %v2123 = vunpack.c.l.b16 %v1787
        %v2124 = vunpack.c.l.b16 %v1788
        %v2125 = vunpack.c.l.b16 %v1789
        %v2126 = vunpack.c.l.b16 %v1790
        %v2127 = vunpack.c.l.b16 %v1791
        %v2128 = vunpack.c.l.b16 %v1792
        %v2129 = vunpack.c.l.b16 %v1793
        %v2130 = vunpack.c.l.b16 %v1794
        %v2131 = vunpack.c.l.b16 %v1795
        %v2132 = vunpack.c.l.b16 %v1796
        %v2133 = vunpack.c.l.b16 %v1797
        %v2134 = vunpack.c.l.b16 %v1798
        %v2135 = vunpack.c.l.b16 %v1799
        %v2136 = vunpack.c.l.b16 %v1800
        %v2137 = vunpack.c.l.b16 %v1801
        %v2138 = vunpack.c.l.b16 %v1802
        %v2139 = vunpack.c.l.b16 %v1803
        %v2140 = vunpack.c.l.b16 %v1804
        %v2141 = vunpack.c.l.b16 %v1805
        %v2142 = vunpack.c.l.b16 %v1806
        %v2143 = vunpack.c.l.b16 %v1807
        %v2144 = vunpack.c.l.b16 %v1808
        %v2145 = vunpack.c.l.b16 %v1809
        %v2146 = vpack.c.b16 %v2099, %v2098
        %v2147 = vpack.c.b16 %v2101, %v2100
        %v2148 = vpack.c.b16 %v2103, %v2102
        %v2149 = vpack.c.b16 %v2105, %v2104
        %v2150 = vpack.c.b16 %v2107, %v2106
        %v2151 = vpack.c.b16 %v2109, %v2108
        %v2152 = vpack.c.b16 %v2111, %v2110
        %v2153 = vpack.c.b16 %v2113, %v2112
        %v2154 = vpack.c.b16 %v2115, %v2114
        %v2155 = vpack.c.b16 %v2117, %v2116
        %v2156 = vpack.c.b16 %v2119, %v2118
        %v2157 = vpack.c.b16 %v2121, %v2120
        %v2158 = vpack.c.b16 %v2123, %v2122
        %v2159 = vpack.c.b16 %v2125, %v2124
        %v2160 = vpack.c.b16 %v2127, %v2126
        %v2161 = vpack.c.b16 %v2129, %v2128
        %v2162 = vpack.c.b16 %v2131, %v2130
        %v2163 = vpack.c.b16 %v2133, %v2132
        %v2164 = vpack.c.b16 %v2135, %v2134
        %v2165 = vpack.c.b16 %v2137, %v2136
        %v2166 = vpack.c.b16 %v2139, %v2138
        %v2167 = vpack.c.b16 %v2141, %v2140
        %v2168 = vpack.c.b16 %v2143, %v2142
        %v2169 = vpack.c.b16 %v2145, %v2144
        %2194 = vmatpush.bf16.msra.mxu0 %v2153
        %2195 = vmatpush.bf16.msra.mxu0 %v2152
        %2196 = vmatpush.bf16.msra.mxu0 %v2151
        %2197 = vmatpush.bf16.msra.mxu0 %v2150
        %2198 = vmatpush.bf16.msra.mxu0 %v2149
        %2199 = vmatpush.bf16.msra.mxu0 %v2148
        %2200 = vmatpush.bf16.msra.mxu0 %v2147
        %2201 = vmatpush.bf16.msra.mxu0 %v2146
        %2202 = vmatmul.bf16.gmra.mxu0 %v1960
        %v2203 = vpop.f32.mrf.mxu0
        %v2204 = vadd.f32 0.0, %v2203
        %v2205 = vpop.f32.mrf.mxu0
        %v2206 = vadd.f32 0.0, %v2205
        %2207 = vmatmul.bf16.gmra.mxu0 %v1963
        %v2208 = vpop.f32.mrf.mxu0
        %v2209 = vadd.f32 0.0, %v2208
        %v2210 = vpop.f32.mrf.mxu0
        %v2211 = vadd.f32 0.0, %v2210
        %2212 = vmatmul.bf16.gmra.mxu0 %v1966
        %v2213 = vpop.f32.mrf.mxu0
        %v2214 = vadd.f32 0.0, %v2213
        %v2215 = vpop.f32.mrf.mxu0
        %v2216 = vadd.f32 0.0, %v2215
        %2217 = vmatmul.bf16.gmra.mxu0 %v1969
        %v2218 = vpop.f32.mrf.mxu0
        %v2219 = vadd.f32 0.0, %v2218
        %v2220 = vpop.f32.mrf.mxu0
        %v2221 = vadd.f32 0.0, %v2220
        %2222 = vmatmul.bf16.gmra.mxu0 %v1972
        %v2223 = vpop.f32.mrf.mxu0
        %v2224 = vadd.f32 0.0, %v2223
        %v2225 = vpop.f32.mrf.mxu0
        %v2226 = vadd.f32 0.0, %v2225
        %2227 = vmatmul.bf16.gmra.mxu0 %v1975
        %v2228 = vpop.f32.mrf.mxu0
        %v2229 = vadd.f32 0.0, %v2228
        %v2230 = vpop.f32.mrf.mxu0
        %v2231 = vadd.f32 0.0, %v2230
        %2232 = vmatmul.bf16.gmra.mxu0 %v1978
        %v2233 = vpop.f32.mrf.mxu0
        %v2234 = vadd.f32 0.0, %v2233
        %v2235 = vpop.f32.mrf.mxu0
        %v2236 = vadd.f32 0.0, %v2235
        %2237 = vmatmul.bf16.gmra.mxu0 %v1981
        %v2238 = vpop.f32.mrf.mxu0
        %v2239 = vadd.f32 0.0, %v2238
        %v2240 = vpop.f32.mrf.mxu0
        %v2241 = vadd.f32 0.0, %v2240
        %2242 = vmatmul.bf16.gmra.mxu0 %v1984
        %v2243 = vpop.f32.mrf.mxu0
        %v2244 = vadd.f32 0.0, %v2243
        %v2245 = vpop.f32.mrf.mxu0
        %v2246 = vadd.f32 0.0, %v2245
        %2247 = vmatmul.bf16.gmra.mxu0 %v1987
        %v2248 = vpop.f32.mrf.mxu0
        %v2249 = vadd.f32 0.0, %v2248
        %v2250 = vpop.f32.mrf.mxu0
        %v2251 = vadd.f32 0.0, %v2250
        %2252 = vmatmul.bf16.gmra.mxu0 %v1990
        %v2253 = vpop.f32.mrf.mxu0
        %v2254 = vadd.f32 0.0, %v2253
        %v2255 = vpop.f32.mrf.mxu0
        %v2256 = vadd.f32 0.0, %v2255
        %2257 = vmatmul.bf16.gmra.mxu0 %v1993
        %v2258 = vpop.f32.mrf.mxu0
        %v2259 = vadd.f32 0.0, %v2258
        %v2260 = vpop.f32.mrf.mxu0
        %v2261 = vadd.f32 0.0, %v2260
        %2262 = vmatmul.bf16.gmra.mxu0 %v1996
        %v2263 = vpop.f32.mrf.mxu0
        %v2264 = vadd.f32 0.0, %v2263
        %v2265 = vpop.f32.mrf.mxu0
        %v2266 = vadd.f32 0.0, %v2265
        %2267 = vmatmul.bf16.gmra.mxu0 %v1999
        %v2268 = vpop.f32.mrf.mxu0
        %v2269 = vadd.f32 0.0, %v2268
        %v2270 = vpop.f32.mrf.mxu0
        %v2271 = vadd.f32 0.0, %v2270
        %2272 = vmatmul.bf16.gmra.mxu0 %v2002
        %v2273 = vpop.f32.mrf.mxu0
        %v2274 = vadd.f32 0.0, %v2273
        %v2275 = vpop.f32.mrf.mxu0
        %v2276 = vadd.f32 0.0, %v2275
        %2277 = vdwg.mxu0
        %2278 = vmatpush.bf16.msra.mxu0 %v2161
        %2279 = vmatpush.bf16.msra.mxu0 %v2160
        %2280 = vmatpush.bf16.msra.mxu0 %v2159
        %2281 = vmatpush.bf16.msra.mxu0 %v2158
        %2282 = vmatpush.bf16.msra.mxu0 %v2157
        %2283 = vmatpush.bf16.msra.mxu0 %v2156
        %2284 = vmatpush.bf16.msra.mxu0 %v2155
        %2285 = vmatpush.bf16.msra.mxu0 %v2154
        %2286 = vmatmul.bf16.gmra.mxu0 %v1961
        %v2287 = vpop.f32.mrf.mxu0
        %v2288 = vadd.f32 %v2204, %v2287
        %v2289 = vpop.f32.mrf.mxu0
        %v2290 = vadd.f32 %v2206, %v2289
        %2291 = vmatmul.bf16.gmra.mxu0 %v1964
        %v2292 = vpop.f32.mrf.mxu0
        %v2293 = vadd.f32 %v2209, %v2292
        %v2294 = vpop.f32.mrf.mxu0
        %v2295 = vadd.f32 %v2211, %v2294
        %2296 = vmatmul.bf16.gmra.mxu0 %v1967
        %v2297 = vpop.f32.mrf.mxu0
        %v2298 = vadd.f32 %v2214, %v2297
        %v2299 = vpop.f32.mrf.mxu0
        %v2300 = vadd.f32 %v2216, %v2299
        %2301 = vmatmul.bf16.gmra.mxu0 %v1970
        %v2302 = vpop.f32.mrf.mxu0
        %v2303 = vadd.f32 %v2219, %v2302
        %v2304 = vpop.f32.mrf.mxu0
        %v2305 = vadd.f32 %v2221, %v2304
        %2306 = vmatmul.bf16.gmra.mxu0 %v1973
        %v2307 = vpop.f32.mrf.mxu0
        %v2308 = vadd.f32 %v2224, %v2307
        %v2309 = vpop.f32.mrf.mxu0
        %v2310 = vadd.f32 %v2226, %v2309
        %2311 = vmatmul.bf16.gmra.mxu0 %v1976
        %v2312 = vpop.f32.mrf.mxu0
        %v2313 = vadd.f32 %v2229, %v2312
        %v2314 = vpop.f32.mrf.mxu0
        %v2315 = vadd.f32 %v2231, %v2314
        %2316 = vmatmul.bf16.gmra.mxu0 %v1979
        %v2317 = vpop.f32.mrf.mxu0
        %v2318 = vadd.f32 %v2234, %v2317
        %v2319 = vpop.f32.mrf.mxu0
        %v2320 = vadd.f32 %v2236, %v2319
        %2321 = vmatmul.bf16.gmra.mxu0 %v1982
        %v2322 = vpop.f32.mrf.mxu0
        %v2323 = vadd.f32 %v2239, %v2322
        %v2324 = vpop.f32.mrf.mxu0
        %v2325 = vadd.f32 %v2241, %v2324
        %2326 = vmatmul.bf16.gmra.mxu0 %v1985
        %v2327 = vpop.f32.mrf.mxu0
        %v2328 = vadd.f32 %v2244, %v2327
        %v2329 = vpop.f32.mrf.mxu0
        %v2330 = vadd.f32 %v2246, %v2329
        %2331 = vmatmul.bf16.gmra.mxu0 %v1988
        %v2332 = vpop.f32.mrf.mxu0
        %v2333 = vadd.f32 %v2249, %v2332
        %v2334 = vpop.f32.mrf.mxu0
        %v2335 = vadd.f32 %v2251, %v2334
        %2336 = vmatmul.bf16.gmra.mxu0 %v1991
        %v2337 = vpop.f32.mrf.mxu0
        %v2338 = vadd.f32 %v2254, %v2337
        %v2339 = vpop.f32.mrf.mxu0
        %v2340 = vadd.f32 %v2256, %v2339
        %2341 = vmatmul.bf16.gmra.mxu0 %v1994
        %v2342 = vpop.f32.mrf.mxu0
        %v2343 = vadd.f32 %v2259, %v2342
        %v2344 = vpop.f32.mrf.mxu0
        %v2345 = vadd.f32 %v2261, %v2344
        %2346 = vmatmul.bf16.gmra.mxu0 %v1997
        %v2347 = vpop.f32.mrf.mxu0
        %v2348 = vadd.f32 %v2264, %v2347
        %v2349 = vpop.f32.mrf.mxu0
        %v2350 = vadd.f32 %v2266, %v2349
        %2351 = vmatmul.bf16.gmra.mxu0 %v2000
        %v2352 = vpop.f32.mrf.mxu0
        %v2353 = vadd.f32 %v2269, %v2352
        %v2354 = vpop.f32.mrf.mxu0
        %v2355 = vadd.f32 %v2271, %v2354
        %2356 = vmatmul.bf16.gmra.mxu0 %v2003
        %v2357 = vpop.f32.mrf.mxu0
        %v2358 = vadd.f32 %v2274, %v2357
        %v2359 = vpop.f32.mrf.mxu0
        %v2360 = vadd.f32 %v2276, %v2359
        %2361 = vdwg.mxu0
        %2362 = vmatpush.bf16.msra.mxu0 %v2169
        %2363 = vmatpush.bf16.msra.mxu0 %v2168
        %2364 = vmatpush.bf16.msra.mxu0 %v2167
        %2365 = vmatpush.bf16.msra.mxu0 %v2166
        %2366 = vmatpush.bf16.msra.mxu0 %v2165
        %2367 = vmatpush.bf16.msra.mxu0 %v2164
        %2368 = vmatpush.bf16.msra.mxu0 %v2163
        %2369 = vmatpush.bf16.msra.mxu0 %v2162
        %2370 = vmatmul.bf16.gmra.mxu0 %v1962
        %v2371 = vpop.f32.mrf.mxu0
        %v2372 = vadd.f32 %v2288, %v2371
        %v2373 = vpop.f32.mrf.mxu0
        %v2374 = vadd.f32 %v2290, %v2373
        %2375 = vmatmul.bf16.gmra.mxu0 %v1965
        %v2376 = vpop.f32.mrf.mxu0
        %v2377 = vadd.f32 %v2293, %v2376
        %v2378 = vpop.f32.mrf.mxu0
        %v2379 = vadd.f32 %v2295, %v2378
        %2380 = vmatmul.bf16.gmra.mxu0 %v1968
        %v2381 = vpop.f32.mrf.mxu0
        %v2382 = vadd.f32 %v2298, %v2381
        %v2383 = vpop.f32.mrf.mxu0
        %v2384 = vadd.f32 %v2300, %v2383
        %2385 = vmatmul.bf16.gmra.mxu0 %v1971
        %v2386 = vpop.f32.mrf.mxu0
        %v2387 = vadd.f32 %v2303, %v2386
        %v2388 = vpop.f32.mrf.mxu0
        %v2389 = vadd.f32 %v2305, %v2388
        %2390 = vmatmul.bf16.gmra.mxu0 %v1974
        %v2391 = vpop.f32.mrf.mxu0
        %v2392 = vadd.f32 %v2308, %v2391
        %v2393 = vpop.f32.mrf.mxu0
        %v2394 = vadd.f32 %v2310, %v2393
        %2395 = vmatmul.bf16.gmra.mxu0 %v1977
        %v2396 = vpop.f32.mrf.mxu0
        %v2397 = vadd.f32 %v2313, %v2396
        %v2398 = vpop.f32.mrf.mxu0
        %v2399 = vadd.f32 %v2315, %v2398
        %2400 = vmatmul.bf16.gmra.mxu0 %v1980
        %v2401 = vpop.f32.mrf.mxu0
        %v2402 = vadd.f32 %v2318, %v2401
        %v2403 = vpop.f32.mrf.mxu0
        %v2404 = vadd.f32 %v2320, %v2403
        %2405 = vmatmul.bf16.gmra.mxu0 %v1983
        %v2406 = vpop.f32.mrf.mxu0
        %v2407 = vadd.f32 %v2323, %v2406
        %v2408 = vpop.f32.mrf.mxu0
        %v2409 = vadd.f32 %v2325, %v2408
        %2410 = vmatmul.bf16.gmra.mxu0 %v1986
        %v2411 = vpop.f32.mrf.mxu0
        %v2412 = vadd.f32 %v2328, %v2411
        %v2413 = vpop.f32.mrf.mxu0
        %v2414 = vadd.f32 %v2330, %v2413
        %2415 = vmatmul.bf16.gmra.mxu0 %v1989
        %v2416 = vpop.f32.mrf.mxu0
        %v2417 = vadd.f32 %v2333, %v2416
        %v2418 = vpop.f32.mrf.mxu0
        %v2419 = vadd.f32 %v2335, %v2418
        %2420 = vmatmul.bf16.gmra.mxu0 %v1992
        %v2421 = vpop.f32.mrf.mxu0
        %v2422 = vadd.f32 %v2338, %v2421
        %v2423 = vpop.f32.mrf.mxu0
        %v2424 = vadd.f32 %v2340, %v2423
        %2425 = vmatmul.bf16.gmra.mxu0 %v1995
        %v2426 = vpop.f32.mrf.mxu0
        %v2427 = vadd.f32 %v2343, %v2426
        %v2428 = vpop.f32.mrf.mxu0
        %v2429 = vadd.f32 %v2345, %v2428
        %2430 = vmatmul.bf16.gmra.mxu0 %v1998
        %v2431 = vpop.f32.mrf.mxu0
        %v2432 = vadd.f32 %v2348, %v2431
        %v2433 = vpop.f32.mrf.mxu0
        %v2434 = vadd.f32 %v2350, %v2433
        %2435 = vmatmul.bf16.gmra.mxu0 %v2001
        %v2436 = vpop.f32.mrf.mxu0
        %v2437 = vadd.f32 %v2353, %v2436
        %v2438 = vpop.f32.mrf.mxu0
        %v2439 = vadd.f32 %v2355, %v2438
        %2440 = vmatmul.bf16.gmra.mxu0 %v2004
        %v2441 = vpop.f32.mrf.mxu0
        %v2442 = vadd.f32 %v2358, %v2441
        %v2443 = vpop.f32.mrf.mxu0
        %v2444 = vadd.f32 %v2360, %v2443
        %2445 = vdwg.mxu0
        %v2446 = vadd.f32 %v1672, %v2372
        %v2447 = vadd.f32 %v1673, %v2374
        %v2448 = vadd.f32 %v1674, %v2377
        %v2449 = vadd.f32 %v1675, %v2379
        %v2450 = vadd.f32 %v1676, %v2382
        %v2451 = vadd.f32 %v1677, %v2384
        %v2452 = vadd.f32 %v1678, %v2387
        %v2453 = vadd.f32 %v1679, %v2389
        %v2454 = vadd.f32 %v1680, %v2392
        %v2455 = vadd.f32 %v1681, %v2394
        %v2456 = vadd.f32 %v1682, %v2397
        %v2457 = vadd.f32 %v1683, %v2399
        %v2458 = vadd.f32 %v1684, %v2402
        %v2459 = vadd.f32 %v1685, %v2404
        %v2460 = vadd.f32 %v1686, %v2407
        %v2461 = vadd.f32 %v1687, %v2409
        %v2462 = vadd.f32 %v1688, %v2412
        %v2463 = vadd.f32 %v1689, %v2414
        %v2464 = vadd.f32 %v1690, %v2417
        %v2465 = vadd.f32 %v1691, %v2419
        %v2466 = vadd.f32 %v1692, %v2422
        %v2467 = vadd.f32 %v1693, %v2424
        %v2468 = vadd.f32 %v1694, %v2427
        %v2469 = vadd.f32 %v1695, %v2429
        %v2470 = vadd.f32 %v1696, %v2432
        %v2471 = vadd.f32 %v1697, %v2434
        %v2472 = vadd.f32 %v1698, %v2437
        %v2473 = vadd.f32 %v1699, %v2439
        %v2474 = vadd.f32 %v1700, %v2442
        %v2475 = vadd.f32 %v1701, %v2444
        %2476 = vst [vmem:[#allocation3 + $0x10] sm:$0xff] %v2446
        %2477 = vst [vmem:[#allocation3 + $0x18] sm:$0xff] %v2447
        %2478 = vst [vmem:[#allocation3 + $0x20] sm:$0xff] %v2448
        %2479 = vst [vmem:[#allocation3 + $0x28] sm:$0xff] %v2449
        %2480 = vst [vmem:[#allocation3 + $0x30] sm:$0xff] %v2450
        %2481 = vst [vmem:[#allocation3 + $0x38] sm:$0xff] %v2451
        %2482 = vst [vmem:[#allocation3 + $0x40] sm:$0xff] %v2452
        %2483 = vst [vmem:[#allocation3 + $0x48] sm:$0xff] %v2453
        %2484 = vst [vmem:[#allocation3 + $0x50] sm:$0xff] %v2454
        %2485 = vst [vmem:[#allocation3 + $0x58] sm:$0xff] %v2455
        %2486 = vst [vmem:[#allocation3 + $0x60] sm:$0xff] %v2456
        %2487 = vst [vmem:[#allocation3 + $0x68] sm:$0xff] %v2457
        %2488 = vst [vmem:[#allocation3 + $0x70] sm:$0xff] %v2458
        %2489 = vst [vmem:[#allocation3 + $0x78] sm:$0xff] %v2459
        %2490 = vst [vmem:[#allocation3 + $0x80] sm:$0xff] %v2460
        %2491 = vst [vmem:[#allocation3 + $0x88] sm:$0xff] %v2461
        %2492 = vst [vmem:[#allocation3 + $0x90] sm:$0xff] %v2462
        %2493 = vst [vmem:[#allocation3 + $0x98] sm:$0xff] %v2463
        %2494 = vst [vmem:[#allocation3 + $0xa0] sm:$0xff] %v2464
        %2495 = vst [vmem:[#allocation3 + $0xa8] sm:$0xff] %v2465
        %2496 = vst [vmem:[#allocation3 + $0xb0] sm:$0xff] %v2466
        %2497 = vst [vmem:[#allocation3 + $0xb8] sm:$0xff] %v2467
        %2498 = vst [vmem:[#allocation3 + $0xc0] sm:$0xff] %v2468
        %2499 = vst [vmem:[#allocation3 + $0xc8] sm:$0xff] %v2469
        %2500 = vst [vmem:[#allocation3 + $0xd0] sm:$0xff] %v2470
        %2501 = vst [vmem:[#allocation3 + $0xd8] sm:$0xff] %v2471
        %2502 = vst [vmem:[#allocation3 + $0xe0] sm:$0xff] %v2472
        %2503 = vst [vmem:[#allocation3 + $0xe8] sm:$0xff] %v2473
        %2504 = vst [vmem:[#allocation3 + $0xf0] sm:$0xff] %v2474
        %2505 = vst [vmem:[#allocation3 + $0xf8] sm:$0xff] %v2475
        %v2506 = vld [vmem:[#allocation3] sm:$0xff]
        %v2507 = vld [vmem:[#allocation3 + $0x8] sm:$0xff]
        %v2508 = vld [vmem:[#allocation3 + $0x10] sm:$0xff]
        %v2509 = vld [vmem:[#allocation3 + $0x18] sm:$0xff]
        %v2510 = vld [vmem:[#allocation3 + $0x20] sm:$0xff]
        %v2511 = vld [vmem:[#allocation3 + $0x28] sm:$0xff]
        %v2512 = vld [vmem:[#allocation3 + $0x30] sm:$0xff]
        %v2513 = vld [vmem:[#allocation3 + $0x38] sm:$0xff]
        %v2514 = vld [vmem:[#allocation3 + $0x40] sm:$0xff]
        %v2515 = vld [vmem:[#allocation3 + $0x48] sm:$0xff]
        %v2516 = vld [vmem:[#allocation3 + $0x50] sm:$0xff]
        %v2517 = vld [vmem:[#allocation3 + $0x58] sm:$0xff]
        %v2518 = vld [vmem:[#allocation3 + $0x60] sm:$0xff]
        %v2519 = vld [vmem:[#allocation3 + $0x68] sm:$0xff]
        %v2520 = vld [vmem:[#allocation3 + $0x70] sm:$0xff]
        %v2521 = vld [vmem:[#allocation3 + $0x78] sm:$0xff]
        %v2522 = vld [vmem:[#allocation3 + $0x80] sm:$0xff]
        %v2523 = vld [vmem:[#allocation3 + $0x88] sm:$0xff]
        %v2524 = vld [vmem:[#allocation3 + $0x90] sm:$0xff]
        %v2525 = vld [vmem:[#allocation3 + $0x98] sm:$0xff]
        %v2526 = vld [vmem:[#allocation3 + $0xa0] sm:$0xff]
        %v2527 = vld [vmem:[#allocation3 + $0xa8] sm:$0xff]
        %v2528 = vld [vmem:[#allocation3 + $0xb0] sm:$0xff]
        %v2529 = vld [vmem:[#allocation3 + $0xb8] sm:$0xff]
        %v2530 = vld [vmem:[#allocation3 + $0xc0] sm:$0xff]
        %v2531 = vld [vmem:[#allocation3 + $0xc8] sm:$0xff]
        %v2532 = vld [vmem:[#allocation3 + $0xd0] sm:$0xff]
        %v2533 = vld [vmem:[#allocation3 + $0xd8] sm:$0xff]
        %v2534 = vld [vmem:[#allocation3 + $0xe0] sm:$0xff]
        %v2535 = vld [vmem:[#allocation3 + $0xe8] sm:$0xff]
        %v2536 = vld [vmem:[#allocation2 + $0x18] sm:$0xff]
        %v2537 = vld [vmem:[#allocation2 + $0x20] sm:$0xf]
        %v2538 = vld [vmem:[#allocation2 + $0x24] sm:$0xff]
        %v2539 = vld [vmem:[#allocation2 + $0x2c] sm:$0xf]
        %v2540 = vld [vmem:[#allocation2 + $0x30] sm:$0xff]
        %v2541 = vld [vmem:[#allocation2 + $0x38] sm:$0xf]
        %v2542 = vld [vmem:[#allocation2 + $0x3c] sm:$0xff]
        %v2543 = vld [vmem:[#allocation2 + $0x44] sm:$0xf]
        %v2544 = vld [vmem:[#allocation2 + $0x48] sm:$0xff]
        %v2545 = vld [vmem:[#allocation2 + $0x50] sm:$0xf]
        %v2546 = vld [vmem:[#allocation2 + $0x54] sm:$0xff]
        %v2547 = vld [vmem:[#allocation2 + $0x5c] sm:$0xf]
        %v2548 = vld [vmem:[#allocation2 + $0x60] sm:$0xff]
        %v2549 = vld [vmem:[#allocation2 + $0x68] sm:$0xf]
        %v2550 = vld [vmem:[#allocation2 + $0x6c] sm:$0xff]
        %v2551 = vld [vmem:[#allocation2 + $0x74] sm:$0xf]
        %v2552 = vld [vmem:[#allocation2 + $0x78] sm:$0xff]
        %v2553 = vld [vmem:[#allocation2 + $0x80] sm:$0xf]
        %v2554 = vld [vmem:[#allocation2 + $0x84] sm:$0xff]
        %v2555 = vld [vmem:[#allocation2 + $0x8c] sm:$0xf]
        %v2556 = vld [vmem:[#allocation2 + $0x90] sm:$0xff]
        %v2557 = vld [vmem:[#allocation2 + $0x98] sm:$0xf]
        %v2558 = vld [vmem:[#allocation2 + $0x9c] sm:$0xff]
        %v2559 = vld [vmem:[#allocation2 + $0xa4] sm:$0xf]
        %v2560 = vld [vmem:[#allocation2 + $0xa8] sm:$0xff]
        %v2561 = vld [vmem:[#allocation2 + $0xb0] sm:$0xf]
        %v2562 = vld [vmem:[#allocation2 + $0xb4] sm:$0xff]
        %v2563 = vld [vmem:[#allocation2 + $0xbc] sm:$0xf]
        %v2564 = vld [vmem:[#allocation2 + $0xc0] sm:$0xff]
        %v2565 = vld [vmem:[#allocation2 + $0xc8] sm:$0xf]
        %v2566 = vld [vmem:[#allocation2 + $0xcc] sm:$0xff]
        %v2567 = vld [vmem:[#allocation2 + $0xd4] sm:$0xf]
        %v2568 = vld [vmem:[#allocation2 + $0xd8] sm:$0xff]
        %v2569 = vld [vmem:[#allocation2 + $0xe0] sm:$0xf]
        %v2570 = vld [vmem:[#allocation2 + $0xe4] sm:$0xff]
        %v2571 = vld [vmem:[#allocation2 + $0xec] sm:$0xf]
        %v2572 = vld [vmem:[#allocation2 + $0xf0] sm:$0xff]
        %v2573 = vld [vmem:[#allocation2 + $0xf8] sm:$0xf]
        %v2574 = vld [vmem:[#allocation2 + $0xfc] sm:$0xff]
        %v2575 = vld [vmem:[#allocation2 + $0x104] sm:$0xf]
        %v2576 = vld [vmem:[#allocation2 + $0x108] sm:$0xff]
        %v2577 = vld [vmem:[#allocation2 + $0x110] sm:$0xf]
        %v2578 = vld [vmem:[#allocation2 + $0x114] sm:$0xff]
        %v2579 = vld [vmem:[#allocation2 + $0x11c] sm:$0xf]
        %v2580 = vld [vmem:[#allocation2 + $0x120] sm:$0xff]
        %v2581 = vld [vmem:[#allocation2 + $0x128] sm:$0xf]
        %v2582 = vld [vmem:[#allocation2 + $0x12c] sm:$0xff]
        %v2583 = vld [vmem:[#allocation2 + $0x134] sm:$0xf]
        %v2584 = vld [vmem:[#allocation2 + $0x138] sm:$0xff]
        %v2585 = vld [vmem:[#allocation2 + $0x140] sm:$0xf]
        %v2586 = vld [vmem:[#allocation2 + $0x144] sm:$0xff]
        %v2587 = vld [vmem:[#allocation2 + $0x14c] sm:$0xf]
        %v2588 = vld [vmem:[#allocation2 + $0x150] sm:$0xff]
        %v2589 = vld [vmem:[#allocation2 + $0x158] sm:$0xf]
        %v2590 = vld [vmem:[#allocation2 + $0x15c] sm:$0xff]
        %v2591 = vld [vmem:[#allocation2 + $0x164] sm:$0xf]
        %v2592 = vld [vmem:[#allocation2 + $0x168] sm:$0xff]
        %v2593 = vld [vmem:[#allocation2 + $0x170] sm:$0xf]
        %v2594 = vld [vmem:[#allocation2 + $0x174] sm:$0xff]
        %v2595 = vld [vmem:[#allocation2 + $0x17c] sm:$0xf]
        %s2596 = scalar_lea.vmem [#allocation7], 384
        %v2597 = vld [vmem:[%s2596] sm:$0xf]
        %v2598 = vld [vmem:[%s2596 + $0x4] sm:$0xf]
        %v2599 = vld [vmem:[%s2596 + $0x8] sm:$0xf]
        %v2600 = vld [vmem:[%s2596 + $0xc] sm:$0xf]
        %v2601 = vld [vmem:[%s2596 + $0x10] sm:$0xf]
        %v2602 = vld [vmem:[%s2596 + $0x14] sm:$0xf]
        %v2603 = vld [vmem:[%s2596 + $0x18] sm:$0xf]
        %v2604 = vld [vmem:[%s2596 + $0x1c] sm:$0xf]
        %v2605 = vld [vmem:[%s2596 + $0x20] sm:$0xf]
        %v2606 = vld [vmem:[%s2596 + $0x24] sm:$0xf]
        %v2607 = vld [vmem:[%s2596 + $0x28] sm:$0xf]
        %v2608 = vld [vmem:[%s2596 + $0x2c] sm:$0xf]
        %v2609 = vld [vmem:[%s2596 + $0x30] sm:$0xf]
        %v2610 = vld [vmem:[%s2596 + $0x34] sm:$0xf]
        %v2611 = vld [vmem:[%s2596 + $0x38] sm:$0xf]
        %v2612 = vld [vmem:[%s2596 + $0x3c] sm:$0xf]
        %v2613 = vld [vmem:[%s2596 + $0x40] sm:$0xf]
        %v2614 = vld [vmem:[%s2596 + $0x44] sm:$0xf]
        %v2615 = vld [vmem:[%s2596 + $0x48] sm:$0xf]
        %v2616 = vld [vmem:[%s2596 + $0x4c] sm:$0xf]
        %v2617 = vld [vmem:[%s2596 + $0x50] sm:$0xf]
        %v2618 = vld [vmem:[%s2596 + $0x54] sm:$0xf]
        %v2619 = vld [vmem:[%s2596 + $0x58] sm:$0xf]
        %v2620 = vld [vmem:[%s2596 + $0x5c] sm:$0xf]
        %v2621 = vld [vmem:[%s2596 + $0x60] sm:$0xf]
        %v2622 = vld [vmem:[%s2596 + $0x64] sm:$0xf]
        %v2623 = vld [vmem:[%s2596 + $0x68] sm:$0xf]
        %v2624 = vld [vmem:[%s2596 + $0x6c] sm:$0xf]
        %v2625 = vld [vmem:[%s2596 + $0x70] sm:$0xf]
        %v2626 = vld [vmem:[%s2596 + $0x74] sm:$0xf]
        %v2627 = vld [vmem:[%s2596 + $0x78] sm:$0xf]
        %v2628 = vld [vmem:[%s2596 + $0x7c] sm:$0xf]
        %v2629 = vld [vmem:[%s2596 + $0x80] sm:$0xf]
        %v2630 = vld [vmem:[%s2596 + $0x84] sm:$0xf]
        %v2631 = vld [vmem:[%s2596 + $0x88] sm:$0xf]
        %v2632 = vld [vmem:[%s2596 + $0x8c] sm:$0xf]
        %v2633 = vld [vmem:[%s2596 + $0x90] sm:$0xf]
        %v2634 = vld [vmem:[%s2596 + $0x94] sm:$0xf]
        %v2635 = vld [vmem:[%s2596 + $0x98] sm:$0xf]
        %v2636 = vld [vmem:[%s2596 + $0x9c] sm:$0xf]
        %v2637 = vld [vmem:[%s2596 + $0xa0] sm:$0xf]
        %v2638 = vld [vmem:[%s2596 + $0xa4] sm:$0xf]
        %v2639 = vld [vmem:[%s2596 + $0xa8] sm:$0xf]
        %v2640 = vld [vmem:[%s2596 + $0xac] sm:$0xf]
        %v2641 = vld [vmem:[%s2596 + $0xb0] sm:$0xf]
        %v2642 = vld [vmem:[%s2596 + $0xb4] sm:$0xf]
        %v2643 = vld [vmem:[%s2596 + $0xb8] sm:$0xf]
        %v2644 = vld [vmem:[%s2596 + $0xbc] sm:$0xf]
        %v2705 = vunpack.c.l.b16 %v2536
        %v2706 = vunpack.c.h.b16 %v2536
        %v2707 = vunpack.c.l.b16 %v2537
        %v2708 = vunpack.c.l.b16 %v2538
        %v2709 = vunpack.c.h.b16 %v2538
        %v2710 = vunpack.c.l.b16 %v2539
        %v2711 = vunpack.c.l.b16 %v2540
        %v2712 = vunpack.c.h.b16 %v2540
        %v2713 = vunpack.c.l.b16 %v2541
        %v2714 = vunpack.c.l.b16 %v2542
        %v2715 = vunpack.c.h.b16 %v2542
        %v2716 = vunpack.c.l.b16 %v2543
        %v2717 = vunpack.c.l.b16 %v2544
        %v2718 = vunpack.c.h.b16 %v2544
        %v2719 = vunpack.c.l.b16 %v2545
        %v2720 = vunpack.c.l.b16 %v2546
        %v2721 = vunpack.c.h.b16 %v2546
        %v2722 = vunpack.c.l.b16 %v2547
        %v2723 = vunpack.c.l.b16 %v2548
        %v2724 = vunpack.c.h.b16 %v2548
        %v2725 = vunpack.c.l.b16 %v2549
        %v2726 = vunpack.c.l.b16 %v2550
        %v2727 = vunpack.c.h.b16 %v2550
        %v2728 = vunpack.c.l.b16 %v2551
        %v2729 = vunpack.c.l.b16 %v2552
        %v2730 = vunpack.c.h.b16 %v2552
        %v2731 = vunpack.c.l.b16 %v2553
        %v2732 = vunpack.c.l.b16 %v2554
        %v2733 = vunpack.c.h.b16 %v2554
        %v2734 = vunpack.c.l.b16 %v2555
        %v2735 = vunpack.c.l.b16 %v2556
        %v2736 = vunpack.c.h.b16 %v2556
        %v2737 = vunpack.c.l.b16 %v2557
        %v2738 = vunpack.c.l.b16 %v2558
        %v2739 = vunpack.c.h.b16 %v2558
        %v2740 = vunpack.c.l.b16 %v2559
        %v2741 = vunpack.c.l.b16 %v2560
        %v2742 = vunpack.c.h.b16 %v2560
        %v2743 = vunpack.c.l.b16 %v2561
        %v2744 = vunpack.c.l.b16 %v2562
        %v2745 = vunpack.c.h.b16 %v2562
        %v2746 = vunpack.c.l.b16 %v2563
        %v2747 = vunpack.c.l.b16 %v2564
        %v2748 = vunpack.c.h.b16 %v2564
        %v2749 = vunpack.c.l.b16 %v2565
        %v2750 = vunpack.c.l.b16 %v2566
        %v2751 = vunpack.c.h.b16 %v2566
        %v2752 = vunpack.c.l.b16 %v2567
        %v2753 = vunpack.c.l.b16 %v2568
        %v2754 = vunpack.c.h.b16 %v2568
        %v2755 = vunpack.c.l.b16 %v2569
        %v2756 = vunpack.c.l.b16 %v2570
        %v2757 = vunpack.c.h.b16 %v2570
        %v2758 = vunpack.c.l.b16 %v2571
        %v2759 = vunpack.c.l.b16 %v2572
        %v2760 = vunpack.c.h.b16 %v2572
        %v2761 = vunpack.c.l.b16 %v2573
        %v2762 = vunpack.c.l.b16 %v2574
        %v2763 = vunpack.c.h.b16 %v2574
        %v2764 = vunpack.c.l.b16 %v2575
        %v2765 = vunpack.c.l.b16 %v2576
        %v2766 = vunpack.c.h.b16 %v2576
        %v2767 = vunpack.c.l.b16 %v2577
        %v2768 = vunpack.c.l.b16 %v2578
        %v2769 = vunpack.c.h.b16 %v2578
        %v2770 = vunpack.c.l.b16 %v2579
        %v2771 = vunpack.c.l.b16 %v2580
        %v2772 = vunpack.c.h.b16 %v2580
        %v2773 = vunpack.c.l.b16 %v2581
        %v2774 = vunpack.c.l.b16 %v2582
        %v2775 = vunpack.c.h.b16 %v2582
        %v2776 = vunpack.c.l.b16 %v2583
        %v2777 = vunpack.c.l.b16 %v2584
        %v2778 = vunpack.c.h.b16 %v2584
        %v2779 = vunpack.c.l.b16 %v2585
        %v2780 = vunpack.c.l.b16 %v2586
        %v2781 = vunpack.c.h.b16 %v2586
        %v2782 = vunpack.c.l.b16 %v2587
        %v2783 = vunpack.c.l.b16 %v2588
        %v2784 = vunpack.c.h.b16 %v2588
        %v2785 = vunpack.c.l.b16 %v2589
        %v2786 = vunpack.c.l.b16 %v2590
        %v2787 = vunpack.c.h.b16 %v2590
        %v2788 = vunpack.c.l.b16 %v2591
        %v2789 = vunpack.c.l.b16 %v2592
        %v2790 = vunpack.c.h.b16 %v2592
        %v2791 = vunpack.c.l.b16 %v2593
        %v2792 = vunpack.c.l.b16 %v2594
        %v2793 = vunpack.c.h.b16 %v2594
        %v2794 = vunpack.c.l.b16 %v2595
        %v2795 = vpack.c.b16 %v2708, %v2705
        %v2796 = vpack.c.b16 %v2709, %v2706
        %v2797 = vpack.c.b16 %v2710, %v2707
        %v2798 = vpack.c.b16 %v2714, %v2711
        %v2799 = vpack.c.b16 %v2715, %v2712
        %v2800 = vpack.c.b16 %v2716, %v2713
        %v2801 = vpack.c.b16 %v2720, %v2717
        %v2802 = vpack.c.b16 %v2721, %v2718
        %v2803 = vpack.c.b16 %v2722, %v2719
        %v2804 = vpack.c.b16 %v2726, %v2723
        %v2805 = vpack.c.b16 %v2727, %v2724
        %v2806 = vpack.c.b16 %v2728, %v2725
        %v2807 = vpack.c.b16 %v2732, %v2729
        %v2808 = vpack.c.b16 %v2733, %v2730
        %v2809 = vpack.c.b16 %v2734, %v2731
        %v2810 = vpack.c.b16 %v2738, %v2735
        %v2811 = vpack.c.b16 %v2739, %v2736
        %v2812 = vpack.c.b16 %v2740, %v2737
        %v2813 = vpack.c.b16 %v2744, %v2741
        %v2814 = vpack.c.b16 %v2745, %v2742
        %v2815 = vpack.c.b16 %v2746, %v2743
        %v2816 = vpack.c.b16 %v2750, %v2747
        %v2817 = vpack.c.b16 %v2751, %v2748
        %v2818 = vpack.c.b16 %v2752, %v2749
        %v2819 = vpack.c.b16 %v2756, %v2753
        %v2820 = vpack.c.b16 %v2757, %v2754
        %v2821 = vpack.c.b16 %v2758, %v2755
        %v2822 = vpack.c.b16 %v2762, %v2759
        %v2823 = vpack.c.b16 %v2763, %v2760
        %v2824 = vpack.c.b16 %v2764, %v2761
        %v2825 = vpack.c.b16 %v2768, %v2765
        %v2826 = vpack.c.b16 %v2769, %v2766
        %v2827 = vpack.c.b16 %v2770, %v2767
        %v2828 = vpack.c.b16 %v2774, %v2771
        %v2829 = vpack.c.b16 %v2775, %v2772
        %v2830 = vpack.c.b16 %v2776, %v2773
        %v2831 = vpack.c.b16 %v2780, %v2777
        %v2832 = vpack.c.b16 %v2781, %v2778
        %v2833 = vpack.c.b16 %v2782, %v2779
        %v2834 = vpack.c.b16 %v2786, %v2783
        %v2835 = vpack.c.b16 %v2787, %v2784
        %v2836 = vpack.c.b16 %v2788, %v2785
        %v2837 = vpack.c.b16 %v2792, %v2789
        %v2838 = vpack.c.b16 %v2793, %v2790
        %v2839 = vpack.c.b16 %v2794, %v2791
        %v2933 = vunpack.c.l.b16 %v2597
        %v2934 = vunpack.c.l.b16 %v2598
        %v2935 = vunpack.c.l.b16 %v2599
        %v2936 = vunpack.c.l.b16 %v2600
        %v2937 = vunpack.c.l.b16 %v2601
        %v2938 = vunpack.c.l.b16 %v2602
        %v2939 = vunpack.c.l.b16 %v2603
        %v2940 = vunpack.c.l.b16 %v2604
        %v2941 = vunpack.c.l.b16 %v2605
        %v2942 = vunpack.c.l.b16 %v2606
        %v2943 = vunpack.c.l.b16 %v2607
        %v2944 = vunpack.c.l.b16 %v2608
        %v2945 = vunpack.c.l.b16 %v2609
        %v2946 = vunpack.c.l.b16 %v2610
        %v2947 = vunpack.c.l.b16 %v2611
        %v2948 = vunpack.c.l.b16 %v2612
        %v2949 = vunpack.c.l.b16 %v2613
        %v2950 = vunpack.c.l.b16 %v2614
        %v2951 = vunpack.c.l.b16 %v2615
        %v2952 = vunpack.c.l.b16 %v2616
        %v2953 = vunpack.c.l.b16 %v2617
        %v2954 = vunpack.c.l.b16 %v2618
        %v2955 = vunpack.c.l.b16 %v2619
        %v2956 = vunpack.c.l.b16 %v2620
        %v2957 = vunpack.c.l.b16 %v2621
        %v2958 = vunpack.c.l.b16 %v2622
        %v2959 = vunpack.c.l.b16 %v2623
        %v2960 = vunpack.c.l.b16 %v2624
        %v2961 = vunpack.c.l.b16 %v2625
        %v2962 = vunpack.c.l.b16 %v2626
        %v2963 = vunpack.c.l.b16 %v2627
        %v2964 = vunpack.c.l.b16 %v2628
        %v2965 = vunpack.c.l.b16 %v2629
        %v2966 = vunpack.c.l.b16 %v2630
        %v2967 = vunpack.c.l.b16 %v2631
        %v2968 = vunpack.c.l.b16 %v2632
        %v2969 = vunpack.c.l.b16 %v2633
        %v2970 = vunpack.c.l.b16 %v2634
        %v2971 = vunpack.c.l.b16 %v2635
        %v2972 = vunpack.c.l.b16 %v2636
        %v2973 = vunpack.c.l.b16 %v2637
        %v2974 = vunpack.c.l.b16 %v2638
        %v2975 = vunpack.c.l.b16 %v2639
        %v2976 = vunpack.c.l.b16 %v2640
        %v2977 = vunpack.c.l.b16 %v2641
        %v2978 = vunpack.c.l.b16 %v2642
        %v2979 = vunpack.c.l.b16 %v2643
        %v2980 = vunpack.c.l.b16 %v2644
        %v2981 = vpack.c.b16 %v2934, %v2933
        %v2982 = vpack.c.b16 %v2936, %v2935
        %v2983 = vpack.c.b16 %v2938, %v2937
        %v2984 = vpack.c.b16 %v2940, %v2939
        %v2985 = vpack.c.b16 %v2942, %v2941
        %v2986 = vpack.c.b16 %v2944, %v2943
        %v2987 = vpack.c.b16 %v2946, %v2945
        %v2988 = vpack.c.b16 %v2948, %v2947
        %v2989 = vpack.c.b16 %v2950, %v2949
        %v2990 = vpack.c.b16 %v2952, %v2951
        %v2991 = vpack.c.b16 %v2954, %v2953
        %v2992 = vpack.c.b16 %v2956, %v2955
        %v2993 = vpack.c.b16 %v2958, %v2957
        %v2994 = vpack.c.b16 %v2960, %v2959
        %v2995 = vpack.c.b16 %v2962, %v2961
        %v2996 = vpack.c.b16 %v2964, %v2963
        %v2997 = vpack.c.b16 %v2966, %v2965
        %v2998 = vpack.c.b16 %v2968, %v2967
        %v2999 = vpack.c.b16 %v2970, %v2969
        %v3000 = vpack.c.b16 %v2972, %v2971
        %v3001 = vpack.c.b16 %v2974, %v2973
        %v3002 = vpack.c.b16 %v2976, %v2975
        %v3003 = vpack.c.b16 %v2978, %v2977
        %v3004 = vpack.c.b16 %v2980, %v2979
        %3029 = vmatpush.bf16.msra.mxu0 %v2988
        %3030 = vmatpush.bf16.msra.mxu0 %v2987
        %3031 = vmatpush.bf16.msra.mxu0 %v2986
        %3032 = vmatpush.bf16.msra.mxu0 %v2985
        %3033 = vmatpush.bf16.msra.mxu0 %v2984
        %3034 = vmatpush.bf16.msra.mxu0 %v2983
        %3035 = vmatpush.bf16.msra.mxu0 %v2982
        %3036 = vmatpush.bf16.msra.mxu0 %v2981
        %3037 = vmatmul.bf16.gmra.mxu0 %v2795
        %v3038 = vpop.f32.mrf.mxu0
        %v3039 = vadd.f32 0.0, %v3038
        %v3040 = vpop.f32.mrf.mxu0
        %v3041 = vadd.f32 0.0, %v3040
        %3042 = vmatmul.bf16.gmra.mxu0 %v2798
        %v3043 = vpop.f32.mrf.mxu0
        %v3044 = vadd.f32 0.0, %v3043
        %v3045 = vpop.f32.mrf.mxu0
        %v3046 = vadd.f32 0.0, %v3045
        %3047 = vmatmul.bf16.gmra.mxu0 %v2801
        %v3048 = vpop.f32.mrf.mxu0
        %v3049 = vadd.f32 0.0, %v3048
        %v3050 = vpop.f32.mrf.mxu0
        %v3051 = vadd.f32 0.0, %v3050
        %3052 = vmatmul.bf16.gmra.mxu0 %v2804
        %v3053 = vpop.f32.mrf.mxu0
        %v3054 = vadd.f32 0.0, %v3053
        %v3055 = vpop.f32.mrf.mxu0
        %v3056 = vadd.f32 0.0, %v3055
        %3057 = vmatmul.bf16.gmra.mxu0 %v2807
        %v3058 = vpop.f32.mrf.mxu0
        %v3059 = vadd.f32 0.0, %v3058
        %v3060 = vpop.f32.mrf.mxu0
        %v3061 = vadd.f32 0.0, %v3060
        %3062 = vmatmul.bf16.gmra.mxu0 %v2810
        %v3063 = vpop.f32.mrf.mxu0
        %v3064 = vadd.f32 0.0, %v3063
        %v3065 = vpop.f32.mrf.mxu0
        %v3066 = vadd.f32 0.0, %v3065
        %3067 = vmatmul.bf16.gmra.mxu0 %v2813
        %v3068 = vpop.f32.mrf.mxu0
        %v3069 = vadd.f32 0.0, %v3068
        %v3070 = vpop.f32.mrf.mxu0
        %v3071 = vadd.f32 0.0, %v3070
        %3072 = vmatmul.bf16.gmra.mxu0 %v2816
        %v3073 = vpop.f32.mrf.mxu0
        %v3074 = vadd.f32 0.0, %v3073
        %v3075 = vpop.f32.mrf.mxu0
        %v3076 = vadd.f32 0.0, %v3075
        %3077 = vmatmul.bf16.gmra.mxu0 %v2819
        %v3078 = vpop.f32.mrf.mxu0
        %v3079 = vadd.f32 0.0, %v3078
        %v3080 = vpop.f32.mrf.mxu0
        %v3081 = vadd.f32 0.0, %v3080
        %3082 = vmatmul.bf16.gmra.mxu0 %v2822
        %v3083 = vpop.f32.mrf.mxu0
        %v3084 = vadd.f32 0.0, %v3083
        %v3085 = vpop.f32.mrf.mxu0
        %v3086 = vadd.f32 0.0, %v3085
        %3087 = vmatmul.bf16.gmra.mxu0 %v2825
        %v3088 = vpop.f32.mrf.mxu0
        %v3089 = vadd.f32 0.0, %v3088
        %v3090 = vpop.f32.mrf.mxu0
        %v3091 = vadd.f32 0.0, %v3090
        %3092 = vmatmul.bf16.gmra.mxu0 %v2828
        %v3093 = vpop.f32.mrf.mxu0
        %v3094 = vadd.f32 0.0, %v3093
        %v3095 = vpop.f32.mrf.mxu0
        %v3096 = vadd.f32 0.0, %v3095
        %3097 = vmatmul.bf16.gmra.mxu0 %v2831
        %v3098 = vpop.f32.mrf.mxu0
        %v3099 = vadd.f32 0.0, %v3098
        %v3100 = vpop.f32.mrf.mxu0
        %v3101 = vadd.f32 0.0, %v3100
        %3102 = vmatmul.bf16.gmra.mxu0 %v2834
        %v3103 = vpop.f32.mrf.mxu0
        %v3104 = vadd.f32 0.0, %v3103
        %v3105 = vpop.f32.mrf.mxu0
        %v3106 = vadd.f32 0.0, %v3105
        %3107 = vmatmul.bf16.gmra.mxu0 %v2837
        %v3108 = vpop.f32.mrf.mxu0
        %v3109 = vadd.f32 0.0, %v3108
        %v3110 = vpop.f32.mrf.mxu0
        %v3111 = vadd.f32 0.0, %v3110
        %3112 = vdwg.mxu0
        %3113 = vmatpush.bf16.msra.mxu0 %v2996
        %3114 = vmatpush.bf16.msra.mxu0 %v2995
        %3115 = vmatpush.bf16.msra.mxu0 %v2994
        %3116 = vmatpush.bf16.msra.mxu0 %v2993
        %3117 = vmatpush.bf16.msra.mxu0 %v2992
        %3118 = vmatpush.bf16.msra.mxu0 %v2991
        %3119 = vmatpush.bf16.msra.mxu0 %v2990
        %3120 = vmatpush.bf16.msra.mxu0 %v2989
        %3121 = vmatmul.bf16.gmra.mxu0 %v2796
        %v3122 = vpop.f32.mrf.mxu0
        %v3123 = vadd.f32 %v3039, %v3122
        %v3124 = vpop.f32.mrf.mxu0
        %v3125 = vadd.f32 %v3041, %v3124
        %3126 = vmatmul.bf16.gmra.mxu0 %v2799
        %v3127 = vpop.f32.mrf.mxu0
        %v3128 = vadd.f32 %v3044, %v3127
        %v3129 = vpop.f32.mrf.mxu0
        %v3130 = vadd.f32 %v3046, %v3129
        %3131 = vmatmul.bf16.gmra.mxu0 %v2802
        %v3132 = vpop.f32.mrf.mxu0
        %v3133 = vadd.f32 %v3049, %v3132
        %v3134 = vpop.f32.mrf.mxu0
        %v3135 = vadd.f32 %v3051, %v3134
        %3136 = vmatmul.bf16.gmra.mxu0 %v2805
        %v3137 = vpop.f32.mrf.mxu0
        %v3138 = vadd.f32 %v3054, %v3137
        %v3139 = vpop.f32.mrf.mxu0
        %v3140 = vadd.f32 %v3056, %v3139
        %3141 = vmatmul.bf16.gmra.mxu0 %v2808
        %v3142 = vpop.f32.mrf.mxu0
        %v3143 = vadd.f32 %v3059, %v3142
        %v3144 = vpop.f32.mrf.mxu0
        %v3145 = vadd.f32 %v3061, %v3144
        %3146 = vmatmul.bf16.gmra.mxu0 %v2811
        %v3147 = vpop.f32.mrf.mxu0
        %v3148 = vadd.f32 %v3064, %v3147
        %v3149 = vpop.f32.mrf.mxu0
        %v3150 = vadd.f32 %v3066, %v3149
        %3151 = vmatmul.bf16.gmra.mxu0 %v2814
        %v3152 = vpop.f32.mrf.mxu0
        %v3153 = vadd.f32 %v3069, %v3152
        %v3154 = vpop.f32.mrf.mxu0
        %v3155 = vadd.f32 %v3071, %v3154
        %3156 = vmatmul.bf16.gmra.mxu0 %v2817
        %v3157 = vpop.f32.mrf.mxu0
        %v3158 = vadd.f32 %v3074, %v3157
        %v3159 = vpop.f32.mrf.mxu0
        %v3160 = vadd.f32 %v3076, %v3159
        %3161 = vmatmul.bf16.gmra.mxu0 %v2820
        %v3162 = vpop.f32.mrf.mxu0
        %v3163 = vadd.f32 %v3079, %v3162
        %v3164 = vpop.f32.mrf.mxu0
        %v3165 = vadd.f32 %v3081, %v3164
        %3166 = vmatmul.bf16.gmra.mxu0 %v2823
        %v3167 = vpop.f32.mrf.mxu0
        %v3168 = vadd.f32 %v3084, %v3167
        %v3169 = vpop.f32.mrf.mxu0
        %v3170 = vadd.f32 %v3086, %v3169
        %3171 = vmatmul.bf16.gmra.mxu0 %v2826
        %v3172 = vpop.f32.mrf.mxu0
        %v3173 = vadd.f32 %v3089, %v3172
        %v3174 = vpop.f32.mrf.mxu0
        %v3175 = vadd.f32 %v3091, %v3174
        %3176 = vmatmul.bf16.gmra.mxu0 %v2829
        %v3177 = vpop.f32.mrf.mxu0
        %v3178 = vadd.f32 %v3094, %v3177
        %v3179 = vpop.f32.mrf.mxu0
        %v3180 = vadd.f32 %v3096, %v3179
        %3181 = vmatmul.bf16.gmra.mxu0 %v2832
        %v3182 = vpop.f32.mrf.mxu0
        %v3183 = vadd.f32 %v3099, %v3182
        %v3184 = vpop.f32.mrf.mxu0
        %v3185 = vadd.f32 %v3101, %v3184
        %3186 = vmatmul.bf16.gmra.mxu0 %v2835
        %v3187 = vpop.f32.mrf.mxu0
        %v3188 = vadd.f32 %v3104, %v3187
        %v3189 = vpop.f32.mrf.mxu0
        %v3190 = vadd.f32 %v3106, %v3189
        %3191 = vmatmul.bf16.gmra.mxu0 %v2838
        %v3192 = vpop.f32.mrf.mxu0
        %v3193 = vadd.f32 %v3109, %v3192
        %v3194 = vpop.f32.mrf.mxu0
        %v3195 = vadd.f32 %v3111, %v3194
        %3196 = vdwg.mxu0
        %3197 = vmatpush.bf16.msra.mxu0 %v3004
        %3198 = vmatpush.bf16.msra.mxu0 %v3003
        %3199 = vmatpush.bf16.msra.mxu0 %v3002
        %3200 = vmatpush.bf16.msra.mxu0 %v3001
        %3201 = vmatpush.bf16.msra.mxu0 %v3000
        %3202 = vmatpush.bf16.msra.mxu0 %v2999
        %3203 = vmatpush.bf16.msra.mxu0 %v2998
        %3204 = vmatpush.bf16.msra.mxu0 %v2997
        %3205 = vmatmul.bf16.gmra.mxu0 %v2797
        %v3206 = vpop.f32.mrf.mxu0
        %v3207 = vadd.f32 %v3123, %v3206
        %v3208 = vpop.f32.mrf.mxu0
        %v3209 = vadd.f32 %v3125, %v3208
        %3210 = vmatmul.bf16.gmra.mxu0 %v2800
        %v3211 = vpop.f32.mrf.mxu0
        %v3212 = vadd.f32 %v3128, %v3211
        %v3213 = vpop.f32.mrf.mxu0
        %v3214 = vadd.f32 %v3130, %v3213
        %3215 = vmatmul.bf16.gmra.mxu0 %v2803
        %v3216 = vpop.f32.mrf.mxu0
        %v3217 = vadd.f32 %v3133, %v3216
        %v3218 = vpop.f32.mrf.mxu0
        %v3219 = vadd.f32 %v3135, %v3218
        %3220 = vmatmul.bf16.gmra.mxu0 %v2806
        %v3221 = vpop.f32.mrf.mxu0
        %v3222 = vadd.f32 %v3138, %v3221
        %v3223 = vpop.f32.mrf.mxu0
        %v3224 = vadd.f32 %v3140, %v3223
        %3225 = vmatmul.bf16.gmra.mxu0 %v2809
        %v3226 = vpop.f32.mrf.mxu0
        %v3227 = vadd.f32 %v3143, %v3226
        %v3228 = vpop.f32.mrf.mxu0
        %v3229 = vadd.f32 %v3145, %v3228
        %3230 = vmatmul.bf16.gmra.mxu0 %v2812
        %v3231 = vpop.f32.mrf.mxu0
        %v3232 = vadd.f32 %v3148, %v3231
        %v3233 = vpop.f32.mrf.mxu0
        %v3234 = vadd.f32 %v3150, %v3233
        %3235 = vmatmul.bf16.gmra.mxu0 %v2815
        %v3236 = vpop.f32.mrf.mxu0
        %v3237 = vadd.f32 %v3153, %v3236
        %v3238 = vpop.f32.mrf.mxu0
        %v3239 = vadd.f32 %v3155, %v3238
        %3240 = vmatmul.bf16.gmra.mxu0 %v2818
        %v3241 = vpop.f32.mrf.mxu0
        %v3242 = vadd.f32 %v3158, %v3241
        %v3243 = vpop.f32.mrf.mxu0
        %v3244 = vadd.f32 %v3160, %v3243
        %3245 = vmatmul.bf16.gmra.mxu0 %v2821
        %v3246 = vpop.f32.mrf.mxu0
        %v3247 = vadd.f32 %v3163, %v3246
        %v3248 = vpop.f32.mrf.mxu0
        %v3249 = vadd.f32 %v3165, %v3248
        %3250 = vmatmul.bf16.gmra.mxu0 %v2824
        %v3251 = vpop.f32.mrf.mxu0
        %v3252 = vadd.f32 %v3168, %v3251
        %v3253 = vpop.f32.mrf.mxu0
        %v3254 = vadd.f32 %v3170, %v3253
        %3255 = vmatmul.bf16.gmra.mxu0 %v2827
        %v3256 = vpop.f32.mrf.mxu0
        %v3257 = vadd.f32 %v3173, %v3256
        %v3258 = vpop.f32.mrf.mxu0
        %v3259 = vadd.f32 %v3175, %v3258
        %3260 = vmatmul.bf16.gmra.mxu0 %v2830
        %v3261 = vpop.f32.mrf.mxu0
        %v3262 = vadd.f32 %v3178, %v3261
        %v3263 = vpop.f32.mrf.mxu0
        %v3264 = vadd.f32 %v3180, %v3263
        %3265 = vmatmul.bf16.gmra.mxu0 %v2833
        %v3266 = vpop.f32.mrf.mxu0
        %v3267 = vadd.f32 %v3183, %v3266
        %v3268 = vpop.f32.mrf.mxu0
        %v3269 = vadd.f32 %v3185, %v3268
        %3270 = vmatmul.bf16.gmra.mxu0 %v2836
        %v3271 = vpop.f32.mrf.mxu0
        %v3272 = vadd.f32 %v3188, %v3271
        %v3273 = vpop.f32.mrf.mxu0
        %v3274 = vadd.f32 %v3190, %v3273
        %3275 = vmatmul.bf16.gmra.mxu0 %v2839
        %v3276 = vpop.f32.mrf.mxu0
        %v3277 = vadd.f32 %v3193, %v3276
        %v3278 = vpop.f32.mrf.mxu0
        %v3279 = vadd.f32 %v3195, %v3278
        %3280 = vdwg.mxu0
        %v3281 = vadd.f32 %v2506, %v3207
        %v3282 = vadd.f32 %v2507, %v3209
        %v3283 = vadd.f32 %v2508, %v3212
        %v3284 = vadd.f32 %v2509, %v3214
        %v3285 = vadd.f32 %v2510, %v3217
        %v3286 = vadd.f32 %v2511, %v3219
        %v3287 = vadd.f32 %v2512, %v3222
        %v3288 = vadd.f32 %v2513, %v3224
        %v3289 = vadd.f32 %v2514, %v3227
        %v3290 = vadd.f32 %v2515, %v3229
        %v3291 = vadd.f32 %v2516, %v3232
        %v3292 = vadd.f32 %v2517, %v3234
        %v3293 = vadd.f32 %v2518, %v3237
        %v3294 = vadd.f32 %v2519, %v3239
        %v3295 = vadd.f32 %v2520, %v3242
        %v3296 = vadd.f32 %v2521, %v3244
        %v3297 = vadd.f32 %v2522, %v3247
        %v3298 = vadd.f32 %v2523, %v3249
        %v3299 = vadd.f32 %v2524, %v3252
        %v3300 = vadd.f32 %v2525, %v3254
        %v3301 = vadd.f32 %v2526, %v3257
        %v3302 = vadd.f32 %v2527, %v3259
        %v3303 = vadd.f32 %v2528, %v3262
        %v3304 = vadd.f32 %v2529, %v3264
        %v3305 = vadd.f32 %v2530, %v3267
        %v3306 = vadd.f32 %v2531, %v3269
        %v3307 = vadd.f32 %v2532, %v3272
        %v3308 = vadd.f32 %v2533, %v3274
        %v3309 = vadd.f32 %v2534, %v3277
        %v3310 = vadd.f32 %v2535, %v3279
        %3311 = vst [vmem:[#allocation3] sm:$0xff] %v3281
        %3312 = vst [vmem:[#allocation3 + $0x8] sm:$0xff] %v3282
        %3313 = vst [vmem:[#allocation3 + $0x10] sm:$0xff] %v3283
        %3314 = vst [vmem:[#allocation3 + $0x18] sm:$0xff] %v3284
        %3315 = vst [vmem:[#allocation3 + $0x20] sm:$0xff] %v3285
        %3316 = vst [vmem:[#allocation3 + $0x28] sm:$0xff] %v3286
        %3317 = vst [vmem:[#allocation3 + $0x30] sm:$0xff] %v3287
        %3318 = vst [vmem:[#allocation3 + $0x38] sm:$0xff] %v3288
        %3319 = vst [vmem:[#allocation3 + $0x40] sm:$0xff] %v3289
        %3320 = vst [vmem:[#allocation3 + $0x48] sm:$0xff] %v3290
        %3321 = vst [vmem:[#allocation3 + $0x50] sm:$0xff] %v3291
        %3322 = vst [vmem:[#allocation3 + $0x58] sm:$0xff] %v3292
        %3323 = vst [vmem:[#allocation3 + $0x60] sm:$0xff] %v3293
        %3324 = vst [vmem:[#allocation3 + $0x68] sm:$0xff] %v3294
        %3325 = vst [vmem:[#allocation3 + $0x70] sm:$0xff] %v3295
        %3326 = vst [vmem:[#allocation3 + $0x78] sm:$0xff] %v3296
        %3327 = vst [vmem:[#allocation3 + $0x80] sm:$0xff] %v3297
        %3328 = vst [vmem:[#allocation3 + $0x88] sm:$0xff] %v3298
        %3329 = vst [vmem:[#allocation3 + $0x90] sm:$0xff] %v3299
        %3330 = vst [vmem:[#allocation3 + $0x98] sm:$0xff] %v3300
        %3331 = vst [vmem:[#allocation3 + $0xa0] sm:$0xff] %v3301
        %3332 = vst [vmem:[#allocation3 + $0xa8] sm:$0xff] %v3302
        %3333 = vst [vmem:[#allocation3 + $0xb0] sm:$0xff] %v3303
        %3334 = vst [vmem:[#allocation3 + $0xb8] sm:$0xff] %v3304
        %3335 = vst [vmem:[#allocation3 + $0xc0] sm:$0xff] %v3305
        %3336 = vst [vmem:[#allocation3 + $0xc8] sm:$0xff] %v3306
        %3337 = vst [vmem:[#allocation3 + $0xd0] sm:$0xff] %v3307
        %3338 = vst [vmem:[#allocation3 + $0xd8] sm:$0xff] %v3308
        %3339 = vst [vmem:[#allocation3 + $0xe0] sm:$0xff] %v3309
        %3340 = vst [vmem:[#allocation3 + $0xe8] sm:$0xff] %v3310
        %v3341 = vld [vmem:[#allocation3] sm:$0xff]
        %v3342 = vld [vmem:[#allocation3 + $0x8] sm:$0xff]
        %v3343 = vld [vmem:[#allocation3 + $0x10] sm:$0xff]
        %v3344 = vld [vmem:[#allocation3 + $0x18] sm:$0xff]
        %v3345 = vld [vmem:[#allocation3 + $0x20] sm:$0xff]
        %v3346 = vld [vmem:[#allocation3 + $0x28] sm:$0xff]
        %v3347 = vld [vmem:[#allocation3 + $0x30] sm:$0xff]
        %v3348 = vld [vmem:[#allocation3 + $0x38] sm:$0xff]
        %v3349 = vld [vmem:[#allocation3 + $0x40] sm:$0xff]
        %v3350 = vld [vmem:[#allocation3 + $0x48] sm:$0xff]
        %v3351 = vld [vmem:[#allocation3 + $0x50] sm:$0xff]
        %v3352 = vld [vmem:[#allocation3 + $0x58] sm:$0xff]
        %v3353 = vld [vmem:[#allocation3 + $0x60] sm:$0xff]
        %v3354 = vld [vmem:[#allocation3 + $0x68] sm:$0xff]
        %v3355 = vld [vmem:[#allocation3 + $0x70] sm:$0xff]
        %v3356 = vld [vmem:[#allocation3 + $0x78] sm:$0xff]
        %v3357 = vld [vmem:[#allocation3 + $0x80] sm:$0xff]
        %v3358 = vld [vmem:[#allocation3 + $0x88] sm:$0xff]
        %v3359 = vld [vmem:[#allocation3 + $0x90] sm:$0xff]
        %v3360 = vld [vmem:[#allocation3 + $0x98] sm:$0xff]
        %v3361 = vld [vmem:[#allocation3 + $0xa0] sm:$0xff]
        %v3362 = vld [vmem:[#allocation3 + $0xa8] sm:$0xff]
        %v3363 = vld [vmem:[#allocation3 + $0xb0] sm:$0xff]
        %v3364 = vld [vmem:[#allocation3 + $0xb8] sm:$0xff]
        %v3365 = vld [vmem:[#allocation3 + $0xc0] sm:$0xff]
        %v3366 = vld [vmem:[#allocation3 + $0xc8] sm:$0xff]
        %v3367 = vld [vmem:[#allocation3 + $0xd0] sm:$0xff]
        %v3368 = vld [vmem:[#allocation3 + $0xd8] sm:$0xff]
        %v3369 = vld [vmem:[#allocation3 + $0xe0] sm:$0xff]
        %v3370 = vld [vmem:[#allocation3 + $0xe8] sm:$0xff]
        %v3371 = vld [vmem:[#allocation3 + $0xf0] sm:$0xff]
        %v3372 = vld [vmem:[#allocation3 + $0xf8] sm:$0xff]
        %v3373 = vmax.f32 %v3341, 0.0
        %v3374 = vmax.f32 %v3342, 0.0
        %v3375 = vmax.f32 %v3343, 0.0
        %v3376 = vmax.f32 %v3344, 0.0
        %v3377 = vmax.f32 %v3345, 0.0
        %v3378 = vmax.f32 %v3346, 0.0
        %v3379 = vmax.f32 %v3347, 0.0
        %v3380 = vmax.f32 %v3348, 0.0
        %v3381 = vmax.f32 %v3349, 0.0
        %v3382 = vmax.f32 %v3350, 0.0
        %v3383 = vmax.f32 %v3351, 0.0
        %v3384 = vmax.f32 %v3352, 0.0
        %v3385 = vmax.f32 %v3353, 0.0
        %v3386 = vmax.f32 %v3354, 0.0
        %v3387 = vmax.f32 %v3355, 0.0
        %v3388 = vmax.f32 %v3356, 0.0
        %v3389 = vmax.f32 %v3357, 0.0
        %v3390 = vmax.f32 %v3358, 0.0
        %v3391 = vmax.f32 %v3359, 0.0
        %v3392 = vmax.f32 %v3360, 0.0
        %v3393 = vmax.f32 %v3361, 0.0
        %v3394 = vmax.f32 %v3362, 0.0
        %v3395 = vmax.f32 %v3363, 0.0
        %v3396 = vmax.f32 %v3364, 0.0
        %v3397 = vmax.f32 %v3365, 0.0
        %v3398 = vmax.f32 %v3366, 0.0
        %v3399 = vmax.f32 %v3367, 0.0
        %v3400 = vmax.f32 %v3368, 0.0
        %v3401 = vmax.f32 %v3369, 0.0
        %v3402 = vmax.f32 %v3370, 0.0
        %v3403 = vmax.f32 %v3371, 0.0
        %v3404 = vmax.f32 %v3372, 0.0
        %v3405 = vpack.c.bf16 %v3374, %v3373
        %v3406 = vpack.c.bf16 %v3376, %v3375
        %v3407 = vpack.c.bf16 %v3378, %v3377
        %v3408 = vpack.c.bf16 %v3380, %v3379
        %v3409 = vpack.c.bf16 %v3382, %v3381
        %v3410 = vpack.c.bf16 %v3384, %v3383
        %v3411 = vpack.c.bf16 %v3386, %v3385
        %v3412 = vpack.c.bf16 %v3388, %v3387
        %v3413 = vpack.c.bf16 %v3390, %v3389
        %v3414 = vpack.c.bf16 %v3392, %v3391
        %v3415 = vpack.c.bf16 %v3394, %v3393
        %v3416 = vpack.c.bf16 %v3396, %v3395
        %v3417 = vpack.c.bf16 %v3398, %v3397
        %v3418 = vpack.c.bf16 %v3400, %v3399
        %v3419 = vpack.c.bf16 %v3402, %v3401
        %v3420 = vpack.c.bf16 %v3404, %v3403
        %v3421 = vld [vmem:[#allocation9] sm:$0xf]
        %v3422 = vld [vmem:[#allocation9 + $0x4] sm:$0xf]
        %v3423 = vld [vmem:[#allocation9 + $0x8] sm:$0xf]
        %v3424 = vld [vmem:[#allocation9 + $0xc] sm:$0xf]
        %v3425 = vld [vmem:[#allocation9 + $0x10] sm:$0xf]
        %v3426 = vld [vmem:[#allocation9 + $0x14] sm:$0xf]
        %v3427 = vld [vmem:[#allocation9 + $0x18] sm:$0xf]
        %v3428 = vld [vmem:[#allocation9 + $0x1c] sm:$0xf]
        %v3429 = vld [vmem:[#allocation9 + $0x20] sm:$0xf]
        %v3430 = vld [vmem:[#allocation9 + $0x24] sm:$0xf]
        %v3431 = vld [vmem:[#allocation9 + $0x28] sm:$0xf]
        %v3432 = vld [vmem:[#allocation9 + $0x2c] sm:$0xf]
        %v3433 = vld [vmem:[#allocation9 + $0x30] sm:$0xf]
        %v3434 = vld [vmem:[#allocation9 + $0x34] sm:$0xf]
        %v3435 = vld [vmem:[#allocation9 + $0x38] sm:$0xf]
        %v3436 = vld [vmem:[#allocation9 + $0x3c] sm:$0xf]
        %v3437 = vld [vmem:[%s4] sm:$0x1]
        %v3439 = vperm.slane %v3437, 0
        %v3457 = vunpack.c.l.b16 %v3421
        %v3458 = vunpack.c.l.b16 %v3422
        %v3459 = vunpack.c.l.b16 %v3423
        %v3460 = vunpack.c.l.b16 %v3424
        %v3461 = vunpack.c.l.b16 %v3425
        %v3462 = vunpack.c.l.b16 %v3426
        %v3463 = vunpack.c.l.b16 %v3427
        %v3464 = vunpack.c.l.b16 %v3428
        %v3465 = vunpack.c.l.b16 %v3429
        %v3466 = vunpack.c.l.b16 %v3430
        %v3467 = vunpack.c.l.b16 %v3431
        %v3468 = vunpack.c.l.b16 %v3432
        %v3469 = vunpack.c.l.b16 %v3433
        %v3470 = vunpack.c.l.b16 %v3434
        %v3471 = vunpack.c.l.b16 %v3435
        %v3472 = vunpack.c.l.b16 %v3436
        %v3473 = vpack.c.b16 %v3458, %v3457
        %v3474 = vpack.c.b16 %v3460, %v3459
        %v3475 = vpack.c.b16 %v3462, %v3461
        %v3476 = vpack.c.b16 %v3464, %v3463
        %v3477 = vpack.c.b16 %v3466, %v3465
        %v3478 = vpack.c.b16 %v3468, %v3467
        %v3479 = vpack.c.b16 %v3470, %v3469
        %v3480 = vpack.c.b16 %v3472, %v3471
        %3489 = vmatpush.bf16.msra.mxu0 %v3480
        %3490 = vmatpush.bf16.msra.mxu0 %v3479
        %3491 = vmatpush.bf16.msra.mxu0 %v3478
        %3492 = vmatpush.bf16.msra.mxu0 %v3477
        %3493 = vmatpush.bf16.msra.mxu0 %v3476
        %3494 = vmatpush.bf16.msra.mxu0 %v3475
        %3495 = vmatpush.bf16.msra.mxu0 %v3474
        %3496 = vmatpush.bf16.msra.mxu0 %v3473
        %3497 = vmatmul.bf16.gmra.mxu0 %v3405
        %v3498 = vpop.f32.mrf.mxu0
        %v3499 = vadd.f32 %v3439, %v3498
        %v3500 = vpop.f32.mrf.mxu0
        %v3501 = vadd.f32 %v3439, %v3500
        %3502 = vmatmul.bf16.gmra.mxu0 %v3406
        %v3503 = vpop.f32.mrf.mxu0
        %v3504 = vadd.f32 %v3439, %v3503
        %v3505 = vpop.f32.mrf.mxu0
        %v3506 = vadd.f32 %v3439, %v3505
        %3507 = vmatmul.bf16.gmra.mxu0 %v3407
        %v3508 = vpop.f32.mrf.mxu0
        %v3509 = vadd.f32 %v3439, %v3508
        %v3510 = vpop.f32.mrf.mxu0
        %v3511 = vadd.f32 %v3439, %v3510
        %3512 = vmatmul.bf16.gmra.mxu0 %v3408
        %v3513 = vpop.f32.mrf.mxu0
        %v3514 = vadd.f32 %v3439, %v3513
        %v3515 = vpop.f32.mrf.mxu0
        %v3516 = vadd.f32 %v3439, %v3515
        %3517 = vmatmul.bf16.gmra.mxu0 %v3409
        %v3518 = vpop.f32.mrf.mxu0
        %v3519 = vadd.f32 %v3439, %v3518
        %v3520 = vpop.f32.mrf.mxu0
        %v3521 = vadd.f32 %v3439, %v3520
        %3522 = vmatmul.bf16.gmra.mxu0 %v3410
        %v3523 = vpop.f32.mrf.mxu0
        %v3524 = vadd.f32 %v3439, %v3523
        %v3525 = vpop.f32.mrf.mxu0
        %v3526 = vadd.f32 %v3439, %v3525
        %3527 = vmatmul.bf16.gmra.mxu0 %v3411
        %v3528 = vpop.f32.mrf.mxu0
        %v3529 = vadd.f32 %v3439, %v3528
        %v3530 = vpop.f32.mrf.mxu0
        %v3531 = vadd.f32 %v3439, %v3530
        %3532 = vmatmul.bf16.gmra.mxu0 %v3412
        %v3533 = vpop.f32.mrf.mxu0
        %v3534 = vadd.f32 %v3439, %v3533
        %v3535 = vpop.f32.mrf.mxu0
        %v3536 = vadd.f32 %v3439, %v3535
        %3537 = vmatmul.bf16.gmra.mxu0 %v3413
        %v3538 = vpop.f32.mrf.mxu0
        %v3539 = vadd.f32 %v3439, %v3538
        %v3540 = vpop.f32.mrf.mxu0
        %v3541 = vadd.f32 %v3439, %v3540
        %3542 = vmatmul.bf16.gmra.mxu0 %v3414
        %v3543 = vpop.f32.mrf.mxu0
        %v3544 = vadd.f32 %v3439, %v3543
        %v3545 = vpop.f32.mrf.mxu0
        %v3546 = vadd.f32 %v3439, %v3545
        %3547 = vmatmul.bf16.gmra.mxu0 %v3415
        %v3548 = vpop.f32.mrf.mxu0
        %v3549 = vadd.f32 %v3439, %v3548
        %v3550 = vpop.f32.mrf.mxu0
        %v3551 = vadd.f32 %v3439, %v3550
        %3552 = vmatmul.bf16.gmra.mxu0 %v3416
        %v3553 = vpop.f32.mrf.mxu0
        %v3554 = vadd.f32 %v3439, %v3553
        %v3555 = vpop.f32.mrf.mxu0
        %v3556 = vadd.f32 %v3439, %v3555
        %3557 = vmatmul.bf16.gmra.mxu0 %v3417
        %v3558 = vpop.f32.mrf.mxu0
        %v3559 = vadd.f32 %v3439, %v3558
        %v3560 = vpop.f32.mrf.mxu0
        %v3561 = vadd.f32 %v3439, %v3560
        %3562 = vmatmul.bf16.gmra.mxu0 %v3418
        %v3563 = vpop.f32.mrf.mxu0
        %v3564 = vadd.f32 %v3439, %v3563
        %v3565 = vpop.f32.mrf.mxu0
        %v3566 = vadd.f32 %v3439, %v3565
        %3567 = vmatmul.bf16.gmra.mxu0 %v3419
        %v3568 = vpop.f32.mrf.mxu0
        %v3569 = vadd.f32 %v3439, %v3568
        %v3570 = vpop.f32.mrf.mxu0
        %v3571 = vadd.f32 %v3439, %v3570
        %3572 = vmatmul.bf16.gmra.mxu0 %v3420
        %v3573 = vpop.f32.mrf.mxu0
        %v3574 = vadd.f32 %v3439, %v3573
        %v3575 = vpop.f32.mrf.mxu0
        %v3576 = vadd.f32 %v3439, %v3575
        %3577 = vdwg.mxu0
        %v3578 = vld [vmem:[%s240] sm:$0xff]
        %v3579 = vld [vmem:[%s240 + $0x8] sm:$0xff]
        %v3580 = vld [vmem:[%s240 + $0x10] sm:$0xff]
        %v3581 = vld [vmem:[%s240 + $0x18] sm:$0xff]
        %v3582 = vld [vmem:[%s240 + $0x20] sm:$0xff]
        %v3583 = vld [vmem:[%s240 + $0x28] sm:$0xff]
        %v3584 = vld [vmem:[%s240 + $0x30] sm:$0xff]
        %v3585 = vld [vmem:[%s240 + $0x38] sm:$0xff]
        %v3586 = vld [vmem:[%s240 + $0x40] sm:$0xff]
        %v3587 = vld [vmem:[%s240 + $0x48] sm:$0xff]
        %v3588 = vld [vmem:[%s240 + $0x50] sm:$0xff]
        %v3589 = vld [vmem:[%s240 + $0x58] sm:$0xff]
        %v3590 = vld [vmem:[%s240 + $0x60] sm:$0xff]
        %v3591 = vld [vmem:[%s240 + $0x68] sm:$0xff]
        %v3592 = vld [vmem:[%s240 + $0x70] sm:$0xff]
        %v3593 = vld [vmem:[%s240 + $0x78] sm:$0xff]
        %v3594 = vld [vmem:[%s240 + $0x80] sm:$0xff]
        %v3595 = vld [vmem:[%s240 + $0x88] sm:$0xff]
        %v3596 = vld [vmem:[%s240 + $0x90] sm:$0xff]
        %v3597 = vld [vmem:[%s240 + $0x98] sm:$0xff]
        %v3598 = vld [vmem:[%s240 + $0xa0] sm:$0xff]
        %v3599 = vld [vmem:[%s240 + $0xa8] sm:$0xff]
        %v3600 = vld [vmem:[%s240 + $0xb0] sm:$0xff]
        %v3601 = vld [vmem:[%s240 + $0xb8] sm:$0xff]
        %v3602 = vld [vmem:[%s240 + $0xc0] sm:$0xff]
        %v3603 = vld [vmem:[%s240 + $0xc8] sm:$0xff]
        %v3604 = vld [vmem:[%s240 + $0xd0] sm:$0xff]
        %v3605 = vld [vmem:[%s240 + $0xd8] sm:$0xff]
        %v3606 = vld [vmem:[%s240 + $0xe0] sm:$0xff]
        %v3607 = vld [vmem:[%s240 + $0xe8] sm:$0xff]
        %v3608 = vld [vmem:[%s240 + $0xf0] sm:$0xff]
        %v3609 = vld [vmem:[%s240 + $0xf8] sm:$0xff]
        %v3610 = vadd.f32 %v3578, %v3499
        %v3611 = vadd.f32 %v3579, %v3501
        %v3612 = vadd.f32 %v3580, %v3504
        %v3613 = vadd.f32 %v3581, %v3506
        %v3614 = vadd.f32 %v3582, %v3509
        %v3615 = vadd.f32 %v3583, %v3511
        %v3616 = vadd.f32 %v3584, %v3514
        %v3617 = vadd.f32 %v3585, %v3516
        %v3618 = vadd.f32 %v3586, %v3519
        %v3619 = vadd.f32 %v3587, %v3521
        %v3620 = vadd.f32 %v3588, %v3524
        %v3621 = vadd.f32 %v3589, %v3526
        %v3622 = vadd.f32 %v3590, %v3529
        %v3623 = vadd.f32 %v3591, %v3531
        %v3624 = vadd.f32 %v3592, %v3534
        %v3625 = vadd.f32 %v3593, %v3536
        %v3626 = vadd.f32 %v3594, %v3539
        %v3627 = vadd.f32 %v3595, %v3541
        %v3628 = vadd.f32 %v3596, %v3544
        %v3629 = vadd.f32 %v3597, %v3546
        %v3630 = vadd.f32 %v3598, %v3549
        %v3631 = vadd.f32 %v3599, %v3551
        %v3632 = vadd.f32 %v3600, %v3554
        %v3633 = vadd.f32 %v3601, %v3556
        %v3634 = vadd.f32 %v3602, %v3559
        %v3635 = vadd.f32 %v3603, %v3561
        %v3636 = vadd.f32 %v3604, %v3564
        %v3637 = vadd.f32 %v3605, %v3566
        %v3638 = vadd.f32 %v3606, %v3569
        %v3639 = vadd.f32 %v3607, %v3571
        %v3640 = vadd.f32 %v3608, %v3574
        %v3641 = vadd.f32 %v3609, %v3576
        %3642 = vst [vmem:[%s277] sm:$0xff] %v3610
        %3643 = vst [vmem:[%s277 + $0x8] sm:$0xff] %v3611
        %3644 = vst [vmem:[%s277 + $0x10] sm:$0xff] %v3612
        %3645 = vst [vmem:[%s277 + $0x18] sm:$0xff] %v3613
        %3646 = vst [vmem:[%s277 + $0x20] sm:$0xff] %v3614
        %3647 = vst [vmem:[%s277 + $0x28] sm:$0xff] %v3615
        %3648 = vst [vmem:[%s277 + $0x30] sm:$0xff] %v3616
        %3649 = vst [vmem:[%s277 + $0x38] sm:$0xff] %v3617
        %3650 = vst [vmem:[%s277 + $0x40] sm:$0xff] %v3618
        %3651 = vst [vmem:[%s277 + $0x48] sm:$0xff] %v3619
        %3652 = vst [vmem:[%s277 + $0x50] sm:$0xff] %v3620
        %3653 = vst [vmem:[%s277 + $0x58] sm:$0xff] %v3621
        %3654 = vst [vmem:[%s277 + $0x60] sm:$0xff] %v3622
        %3655 = vst [vmem:[%s277 + $0x68] sm:$0xff] %v3623
        %3656 = vst [vmem:[%s277 + $0x70] sm:$0xff] %v3624
        %3657 = vst [vmem:[%s277 + $0x78] sm:$0xff] %v3625
        %3658 = vst [vmem:[%s277 + $0x80] sm:$0xff] %v3626
        %3659 = vst [vmem:[%s277 + $0x88] sm:$0xff] %v3627
        %3660 = vst [vmem:[%s277 + $0x90] sm:$0xff] %v3628
        %3661 = vst [vmem:[%s277 + $0x98] sm:$0xff] %v3629
        %3662 = vst [vmem:[%s277 + $0xa0] sm:$0xff] %v3630
        %3663 = vst [vmem:[%s277 + $0xa8] sm:$0xff] %v3631
        %3664 = vst [vmem:[%s277 + $0xb0] sm:$0xff] %v3632
        %3665 = vst [vmem:[%s277 + $0xb8] sm:$0xff] %v3633
        %3666 = vst [vmem:[%s277 + $0xc0] sm:$0xff] %v3634
        %3667 = vst [vmem:[%s277 + $0xc8] sm:$0xff] %v3635
        %3668 = vst [vmem:[%s277 + $0xd0] sm:$0xff] %v3636
        %3669 = vst [vmem:[%s277 + $0xd8] sm:$0xff] %v3637
        %3670 = vst [vmem:[%s277 + $0xe0] sm:$0xff] %v3638
        %3671 = vst [vmem:[%s277 + $0xe8] sm:$0xff] %v3639
        %3672 = vst [vmem:[%s277 + $0xf0] sm:$0xff] %v3640
        %3673 = vst [vmem:[%s277 + $0xf8] sm:$0xff] %v3641
        %s3674 = sand.u32 %s141, 1
        %s3675 = scalar_lea.sflag [#allocation6], %s3674
        %s3676 = sand.u32 %s141, 1
        %s3677 = smul.addr %s3676, 256
        %s3678 = scalar_lea.vmem [#allocation10], %s3677
        // Predicated region
        $region53: #{tpu_custom_call.1} parent=39 // pred_check
          %p3679 = pneg %p151
        $region54: #{tpu_custom_call.1} parent=39 // pred_check_branch
          %3681 = sbr.rel (%p3679) target = $region56
        $region55: #{tpu_custom_call.1} parent=39 // pred_region
          %3683 = vsyncadd %s3675, 0
          %s3684 = smul.addr %s23, 32
          %s3685 = smul.addr %s3684, 8
          %s3686 = scalar_lea.hbm %s5, %s3685
          %s3687 = sshll.u32 %s3678, 4
          %s3688 = int_to_ptr.vmem [resolvable:$true] %s3687
          %s3689 = sshll.u32 %s3686, 4
          %s3690 = int_to_ptr.hbm [resolvable:$true] %s3689
          %3695 = dma.vmem_to_hbm [thread:$0]  %s3688, 4096, %s3690, %s3675, 128, 128, 8
        $region56: #{tpu_custom_call.1} parent=39 // pred_fallthru
          _
      $region40: #{tpu_custom_call.1} parent=5 // pred_fallthru
        _
      %p3696 = scmp.le.s32.totalorder 2, %s18
      // Predicated region
      $region57: #{tpu_custom_call.1} parent=5 // pred_check
        %p3697 = pneg %p3696
      $region58: #{tpu_custom_call.1} parent=5 // pred_check_branch
        %3699 = sbr.rel (%p3697) target = $region60
      $region59: #{tpu_custom_call.1} parent=5 // pred_region
        %s3700 = ssub.s32 %s18, 2
        // Predicated region
        $region61: #{tpu_custom_call.1} parent=59 // pred_check
          %p3701 = pneg %p157
        $region62: #{tpu_custom_call.1} parent=59 // pred_check_branch
          %3703 = sbr.rel (%p3701) target = $region64
        $region63: #{tpu_custom_call.1} parent=59 // pred_region
          %s3704 = sand.u32 %s142, 1
          %s3705 = scalar_lea.sflag [#allocation6], %s3704
          %s3706 = sand.u32 %s142, 1
          %s3707 = smul.addr %s3706, 256
          %s3708 = scalar_lea.vmem [#allocation10], %s3707
          %3710 = dma.done %s3705, 4096
        $region64: #{tpu_custom_call.1} parent=59 // pred_fallthru
          _
      $region60: #{tpu_custom_call.1} parent=5 // pred_fallthru
        _
    $region6: #{tpu_custom_call.1} parent=1 // loop_footer
      %s22 = sadd.s32 1, %s18
    $region7: #{tpu_custom_call.1} parent=1 // loop_footer_branch
      %17 = sbr.rel target = $region3
    $region8: #{tpu_custom_call.1} parent=1 // loop_exit
      _
    %3711 = vsyncpa [#allocation5], 1
    %s3712 = scalar_lea.sflag [#allocation5], 1
    %3713 = vsyncpa %s3712, 1
    %3714 = vsyncpa [#allocation8], 1
    %3715 = vsyncpa [#allocation6], 1
    %s3716 = scalar_lea.sflag [#allocation6], 1
    %3717 = vsyncpa %s3716, 1

</llo_original>
